<compile_context>
chip_gen: v7x
topology: tpu7x:2x2x1
jax: 0.10.0
libtpu: 0.0.40
codegen_flags: <defaults>
</compile_context>

<pallas_src>
import numpy as np
import jax
import jax.numpy as jnp
from jax import lax
from jax.experimental import pallas as pl
from jax.experimental.pallas import tpu as pltpu


# ----------------------------- kernel ---------------------------------------


def _make_kernel(num_heads, head_dim):
    def kernel(x_ref, s_ref,
               wq_ref, bq_ref, wk_ref, bk_ref, wv_ref, bv_ref,
               wm_ref, bm_ref,
               w1x_ref, w1m_ref, b1_ref, w2_ref, b2_ref,
               o_ref):
        f32 = jnp.float32
        x = x_ref[...]                       # (N, F)  positions x channels
        s = s_ref[...]                       # (M, F)

        # 1x1 conv projections == channel matmuls (lane-dense, K = F).
        q = jnp.dot(x, wq_ref[...], preferred_element_type=f32) + bq_ref[...]
        k = jnp.dot(s, wk_ref[...], preferred_element_type=f32) + bk_ref[...]
        v = jnp.dot(s, wv_ref[...], preferred_element_type=f32) + bv_ref[...]

        # Per-head attention.  Head channels are contiguous lane slices because
        # the projection weights were permuted host-side; the 1/sqrt(head_dim)
        # scale is already folded into wq/bq.
        nt = (((1,), (1,)), ((), ()))        # contract last dims: (N,d)x(M,d)->(N,M)
        msgs = []
        for h in range(num_heads):
            sl = slice(h * head_dim, (h + 1) * head_dim)
            qh, kh, vh = q[:, sl], k[:, sl], v[:, sl]
            sc = lax.dot_general(qh, kh, nt, preferred_element_type=f32)  # (N, M)
            m = jnp.max(sc, axis=-1, keepdims=True)
            e = jnp.exp(sc - m)
            p = e / jnp.sum(e, axis=-1, keepdims=True)
            msgs.append(jnp.dot(p, vh, preferred_element_type=f32))       # (N, d)
        msg = jnp.concatenate(msgs, axis=-1)                               # (N, F)

        # merge (1x1 conv); wm's input channels were permuted to match the
        # head-contiguous layout of `msg`.
        msg = jnp.dot(msg, wm_ref[...], preferred_element_type=f32) + bm_ref[...]

        # MLP: Conv1d(2F->2F) with the concat [x, message] folded into two
        # matmuls, InstanceNorm1d over positions (two-pass), ReLU, Conv1d(2F->F).
        h1 = (jnp.dot(x, w1x_ref[...], preferred_element_type=f32)
              + jnp.dot(msg, w1m_ref[...], preferred_element_type=f32)
              + b1_ref[...])                                               # (N, 2F)
        mu = jnp.mean(h1, axis=0, keepdims=True)
        xc = h1 - mu
        var = jnp.mean(xc * xc, axis=0, keepdims=True)
        h1 = jnp.maximum(xc * lax.rsqrt(var + 1e-5), 0.0)
        o_ref[...] = (jnp.dot(h1, w2_ref[...], preferred_element_type=f32)
                      + b2_ref[...])                                       # (N, F)

    return kernel


# ----------------------------- wrapper ---------------------------------------


def attentional_propagation(x, source, params, num_heads):
    """x: (B, F, N), source: (B, F, M) float32 in the PyTorch Conv1d layout."""
    B, F, N = x.shape
    M = source.shape[2]
    assert F % num_heads == 0
    head_dim = F // num_heads

    # Head-contiguous channel permutation: new channel h*dim+d <- old d*heads+h
    # (this reproduces torch's `.view(B, dim, heads, L)` channel split).
    perm = np.arange(F).reshape(head_dim, num_heads).T.reshape(F)
    scale = 1.0 / float(head_dim) ** 0.5

    wqT = (params["wq"][perm] * scale).T          # (F_in, F_out), scale folded
    bq = (params["bq"][perm] * scale).reshape(1, F)
    wkT = params["wk"][perm].T
    bk = params["bk"][perm].reshape(1, F)
    wvT = params["wv"][perm].T
    bv = params["bv"][perm].reshape(1, F)
    wmT = params["wm"][:, perm].T                 # permute merge *input* channels
    bm = params["bm"].reshape(1, F)
    w1T = params["w1"].T                          # (2F, 2F)
    w1xT, w1mT = w1T[:F], w1T[F:]                 # split -> no in-kernel concat
    b1 = params["b1"].reshape(1, 2 * F)
    w2T = params["w2"].T                          # (2F, F)
    b2 = params["b2"].reshape(1, F)

    # Channels-last activation layout: positions on sublanes, channels on lanes.
    x_nf = jnp.transpose(x, (0, 2, 1))            # (B, N, F)
    s_mf = jnp.transpose(source, (0, 2, 1))       # (B, M, F)

    operands = [x_nf, s_mf, wqT, bq, wkT, bk, wvT, bv, wmT, bm,
                w1xT, w1mT, b1, w2T, b2]

    def const_spec(arr):
        nd = arr.ndim
        return pl.BlockSpec(arr.shape, lambda b, _nd=nd: (0,) * _nd)

    in_specs = [pl.BlockSpec((None, N, F), lambda b: (b, 0, 0)),
                pl.BlockSpec((None, M, F), lambda b: (b, 0, 0))]
    in_specs += [const_spec(op) for op in operands[2:]]

    out = pl.pallas_call(
        _make_kernel(num_heads, head_dim),
        out_shape=jax.ShapeDtypeStruct((B, N, F), jnp.float32),
        grid_spec=pltpu.PrefetchScalarGridSpec(
            num_scalar_prefetch=0,
            grid=(B,),
            in_specs=in_specs,
            out_specs=pl.BlockSpec((None, N, F), lambda b: (b, 0, 0)),
        ),
        compiler_params=pltpu.CompilerParams(
            dimension_semantics=("parallel",)),   # batch rows are independent
    )(*operands)
    return jnp.transpose(out, (0, 2, 1))          # back to (B, F, N)


# --------------------------- params / reference ------------------------------


def init_params(key, feature_dim):
    F = feature_dim
    ks = jax.random.split(key, 12)

    def u(k, shape, fan_in):
        return jax.random.uniform(k, shape, jnp.float32, -1.0, 1.0) / float(fan_in) ** 0.5

    return {
        "wq": u(ks[0], (F, F), F), "bq": u(ks[1], (F,), F),
        "wk": u(ks[2], (F, F), F), "bk": u(ks[3], (F,), F),
        "wv": u(ks[4], (F, F), F), "bv": u(ks[5], (F,), F),
        "wm": u(ks[6], (F, F), F), "bm": u(ks[7], (F,), F),
        "w1": u(ks[8], (2 * F, 2 * F), 2 * F), "b1": u(ks[9], (2 * F,), 2 * F),
        "w2": u(ks[10], (F, 2 * F), 2 * F),
        "b2": jnp.zeros((F,), jnp.float32),   # nn.init.constant_(mlp[-1].bias, 0)
    }


def ref_forward(x, source, p, num_heads):
    """Pure-JAX mirror of AttentionalPropagation.forward (PyTorch layout)."""
    B, F, N = x.shape
    d = F // num_heads

    def conv1d(w, b, t):                       # Conv1d kernel_size=1
        return jnp.einsum("oi,bil->bol", w, t) + b[None, :, None]

    q = conv1d(p["wq"], p["bq"], x).reshape(B, d, num_heads, N)
    k = conv1d(p["wk"], p["bk"], source).reshape(B, d, num_heads, -1)
    v = conv1d(p["wv"], p["bv"], source).reshape(B, d, num_heads, -1)
    scores = jnp.einsum("bdhn,bdhm->bhnm", q, k) / d ** 0.5
    prob = jax.nn.softmax(scores, axis=-1)
    msg = jnp.einsum("bhnm,bdhm->bdhn", prob, v).reshape(B, F, N)
    msg = conv1d(p["wm"], p["bm"], msg)
    h = conv1d(p["w1"], p["b1"], jnp.concatenate([x, msg], axis=1))
    mean = h.mean(axis=2, keepdims=True)
    var = h.var(axis=2, keepdims=True)         # biased, as in InstanceNorm1d
    h = jnp.maximum((h - mean) / jnp.sqrt(var + 1e-5), 0.0)
    return conv1d(p["w2"], p["b2"], h)


# ------------------------------- main ----------------------------------------

if __name__ == "__main__":
    key = jax.random.PRNGKey(0)
    B, F, num_heads = 2, 128, 4
    N, M = 128, 128

    kx, ks, kp = jax.random.split(key, 3)
    x = jax.random.normal(kx, (B, F, N), jnp.float32)       # (B, C, N) like Conv1d
    source = jax.random.normal(ks, (B, F, M), jnp.float32)
    params = init_params(kp, F)

    out = jax.block_until_ready(attentional_propagation(x, source, params, num_heads))
    ref = jax.block_until_ready(ref_forward(x, source, params, num_heads))

    assert out.shape == (B, F, N)
    err = float(jnp.max(jnp.abs(out - ref)))
    assert jnp.allclose(out, ref, atol=2e-3, rtol=2e-3), err
    print("KERNEL_OK")
</pallas_src>

<mosaic_0001>
module attributes {stable_mosaic.version = 11 : i64} {
  func.func @kernel(%arg0: i32, %arg1: memref<1x128x128xf32, #tpu.memory_space<vmem>>, %arg2: memref<1x128x128xf32, #tpu.memory_space<vmem>>, %arg3: memref<128x128xf32, #tpu.memory_space<vmem>>, %arg4: memref<1x128xf32, #tpu.memory_space<vmem>>, %arg5: memref<128x128xf32, #tpu.memory_space<vmem>>, %arg6: memref<1x128xf32, #tpu.memory_space<vmem>>, %arg7: memref<128x128xf32, #tpu.memory_space<vmem>>, %arg8: memref<1x128xf32, #tpu.memory_space<vmem>>, %arg9: memref<128x128xf32, #tpu.memory_space<vmem>>, %arg10: memref<1x128xf32, #tpu.memory_space<vmem>>, %arg11: memref<128x256xf32, #tpu.memory_space<vmem>>, %arg12: memref<128x256xf32, #tpu.memory_space<vmem>>, %arg13: memref<1x256xf32, #tpu.memory_space<vmem>>, %arg14: memref<256x128xf32, #tpu.memory_space<vmem>>, %arg15: memref<1x128xf32, #tpu.memory_space<vmem>>, %arg16: memref<1x128x128xf32, #tpu.memory_space<vmem>>) attributes {dimension_semantics = [#tpu.dimension_semantics<parallel>], iteration_bounds = array<i64: 2>, scalar_prefetch = 0 : i64, scratch_operands = 0 : i64, tpu.core_type = #tpu.core_type<tc>, window_params = [{transform_indices = @transform_0, window_bounds = array<i64: 1, 128, 128>}, {transform_indices = @transform_1, window_bounds = array<i64: 1, 128, 128>}, {pipeline_mode = #tpu.pipeline_mode<synchronous>, transform_indices = @transform_2, window_bounds = array<i64: 128, 128>}, {pipeline_mode = #tpu.pipeline_mode<synchronous>, transform_indices = @transform_3, window_bounds = array<i64: 1, 128>}, {pipeline_mode = #tpu.pipeline_mode<synchronous>, transform_indices = @transform_4, window_bounds = array<i64: 128, 128>}, {pipeline_mode = #tpu.pipeline_mode<synchronous>, transform_indices = @transform_5, window_bounds = array<i64: 1, 128>}, {pipeline_mode = #tpu.pipeline_mode<synchronous>, transform_indices = @transform_6, window_bounds = array<i64: 128, 128>}, {pipeline_mode = #tpu.pipeline_mode<synchronous>, transform_indices = @transform_7, window_bounds = array<i64: 1, 128>}, {pipeline_mode = #tpu.pipeline_mode<synchronous>, transform_indices = @transform_8, window_bounds = array<i64: 128, 128>}, {pipeline_mode = #tpu.pipeline_mode<synchronous>, transform_indices = @transform_9, window_bounds = array<i64: 1, 128>}, {pipeline_mode = #tpu.pipeline_mode<synchronous>, transform_indices = @transform_10, window_bounds = array<i64: 128, 256>}, {pipeline_mode = #tpu.pipeline_mode<synchronous>, transform_indices = @transform_11, window_bounds = array<i64: 128, 256>}, {pipeline_mode = #tpu.pipeline_mode<synchronous>, transform_indices = @transform_12, window_bounds = array<i64: 1, 256>}, {pipeline_mode = #tpu.pipeline_mode<synchronous>, transform_indices = @transform_13, window_bounds = array<i64: 256, 128>}, {pipeline_mode = #tpu.pipeline_mode<synchronous>, transform_indices = @transform_14, window_bounds = array<i64: 1, 128>}, {transform_indices = @transform_15, window_bounds = array<i64: 1, 128, 128>}]} {
    %c0 = arith.constant 0 : index
    %c0_0 = arith.constant 0 : index
    %c0_1 = arith.constant 0 : index
    %0 = vector.load %arg1[%c0, %c0_0, %c0_1] : memref<1x128x128xf32, #tpu.memory_space<vmem>>, vector<1x128x128xf32>
    %1 = vector.shape_cast %0 : vector<1x128x128xf32> to vector<128x128xf32>
    %c0_2 = arith.constant 0 : index
    %c0_3 = arith.constant 0 : index
    %c0_4 = arith.constant 0 : index
    %2 = vector.load %arg2[%c0_2, %c0_3, %c0_4] : memref<1x128x128xf32, #tpu.memory_space<vmem>>, vector<1x128x128xf32>
    %3 = vector.shape_cast %2 : vector<1x128x128xf32> to vector<128x128xf32>
    %c0_5 = arith.constant 0 : index
    %c0_6 = arith.constant 0 : index
    %4 = vector.load %arg3[%c0_5, %c0_6] : memref<128x128xf32, #tpu.memory_space<vmem>>, vector<128x128xf32>
    %cst = arith.constant dense<0.000000e+00> : vector<128x128xf32>
    %5 = tpu.matmul %1, %4, %cst {dimension_numbers = #tpu.dot_dimension_numbers<[1], [0], [0], [1], [0, 0, 1, 1], [], []>} : vector<128x128xf32>, vector<128x128xf32>, vector<128x128xf32> -> vector<128x128xf32>
    %c0_7 = arith.constant 0 : index
    %c0_8 = arith.constant 0 : index
    %6 = vector.load %arg4[%c0_7, %c0_8] : memref<1x128xf32, #tpu.memory_space<vmem>>, vector<1x128xf32>
    %7 = vector.broadcast %6 : vector<1x128xf32> to vector<128x128xf32>
    %8 = arith.addf %5, %7 : vector<128x128xf32>
    %c0_9 = arith.constant 0 : index
    %c0_10 = arith.constant 0 : index
    %9 = vector.load %arg5[%c0_9, %c0_10] : memref<128x128xf32, #tpu.memory_space<vmem>>, vector<128x128xf32>
    %cst_11 = arith.constant dense<0.000000e+00> : vector<128x128xf32>
    %10 = tpu.matmul %3, %9, %cst_11 {dimension_numbers = #tpu.dot_dimension_numbers<[1], [0], [0], [1], [0, 0, 1, 1], [], []>} : vector<128x128xf32>, vector<128x128xf32>, vector<128x128xf32> -> vector<128x128xf32>
    %c0_12 = arith.constant 0 : index
    %c0_13 = arith.constant 0 : index
    %11 = vector.load %arg6[%c0_12, %c0_13] : memref<1x128xf32, #tpu.memory_space<vmem>>, vector<1x128xf32>
    %12 = vector.broadcast %11 : vector<1x128xf32> to vector<128x128xf32>
    %13 = arith.addf %10, %12 : vector<128x128xf32>
    %c0_14 = arith.constant 0 : index
    %c0_15 = arith.constant 0 : index
    %14 = vector.load %arg7[%c0_14, %c0_15] : memref<128x128xf32, #tpu.memory_space<vmem>>, vector<128x128xf32>
    %cst_16 = arith.constant dense<0.000000e+00> : vector<128x128xf32>
    %15 = tpu.matmul %3, %14, %cst_16 {dimension_numbers = #tpu.dot_dimension_numbers<[1], [0], [0], [1], [0, 0, 1, 1], [], []>} : vector<128x128xf32>, vector<128x128xf32>, vector<128x128xf32> -> vector<128x128xf32>
    %c0_17 = arith.constant 0 : index
    %c0_18 = arith.constant 0 : index
    %16 = vector.load %arg8[%c0_17, %c0_18] : memref<1x128xf32, #tpu.memory_space<vmem>>, vector<1x128xf32>
    %17 = vector.broadcast %16 : vector<1x128xf32> to vector<128x128xf32>
    %18 = arith.addf %15, %17 : vector<128x128xf32>
    %19 = vector.extract_strided_slice %8 {offsets = [0, 0], sizes = [128, 32], strides = [1, 1]} : vector<128x128xf32> to vector<128x32xf32>
    %20 = vector.extract_strided_slice %13 {offsets = [0, 0], sizes = [128, 32], strides = [1, 1]} : vector<128x128xf32> to vector<128x32xf32>
    %21 = vector.extract_strided_slice %18 {offsets = [0, 0], sizes = [128, 32], strides = [1, 1]} : vector<128x128xf32> to vector<128x32xf32>
    %cst_19 = arith.constant dense<0.000000e+00> : vector<128x128xf32>
    %22 = tpu.matmul %19, %20, %cst_19 {dimension_numbers = #tpu.dot_dimension_numbers<[1], [1], [0], [0], [0, 0, 1, 0], [], []>} : vector<128x32xf32>, vector<128x32xf32>, vector<128x128xf32> -> vector<128x128xf32>
    %cst_20 = arith.constant dense<0xFF800000> : vector<128xf32>
    %23 = vector.multi_reduction <maximumf>, %22, %cst_20 [1] : vector<128x128xf32> to vector<128xf32>
    %24 = vector.shape_cast %23 : vector<128xf32> to vector<128x1xf32>
    %25 = vector.broadcast %24 : vector<128x1xf32> to vector<128x128xf32>
    %26 = arith.subf %22, %25 : vector<128x128xf32>
    %27 = math.exp %26 : vector<128x128xf32>
    %cst_21 = arith.constant dense<0.000000e+00> : vector<128xf32>
    %28 = vector.multi_reduction <add>, %27, %cst_21 [1] : vector<128x128xf32> to vector<128xf32>
    %29 = vector.shape_cast %28 : vector<128xf32> to vector<128x1xf32>
    %30 = vector.broadcast %29 : vector<128x1xf32> to vector<128x128xf32>
    %31 = arith.divf %27, %30 : vector<128x128xf32>
    %cst_22 = arith.constant dense<0.000000e+00> : vector<128x32xf32>
    %32 = tpu.matmul %31, %21, %cst_22 {dimension_numbers = #tpu.dot_dimension_numbers<[1], [0], [0], [1], [0, 0, 1, 1], [], []>} : vector<128x128xf32>, vector<128x32xf32>, vector<128x32xf32> -> vector<128x32xf32>
    %33 = vector.extract_strided_slice %8 {offsets = [0, 32], sizes = [128, 32], strides = [1, 1]} : vector<128x128xf32> to vector<128x32xf32>
    %34 = vector.extract_strided_slice %13 {offsets = [0, 32], sizes = [128, 32], strides = [1, 1]} : vector<128x128xf32> to vector<128x32xf32>
    %35 = vector.extract_strided_slice %18 {offsets = [0, 32], sizes = [128, 32], strides = [1, 1]} : vector<128x128xf32> to vector<128x32xf32>
    %cst_23 = arith.constant dense<0.000000e+00> : vector<128x128xf32>
    %36 = tpu.matmul %33, %34, %cst_23 {dimension_numbers = #tpu.dot_dimension_numbers<[1], [1], [0], [0], [0, 0, 1, 0], [], []>} : vector<128x32xf32>, vector<128x32xf32>, vector<128x128xf32> -> vector<128x128xf32>
    %cst_24 = arith.constant dense<0xFF800000> : vector<128xf32>
    %37 = vector.multi_reduction <maximumf>, %36, %cst_24 [1] : vector<128x128xf32> to vector<128xf32>
    %38 = vector.shape_cast %37 : vector<128xf32> to vector<128x1xf32>
    %39 = vector.broadcast %38 : vector<128x1xf32> to vector<128x128xf32>
    %40 = arith.subf %36, %39 : vector<128x128xf32>
    %41 = math.exp %40 : vector<128x128xf32>
    %cst_25 = arith.constant dense<0.000000e+00> : vector<128xf32>
    %42 = vector.multi_reduction <add>, %41, %cst_25 [1] : vector<128x128xf32> to vector<128xf32>
    %43 = vector.shape_cast %42 : vector<128xf32> to vector<128x1xf32>
    %44 = vector.broadcast %43 : vector<128x1xf32> to vector<128x128xf32>
    %45 = arith.divf %41, %44 : vector<128x128xf32>
    %cst_26 = arith.constant dense<0.000000e+00> : vector<128x32xf32>
    %46 = tpu.matmul %45, %35, %cst_26 {dimension_numbers = #tpu.dot_dimension_numbers<[1], [0], [0], [1], [0, 0, 1, 1], [], []>} : vector<128x128xf32>, vector<128x32xf32>, vector<128x32xf32> -> vector<128x32xf32>
    %47 = vector.extract_strided_slice %8 {offsets = [0, 64], sizes = [128, 32], strides = [1, 1]} : vector<128x128xf32> to vector<128x32xf32>
    %48 = vector.extract_strided_slice %13 {offsets = [0, 64], sizes = [128, 32], strides = [1, 1]} : vector<128x128xf32> to vector<128x32xf32>
    %49 = vector.extract_strided_slice %18 {offsets = [0, 64], sizes = [128, 32], strides = [1, 1]} : vector<128x128xf32> to vector<128x32xf32>
    %cst_27 = arith.constant dense<0.000000e+00> : vector<128x128xf32>
    %50 = tpu.matmul %47, %48, %cst_27 {dimension_numbers = #tpu.dot_dimension_numbers<[1], [1], [0], [0], [0, 0, 1, 0], [], []>} : vector<128x32xf32>, vector<128x32xf32>, vector<128x128xf32> -> vector<128x128xf32>
    %cst_28 = arith.constant dense<0xFF800000> : vector<128xf32>
    %51 = vector.multi_reduction <maximumf>, %50, %cst_28 [1] : vector<128x128xf32> to vector<128xf32>
    %52 = vector.shape_cast %51 : vector<128xf32> to vector<128x1xf32>
    %53 = vector.broadcast %52 : vector<128x1xf32> to vector<128x128xf32>
    %54 = arith.subf %50, %53 : vector<128x128xf32>
    %55 = math.exp %54 : vector<128x128xf32>
    %cst_29 = arith.constant dense<0.000000e+00> : vector<128xf32>
    %56 = vector.multi_reduction <add>, %55, %cst_29 [1] : vector<128x128xf32> to vector<128xf32>
    %57 = vector.shape_cast %56 : vector<128xf32> to vector<128x1xf32>
    %58 = vector.broadcast %57 : vector<128x1xf32> to vector<128x128xf32>
    %59 = arith.divf %55, %58 : vector<128x128xf32>
    %cst_30 = arith.constant dense<0.000000e+00> : vector<128x32xf32>
    %60 = tpu.matmul %59, %49, %cst_30 {dimension_numbers = #tpu.dot_dimension_numbers<[1], [0], [0], [1], [0, 0, 1, 1], [], []>} : vector<128x128xf32>, vector<128x32xf32>, vector<128x32xf32> -> vector<128x32xf32>
    %61 = vector.extract_strided_slice %8 {offsets = [0, 96], sizes = [128, 32], strides = [1, 1]} : vector<128x128xf32> to vector<128x32xf32>
    %62 = vector.extract_strided_slice %13 {offsets = [0, 96], sizes = [128, 32], strides = [1, 1]} : vector<128x128xf32> to vector<128x32xf32>
    %63 = vector.extract_strided_slice %18 {offsets = [0, 96], sizes = [128, 32], strides = [1, 1]} : vector<128x128xf32> to vector<128x32xf32>
    %cst_31 = arith.constant dense<0.000000e+00> : vector<128x128xf32>
    %64 = tpu.matmul %61, %62, %cst_31 {dimension_numbers = #tpu.dot_dimension_numbers<[1], [1], [0], [0], [0, 0, 1, 0], [], []>} : vector<128x32xf32>, vector<128x32xf32>, vector<128x128xf32> -> vector<128x128xf32>
    %cst_32 = arith.constant dense<0xFF800000> : vector<128xf32>
    %65 = vector.multi_reduction <maximumf>, %64, %cst_32 [1] : vector<128x128xf32> to vector<128xf32>
    %66 = vector.shape_cast %65 : vector<128xf32> to vector<128x1xf32>
    %67 = vector.broadcast %66 : vector<128x1xf32> to vector<128x128xf32>
    %68 = arith.subf %64, %67 : vector<128x128xf32>
    %69 = math.exp %68 : vector<128x128xf32>
    %cst_33 = arith.constant dense<0.000000e+00> : vector<128xf32>
    %70 = vector.multi_reduction <add>, %69, %cst_33 [1] : vector<128x128xf32> to vector<128xf32>
    %71 = vector.shape_cast %70 : vector<128xf32> to vector<128x1xf32>
    %72 = vector.broadcast %71 : vector<128x1xf32> to vector<128x128xf32>
    %73 = arith.divf %69, %72 : vector<128x128xf32>
    %cst_34 = arith.constant dense<0.000000e+00> : vector<128x32xf32>
    %74 = tpu.matmul %73, %63, %cst_34 {dimension_numbers = #tpu.dot_dimension_numbers<[1], [0], [0], [1], [0, 0, 1, 1], [], []>} : vector<128x128xf32>, vector<128x32xf32>, vector<128x32xf32> -> vector<128x32xf32>
    %75 = tpu.concatenate %32, %46, %60, %74 in 1 : vector<128x32xf32>, vector<128x32xf32>, vector<128x32xf32>, vector<128x32xf32> -> vector<128x128xf32>
    %c0_35 = arith.constant 0 : index
    %c0_36 = arith.constant 0 : index
    %76 = vector.load %arg9[%c0_35, %c0_36] : memref<128x128xf32, #tpu.memory_space<vmem>>, vector<128x128xf32>
    %cst_37 = arith.constant dense<0.000000e+00> : vector<128x128xf32>
    %77 = tpu.matmul %75, %76, %cst_37 {dimension_numbers = #tpu.dot_dimension_numbers<[1], [0], [0], [1], [0, 0, 1, 1], [], []>} : vector<128x128xf32>, vector<128x128xf32>, vector<128x128xf32> -> vector<128x128xf32>
    %c0_38 = arith.constant 0 : index
    %c0_39 = arith.constant 0 : index
    %78 = vector.load %arg10[%c0_38, %c0_39] : memref<1x128xf32, #tpu.memory_space<vmem>>, vector<1x128xf32>
    %79 = vector.broadcast %78 : vector<1x128xf32> to vector<128x128xf32>
    %80 = arith.addf %77, %79 : vector<128x128xf32>
    %c0_40 = arith.constant 0 : index
    %c0_41 = arith.constant 0 : index
    %81 = vector.load %arg11[%c0_40, %c0_41] : memref<128x256xf32, #tpu.memory_space<vmem>>, vector<128x256xf32>
    %cst_42 = arith.constant dense<0.000000e+00> : vector<128x256xf32>
    %82 = tpu.matmul %1, %81, %cst_42 {dimension_numbers = #tpu.dot_dimension_numbers<[1], [0], [0], [1], [0, 0, 1, 1], [], []>} : vector<128x128xf32>, vector<128x256xf32>, vector<128x256xf32> -> vector<128x256xf32>
    %c0_43 = arith.constant 0 : index
    %c0_44 = arith.constant 0 : index
    %83 = vector.load %arg12[%c0_43, %c0_44] : memref<128x256xf32, #tpu.memory_space<vmem>>, vector<128x256xf32>
    %cst_45 = arith.constant dense<0.000000e+00> : vector<128x256xf32>
    %84 = tpu.matmul %80, %83, %cst_45 {dimension_numbers = #tpu.dot_dimension_numbers<[1], [0], [0], [1], [0, 0, 1, 1], [], []>} : vector<128x128xf32>, vector<128x256xf32>, vector<128x256xf32> -> vector<128x256xf32>
    %85 = arith.addf %82, %84 : vector<128x256xf32>
    %c0_46 = arith.constant 0 : index
    %c0_47 = arith.constant 0 : index
    %86 = vector.load %arg13[%c0_46, %c0_47] : memref<1x256xf32, #tpu.memory_space<vmem>>, vector<1x256xf32>
    %87 = vector.broadcast %86 : vector<1x256xf32> to vector<128x256xf32>
    %88 = arith.addf %85, %87 : vector<128x256xf32>
    %cst_48 = arith.constant dense<0.000000e+00> : vector<256xf32>
    %89 = vector.multi_reduction <add>, %88, %cst_48 [0] : vector<128x256xf32> to vector<256xf32>
    %90 = vector.shape_cast %89 : vector<256xf32> to vector<1x256xf32>
    %cst_49 = arith.constant 1.280000e+02 : f32
    %91 = vector.broadcast %cst_49 : f32 to vector<1x256xf32>
    %92 = arith.divf %90, %91 : vector<1x256xf32>
    %93 = vector.broadcast %92 : vector<1x256xf32> to vector<128x256xf32>
    %94 = arith.subf %88, %93 : vector<128x256xf32>
    %95 = arith.mulf %94, %94 : vector<128x256xf32>
    %cst_50 = arith.constant dense<0.000000e+00> : vector<256xf32>
    %96 = vector.multi_reduction <add>, %95, %cst_50 [0] : vector<128x256xf32> to vector<256xf32>
    %97 = vector.shape_cast %96 : vector<256xf32> to vector<1x256xf32>
    %cst_51 = arith.constant 1.280000e+02 : f32
    %98 = vector.broadcast %cst_51 : f32 to vector<1x256xf32>
    %99 = arith.divf %97, %98 : vector<1x256xf32>
    %cst_52 = arith.constant 9.99999974E-6 : f32
    %100 = vector.broadcast %cst_52 : f32 to vector<1x256xf32>
    %101 = arith.addf %99, %100 : vector<1x256xf32>
    %102 = math.rsqrt %101 : vector<1x256xf32>
    %103 = vector.broadcast %102 : vector<1x256xf32> to vector<128x256xf32>
    %104 = arith.mulf %94, %103 : vector<128x256xf32>
    %cst_53 = arith.constant 0.000000e+00 : f32
    %105 = vector.broadcast %cst_53 : f32 to vector<128x256xf32>
    %106 = arith.maximumf %104, %105 : vector<128x256xf32>
    %c0_54 = arith.constant 0 : index
    %c0_55 = arith.constant 0 : index
    %107 = vector.load %arg14[%c0_54, %c0_55] : memref<256x128xf32, #tpu.memory_space<vmem>>, vector<256x128xf32>
    %cst_56 = arith.constant dense<0.000000e+00> : vector<128x128xf32>
    %108 = tpu.matmul %106, %107, %cst_56 {dimension_numbers = #tpu.dot_dimension_numbers<[1], [0], [0], [1], [0, 0, 1, 1], [], []>} : vector<128x256xf32>, vector<256x128xf32>, vector<128x128xf32> -> vector<128x128xf32>
    %c0_57 = arith.constant 0 : index
    %c0_58 = arith.constant 0 : index
    %109 = vector.load %arg15[%c0_57, %c0_58] : memref<1x128xf32, #tpu.memory_space<vmem>>, vector<1x128xf32>
    %110 = vector.broadcast %109 : vector<1x128xf32> to vector<128x128xf32>
    %111 = arith.addf %108, %110 : vector<128x128xf32>
    %c0_59 = arith.constant 0 : index
    %c0_60 = arith.constant 0 : index
    %c0_61 = arith.constant 0 : index
    %112 = vector.load %arg16[%c0_59, %c0_60, %c0_61] : memref<1x128x128xf32, #tpu.memory_space<vmem>>, vector<1x128x128xf32>
    %113 = vector.shape_cast %112 : vector<1x128x128xf32> to vector<128x128xf32>
    %114 = vector.shape_cast %111 : vector<128x128xf32> to vector<1x128x128xf32>
    tpu.vector_store %arg16[%c0_59, %c0_60, %c0_61], %114 {strides = array<i32>} : memref<1x128x128xf32, #tpu.memory_space<vmem>>, vector<1x128x128xf32>,
    return
  }
  func.func @transform_0(%arg0: i32) -> (i32, i32, i32) {
    %c0_i32 = arith.constant 0 : i32
    %c0_i32_0 = arith.constant 0 : i32
    %c0_i32_1 = arith.constant 0 : i32
    return %arg0, %c0_i32, %c0_i32_0 : i32, i32, i32
  }
  func.func @transform_1(%arg0: i32) -> (i32, i32, i32) {
    %c0_i32 = arith.constant 0 : i32
    %c0_i32_0 = arith.constant 0 : i32
    %c0_i32_1 = arith.constant 0 : i32
    return %arg0, %c0_i32, %c0_i32_0 : i32, i32, i32
  }
  func.func @transform_2(%arg0: i32) -> (i32, i32) {
    %c0_i32 = arith.constant 0 : i32
    %c0_i32_0 = arith.constant 0 : i32
    %c0_i32_1 = arith.constant 0 : i32
    return %c0_i32, %c0_i32_0 : i32, i32
  }
  func.func @transform_3(%arg0: i32) -> (i32, i32) {
    %c0_i32 = arith.constant 0 : i32
    %c0_i32_0 = arith.constant 0 : i32
    %c0_i32_1 = arith.constant 0 : i32
    return %c0_i32, %c0_i32_0 : i32, i32
  }
  func.func @transform_4(%arg0: i32) -> (i32, i32) {
    %c0_i32 = arith.constant 0 : i32
    %c0_i32_0 = arith.constant 0 : i32
    %c0_i32_1 = arith.constant 0 : i32
    return %c0_i32, %c0_i32_0 : i32, i32
  }
  func.func @transform_5(%arg0: i32) -> (i32, i32) {
    %c0_i32 = arith.constant 0 : i32
    %c0_i32_0 = arith.constant 0 : i32
    %c0_i32_1 = arith.constant 0 : i32
    return %c0_i32, %c0_i32_0 : i32, i32
  }
  func.func @transform_6(%arg0: i32) -> (i32, i32) {
    %c0_i32 = arith.constant 0 : i32
    %c0_i32_0 = arith.constant 0 : i32
    %c0_i32_1 = arith.constant 0 : i32
    return %c0_i32, %c0_i32_0 : i32, i32
  }
  func.func @transform_7(%arg0: i32) -> (i32, i32) {
    %c0_i32 = arith.constant 0 : i32
    %c0_i32_0 = arith.constant 0 : i32
    %c0_i32_1 = arith.constant 0 : i32
    return %c0_i32, %c0_i32_0 : i32, i32
  }
  func.func @transform_8(%arg0: i32) -> (i32, i32) {
    %c0_i32 = arith.constant 0 : i32
    %c0_i32_0 = arith.constant 0 : i32
    %c0_i32_1 = arith.constant 0 : i32
    return %c0_i32, %c0_i32_0 : i32, i32
  }
  func.func @transform_9(%arg0: i32) -> (i32, i32) {
    %c0_i32 = arith.constant 0 : i32
    %c0_i32_0 = arith.constant 0 : i32
    %c0_i32_1 = arith.constant 0 : i32
    return %c0_i32, %c0_i32_0 : i32, i32
  }
  func.func @transform_10(%arg0: i32) -> (i32, i32) {
    %c0_i32 = arith.constant 0 : i32
    %c0_i32_0 = arith.constant 0 : i32
    %c0_i32_1 = arith.constant 0 : i32
    return %c0_i32, %c0_i32_0 : i32, i32
  }
  func.func @transform_11(%arg0: i32) -> (i32, i32) {
    %c0_i32 = arith.constant 0 : i32
    %c0_i32_0 = arith.constant 0 : i32
    %c0_i32_1 = arith.constant 0 : i32
    return %c0_i32, %c0_i32_0 : i32, i32
  }
  func.func @transform_12(%arg0: i32) -> (i32, i32) {
    %c0_i32 = arith.constant 0 : i32
    %c0_i32_0 = arith.constant 0 : i32
    %c0_i32_1 = arith.constant 0 : i32
    return %c0_i32, %c0_i32_0 : i32, i32
  }
  func.func @transform_13(%arg0: i32) -> (i32, i32) {
    %c0_i32 = arith.constant 0 : i32
    %c0_i32_0 = arith.constant 0 : i32
    %c0_i32_1 = arith.constant 0 : i32
    return %c0_i32, %c0_i32_0 : i32, i32
  }
  func.func @transform_14(%arg0: i32) -> (i32, i32) {
    %c0_i32 = arith.constant 0 : i32
    %c0_i32_0 = arith.constant 0 : i32
    %c0_i32_1 = arith.constant 0 : i32
    return %c0_i32, %c0_i32_0 : i32, i32
  }
  func.func @transform_15(%arg0: i32) -> (i32, i32, i32) {
    %c0_i32 = arith.constant 0 : i32
    %c0_i32_0 = arith.constant 0 : i32
    %c0_i32_1 = arith.constant 0 : i32
    return %arg0, %c0_i32, %c0_i32_0 : i32, i32, i32
  }
}

</mosaic_0001>

<llo_original>
// kernel: tpu_custom_call.1
$region0: #{tpu_custom_call.1}
  #allocation0 [shape = 'u32[]', space=smem, size = 0x4, offset = 0x4, fixed_abs, tag = 'smem constant byte address 0x4 - core index']
  #allocation1 [shape = 'u32[144,128]{1,0:T(1,128)}', space=vmem, size = 0x12000, scoped, tag = 'internal scratch']
  %s0 = inlined_call_operand.hbm [shape: f32[2,128,128], index: 0, kind: input, shape index: {}]
  %s1 = inlined_call_operand.hbm [shape: f32[2,128,128], index: 1, kind: input, shape index: {}]
  %s2 = inlined_call_operand.hbm [shape: f32[128,128], index: 2, kind: input, shape index: {}]
  %s3 = inlined_call_operand.vmem [shape: f32[1,128], index: 3, kind: input, shape index: {}]
  %s4 = inlined_call_operand.hbm [shape: f32[128,128], index: 4, kind: input, shape index: {}]
  %s5 = inlined_call_operand.vmem [shape: f32[1,128], index: 5, kind: input, shape index: {}]
  %s6 = inlined_call_operand.hbm [shape: f32[128,128], index: 6, kind: input, shape index: {}]
  %s7 = inlined_call_operand.vmem [shape: f32[1,128], index: 7, kind: input, shape index: {}]
  %s8 = inlined_call_operand.hbm [shape: f32[128,128], index: 8, kind: input, shape index: {}]
  %s9 = inlined_call_operand.vmem [shape: f32[1,128], index: 9, kind: input, shape index: {}]
  %s10 = inlined_call_operand.hbm [shape: f32[128,256], index: 10, kind: input, shape index: {}]
  %s11 = inlined_call_operand.hbm [shape: f32[128,256], index: 11, kind: input, shape index: {}]
  %s12 = inlined_call_operand.vmem [shape: f32[1,256], index: 12, kind: input, shape index: {}]
  %s13 = inlined_call_operand.hbm [shape: f32[256,128], index: 13, kind: input, shape index: {}]
  %s14 = inlined_call_operand.vmem [shape: f32[1,128], index: 14, kind: input, shape index: {}]
  %s15 = inlined_call_operand.hbm [shape: f32[2,128,128], index: 15, kind: output, shape index: {}]
  %s16 = sld [smem:[#allocation0]]
  $region129: #{tpu_custom_call.1} parent=0
    _
  %s18 = ssub.s32 1, %s16
  %s19 = scalar_select 0, %s18, %s16
  $region1: #{tpu_custom_call.1} parent=0
    #allocation2 [shape = 'u8[131072]{0}', space=vmem, size = 0x20000, scoped, tag = 'input window, operand 0']
    #allocation3 [shape = 's32[2]{0}', space=sflag, size = 0x8, scoped, tag = 'scoped memory for tpu_custom_call.1']
    #allocation4 [shape = 's32[2]{0}', space=sflag, size = 0x8, scoped, tag = 'scoped memory for tpu_custom_call.1']
    #allocation5 [shape = 'u8[131072]{0}', space=vmem, size = 0x20000, scoped, tag = 'input window, operand 1']
    #allocation6 [shape = 's32[2]{0}', space=sflag, size = 0x8, scoped, tag = 'scoped memory for tpu_custom_call.1']
    #allocation7 [shape = 'u8[65536]{0}', space=vmem, size = 0x10000, scoped, tag = 'input window, operand 2, single buffered']
    #allocation8 [shape = 'u8[65536]{0}', space=vmem, size = 0x10000, scoped, tag = 'input window, operand 4, single buffered']
    #allocation9 [shape = 's32[1]{0}', space=sflag, size = 0x4, scoped, tag = 'scoped memory for tpu_custom_call.1']
    #allocation10 [shape = 'u8[65536]{0}', space=vmem, size = 0x10000, scoped, tag = 'input window, operand 6, single buffered']
    #allocation11 [shape = 'u8[65536]{0}', space=vmem, size = 0x10000, scoped, tag = 'input window, operand 8, single buffered']
    #allocation12 [shape = 's32[1]{0}', space=sflag, size = 0x4, scoped, tag = 'scoped memory for tpu_custom_call.1']
    #allocation13 [shape = 'u8[131072]{0}', space=vmem, size = 0x20000, scoped, tag = 'input window, operand 10, single buffered']
    #allocation14 [shape = 'u8[131072]{0}', space=vmem, size = 0x20000, scoped, tag = 'input window, operand 11, single buffered']
    #allocation15 [shape = 's32[1]{0}', space=sflag, size = 0x4, scoped, tag = 'scoped memory for tpu_custom_call.1']
    #allocation16 [shape = 'u8[131072]{0}', space=vmem, size = 0x20000, scoped, tag = 'input window, operand 13, single buffered']
    #allocation17 [shape = 'u8[131072]{0}', space=vmem, size = 0x20000, scoped, tag = 'output window, operand 0']
    %20 = vsyncpa [#allocation3], 0
    %s21 = scalar_lea.sflag [#allocation3], 1
    %22 = vsyncpa %s21, 0
    %23 = vsyncpa [#allocation6], 0
    %s24 = scalar_lea.sflag [#allocation6], 1
    %25 = vsyncpa %s24, 0
    %26 = vsyncpa [#allocation9], 0
    %27 = vsyncpa [#allocation12], 0
    %28 = vsyncpa [#allocation15], 0
    %29 = vsyncpa [#allocation4], 0
    %s30 = scalar_lea.sflag [#allocation4], 1
    %31 = vsyncpa %s30, 0
    loop: start=0, step=1, limit=4
    $region2: #{tpu_custom_call.1} parent=1 // loop_pre_header
      _
    $region3: #{tpu_custom_call.1} parent=1 // loop_header
      %s33 = sphi 0, %s37
      %p34 = scmp.ge.s32.totalorder %s33, 4
      %s43 = sphi 0, %s45
      %s46 = sphi 0, %s43
      %s47 = sphi 0, %s46
      %s63 = sphi 0, %s47
      %s69 = sphi 0, %s71
      %s72 = sphi 0, %s69
      %s73 = sphi 0, %s72
      %s89 = sphi 0, %s73
      %s93 = sphi 0, %s93
      %s95 = sphi 0, %s93
      %s96 = sphi 0, %s95
      %s110 = sphi 0, %s96
      %s114 = sphi 0, %s114
      %s116 = sphi 0, %s114
      %s117 = sphi 0, %s116
      %s131 = sphi 0, %s117
      %s135 = sphi 0, %s135
      %s137 = sphi 0, %s135
      %s138 = sphi 0, %s137
      %s152 = sphi 0, %s138
      %s156 = sphi 0, %s156
      %s158 = sphi 0, %s156
      %s159 = sphi 0, %s158
      %s173 = sphi 0, %s159
      %s177 = sphi 0, %s177
      %s179 = sphi 0, %s177
      %s180 = sphi 0, %s179
      %s194 = sphi 0, %s180
      %s198 = sphi 0, %s198
      %s200 = sphi 0, %s198
      %s201 = sphi 0, %s200
      %s215 = sphi 0, %s201
      %s219 = sphi 0, %s219
      %s221 = sphi 0, %s219
      %s222 = sphi 0, %s221
      %s236 = sphi 0, %s222
      %s240 = sphi 0, %s240
      %s242 = sphi 0, %s240
      %s243 = sphi 0, %s242
      %s257 = sphi 0, %s243
      %s261 = sphi 0, %s261
      %s263 = sphi 0, %s261
      %s264 = sphi 0, %s263
      %s278 = sphi 0, %s264
      %s282 = sphi 0, %s282
      %s284 = sphi 0, %s282
      %s285 = sphi 0, %s284
      %s299 = sphi 0, %s285
      %s303 = sphi 0, %s303
      %s305 = sphi 0, %s303
      %s306 = sphi 0, %s305
      %s320 = sphi 0, %s306
      %s324 = sphi 0, %s324
      %s326 = sphi 0, %s324
      %s327 = sphi 0, %s326
      %s341 = sphi 0, %s327
      %s345 = sphi 0, %s345
      %s347 = sphi 0, %s345
      %s348 = sphi 0, %s347
      %s362 = sphi 0, %s348
      %s368 = sphi 0, %s370
      %s371 = sphi 0, %s368
      %s372 = sphi 0, %s371
      %s388 = sphi 0, %s372
    $region4: #{tpu_custom_call.1} parent=1 // loop_header_branch
      %36 = sbr.rel (%p34) target = $region8
    $region5: #{tpu_custom_call.1} parent=1 // loop_body
      %s38 = ssub.s32 %s33, 1
      %s39 = ssub.s32 %s33, 2
      %s40 = sadd.s32 %s33, 1
      %s41 = ssub.s32 %s33, %s40
      %p42 = scmp.eq.s32.totalorder %s41, 0
      %s44 = sadd.s32 %s43, 1
      %s45 = scalar_select %p42, %s43, %s44
      %p48 = pneg %p42
      %p49 = scmp.eq.s32.totalorder %s33, 1
      %p50 = por %p48, %p49
      %p51 = scmp.ne.s32.totalorder %s43, %s46
      %p52 = scmp.eq.s32.totalorder %s33, 0
      %p53 = por %p51, %p52
      %p54 = scmp.ne.s32.totalorder %s43, %s46
      %p55 = scmp.eq.s32.totalorder %s38, 1
      %p56 = por %p54, %p55
      %p57 = scmp.ne.s32.totalorder %s46, %s47
      %p58 = scmp.eq.s32.totalorder %s38, 0
      %p59 = por %p57, %p58
      %p60 = scmp.ne.s32.totalorder %s46, %s47
      %p61 = scmp.eq.s32.totalorder %s39, 1
      %p62 = por %p60, %p61
      %p64 = scmp.ne.s32.totalorder %s47, %s63
      %p65 = scmp.eq.s32.totalorder %s39, 0
      %p66 = por %p64, %p65
      %s67 = ssub.s32 %s33, %s40
      %p68 = scmp.eq.s32.totalorder %s67, 0
      %s70 = sadd.s32 %s69, 1
      %s71 = scalar_select %p68, %s69, %s70
      %p74 = pneg %p68
      %p75 = scmp.eq.s32.totalorder %s33, 1
      %p76 = por %p74, %p75
      %p77 = scmp.ne.s32.totalorder %s69, %s72
      %p78 = scmp.eq.s32.totalorder %s33, 0
      %p79 = por %p77, %p78
      %p80 = scmp.ne.s32.totalorder %s69, %s72
      %p81 = scmp.eq.s32.totalorder %s38, 1
      %p82 = por %p80, %p81
      %p83 = scmp.ne.s32.totalorder %s72, %s73
      %p84 = scmp.eq.s32.totalorder %s38, 0
      %p85 = por %p83, %p84
      %p86 = scmp.ne.s32.totalorder %s72, %s73
      %p87 = scmp.eq.s32.totalorder %s39, 1
      %p88 = por %p86, %p87
      %p90 = scmp.ne.s32.totalorder %s73, %s89
      %p91 = scmp.eq.s32.totalorder %s39, 0
      %p92 = por %p90, %p91
      %s94 = sadd.s32 %s93, 1
      %p97 = scmp.eq.s32.totalorder %s33, 1
      %p98 = scmp.ne.s32.totalorder %s93, %s95
      %p99 = scmp.eq.s32.totalorder %s33, 0
      %p100 = por %p98, %p99
      %p101 = scmp.ne.s32.totalorder %s93, %s95
      %p102 = scmp.eq.s32.totalorder %s38, 1
      %p103 = por %p101, %p102
      %p104 = scmp.ne.s32.totalorder %s95, %s96
      %p105 = scmp.eq.s32.totalorder %s38, 0
      %p106 = por %p104, %p105
      %p107 = scmp.ne.s32.totalorder %s95, %s96
      %p108 = scmp.eq.s32.totalorder %s39, 1
      %p109 = por %p107, %p108
      %p111 = scmp.ne.s32.totalorder %s96, %s110
      %p112 = scmp.eq.s32.totalorder %s39, 0
      %p113 = por %p111, %p112
      %s115 = sadd.s32 %s114, 1
      %p118 = scmp.eq.s32.totalorder %s33, 1
      %p119 = scmp.ne.s32.totalorder %s114, %s116
      %p120 = scmp.eq.s32.totalorder %s33, 0
      %p121 = por %p119, %p120
      %p122 = scmp.ne.s32.totalorder %s114, %s116
      %p123 = scmp.eq.s32.totalorder %s38, 1
      %p124 = por %p122, %p123
      %p125 = scmp.ne.s32.totalorder %s116, %s117
      %p126 = scmp.eq.s32.totalorder %s38, 0
      %p127 = por %p125, %p126
      %p128 = scmp.ne.s32.totalorder %s116, %s117
      %p129 = scmp.eq.s32.totalorder %s39, 1
      %p130 = por %p128, %p129
      %p132 = scmp.ne.s32.totalorder %s117, %s131
      %p133 = scmp.eq.s32.totalorder %s39, 0
      %p134 = por %p132, %p133
      %s136 = sadd.s32 %s135, 1
      %p139 = scmp.eq.s32.totalorder %s33, 1
      %p140 = scmp.ne.s32.totalorder %s135, %s137
      %p141 = scmp.eq.s32.totalorder %s33, 0
      %p142 = por %p140, %p141
      %p143 = scmp.ne.s32.totalorder %s135, %s137
      %p144 = scmp.eq.s32.totalorder %s38, 1
      %p145 = por %p143, %p144
      %p146 = scmp.ne.s32.totalorder %s137, %s138
      %p147 = scmp.eq.s32.totalorder %s38, 0
      %p148 = por %p146, %p147
      %p149 = scmp.ne.s32.totalorder %s137, %s138
      %p150 = scmp.eq.s32.totalorder %s39, 1
      %p151 = por %p149, %p150
      %p153 = scmp.ne.s32.totalorder %s138, %s152
      %p154 = scmp.eq.s32.totalorder %s39, 0
      %p155 = por %p153, %p154
      %s157 = sadd.s32 %s156, 1
      %p160 = scmp.eq.s32.totalorder %s33, 1
      %p161 = scmp.ne.s32.totalorder %s156, %s158
      %p162 = scmp.eq.s32.totalorder %s33, 0
      %p163 = por %p161, %p162
      %p164 = scmp.ne.s32.totalorder %s156, %s158
      %p165 = scmp.eq.s32.totalorder %s38, 1
      %p166 = por %p164, %p165
      %p167 = scmp.ne.s32.totalorder %s158, %s159
      %p168 = scmp.eq.s32.totalorder %s38, 0
      %p169 = por %p167, %p168
      %p170 = scmp.ne.s32.totalorder %s158, %s159
      %p171 = scmp.eq.s32.totalorder %s39, 1
      %p172 = por %p170, %p171
      %p174 = scmp.ne.s32.totalorder %s159, %s173
      %p175 = scmp.eq.s32.totalorder %s39, 0
      %p176 = por %p174, %p175
      %s178 = sadd.s32 %s177, 1
      %p181 = scmp.eq.s32.totalorder %s33, 1
      %p182 = scmp.ne.s32.totalorder %s177, %s179
      %p183 = scmp.eq.s32.totalorder %s33, 0
      %p184 = por %p182, %p183
      %p185 = scmp.ne.s32.totalorder %s177, %s179
      %p186 = scmp.eq.s32.totalorder %s38, 1
      %p187 = por %p185, %p186
      %p188 = scmp.ne.s32.totalorder %s179, %s180
      %p189 = scmp.eq.s32.totalorder %s38, 0
      %p190 = por %p188, %p189
      %p191 = scmp.ne.s32.totalorder %s179, %s180
      %p192 = scmp.eq.s32.totalorder %s39, 1
      %p193 = por %p191, %p192
      %p195 = scmp.ne.s32.totalorder %s180, %s194
      %p196 = scmp.eq.s32.totalorder %s39, 0
      %p197 = por %p195, %p196
      %s199 = sadd.s32 %s198, 1
      %p202 = scmp.eq.s32.totalorder %s33, 1
      %p203 = scmp.ne.s32.totalorder %s198, %s200
      %p204 = scmp.eq.s32.totalorder %s33, 0
      %p205 = por %p203, %p204
      %p206 = scmp.ne.s32.totalorder %s198, %s200
      %p207 = scmp.eq.s32.totalorder %s38, 1
      %p208 = por %p206, %p207
      %p209 = scmp.ne.s32.totalorder %s200, %s201
      %p210 = scmp.eq.s32.totalorder %s38, 0
      %p211 = por %p209, %p210
      %p212 = scmp.ne.s32.totalorder %s200, %s201
      %p213 = scmp.eq.s32.totalorder %s39, 1
      %p214 = por %p212, %p213
      %p216 = scmp.ne.s32.totalorder %s201, %s215
      %p217 = scmp.eq.s32.totalorder %s39, 0
      %p218 = por %p216, %p217
      %s220 = sadd.s32 %s219, 1
      %p223 = scmp.eq.s32.totalorder %s33, 1
      %p224 = scmp.ne.s32.totalorder %s219, %s221
      %p225 = scmp.eq.s32.totalorder %s33, 0
      %p226 = por %p224, %p225
      %p227 = scmp.ne.s32.totalorder %s219, %s221
      %p228 = scmp.eq.s32.totalorder %s38, 1
      %p229 = por %p227, %p228
      %p230 = scmp.ne.s32.totalorder %s221, %s222
      %p231 = scmp.eq.s32.totalorder %s38, 0
      %p232 = por %p230, %p231
      %p233 = scmp.ne.s32.totalorder %s221, %s222
      %p234 = scmp.eq.s32.totalorder %s39, 1
      %p235 = por %p233, %p234
      %p237 = scmp.ne.s32.totalorder %s222, %s236
      %p238 = scmp.eq.s32.totalorder %s39, 0
      %p239 = por %p237, %p238
      %s241 = sadd.s32 %s240, 1
      %p244 = scmp.eq.s32.totalorder %s33, 1
      %p245 = scmp.ne.s32.totalorder %s240, %s242
      %p246 = scmp.eq.s32.totalorder %s33, 0
      %p247 = por %p245, %p246
      %p248 = scmp.ne.s32.totalorder %s240, %s242
      %p249 = scmp.eq.s32.totalorder %s38, 1
      %p250 = por %p248, %p249
      %p251 = scmp.ne.s32.totalorder %s242, %s243
      %p252 = scmp.eq.s32.totalorder %s38, 0
      %p253 = por %p251, %p252
      %p254 = scmp.ne.s32.totalorder %s242, %s243
      %p255 = scmp.eq.s32.totalorder %s39, 1
      %p256 = por %p254, %p255
      %p258 = scmp.ne.s32.totalorder %s243, %s257
      %p259 = scmp.eq.s32.totalorder %s39, 0
      %p260 = por %p258, %p259
      %s262 = sadd.s32 %s261, 1
      %p265 = scmp.eq.s32.totalorder %s33, 1
      %p266 = scmp.ne.s32.totalorder %s261, %s263
      %p267 = scmp.eq.s32.totalorder %s33, 0
      %p268 = por %p266, %p267
      %p269 = scmp.ne.s32.totalorder %s261, %s263
      %p270 = scmp.eq.s32.totalorder %s38, 1
      %p271 = por %p269, %p270
      %p272 = scmp.ne.s32.totalorder %s263, %s264
      %p273 = scmp.eq.s32.totalorder %s38, 0
      %p274 = por %p272, %p273
      %p275 = scmp.ne.s32.totalorder %s263, %s264
      %p276 = scmp.eq.s32.totalorder %s39, 1
      %p277 = por %p275, %p276
      %p279 = scmp.ne.s32.totalorder %s264, %s278
      %p280 = scmp.eq.s32.totalorder %s39, 0
      %p281 = por %p279, %p280
      %s283 = sadd.s32 %s282, 1
      %p286 = scmp.eq.s32.totalorder %s33, 1
      %p287 = scmp.ne.s32.totalorder %s282, %s284
      %p288 = scmp.eq.s32.totalorder %s33, 0
      %p289 = por %p287, %p288
      %p290 = scmp.ne.s32.totalorder %s282, %s284
      %p291 = scmp.eq.s32.totalorder %s38, 1
      %p292 = por %p290, %p291
      %p293 = scmp.ne.s32.totalorder %s284, %s285
      %p294 = scmp.eq.s32.totalorder %s38, 0
      %p295 = por %p293, %p294
      %p296 = scmp.ne.s32.totalorder %s284, %s285
      %p297 = scmp.eq.s32.totalorder %s39, 1
      %p298 = por %p296, %p297
      %p300 = scmp.ne.s32.totalorder %s285, %s299
      %p301 = scmp.eq.s32.totalorder %s39, 0
      %p302 = por %p300, %p301
      %s304 = sadd.s32 %s303, 1
      %p307 = scmp.eq.s32.totalorder %s33, 1
      %p308 = scmp.ne.s32.totalorder %s303, %s305
      %p309 = scmp.eq.s32.totalorder %s33, 0
      %p310 = por %p308, %p309
      %p311 = scmp.ne.s32.totalorder %s303, %s305
      %p312 = scmp.eq.s32.totalorder %s38, 1
      %p313 = por %p311, %p312
      %p314 = scmp.ne.s32.totalorder %s305, %s306
      %p315 = scmp.eq.s32.totalorder %s38, 0
      %p316 = por %p314, %p315
      %p317 = scmp.ne.s32.totalorder %s305, %s306
      %p318 = scmp.eq.s32.totalorder %s39, 1
      %p319 = por %p317, %p318
      %p321 = scmp.ne.s32.totalorder %s306, %s320
      %p322 = scmp.eq.s32.totalorder %s39, 0
      %p323 = por %p321, %p322
      %s325 = sadd.s32 %s324, 1
      %p328 = scmp.eq.s32.totalorder %s33, 1
      %p329 = scmp.ne.s32.totalorder %s324, %s326
      %p330 = scmp.eq.s32.totalorder %s33, 0
      %p331 = por %p329, %p330
      %p332 = scmp.ne.s32.totalorder %s324, %s326
      %p333 = scmp.eq.s32.totalorder %s38, 1
      %p334 = por %p332, %p333
      %p335 = scmp.ne.s32.totalorder %s326, %s327
      %p336 = scmp.eq.s32.totalorder %s38, 0
      %p337 = por %p335, %p336
      %p338 = scmp.ne.s32.totalorder %s326, %s327
      %p339 = scmp.eq.s32.totalorder %s39, 1
      %p340 = por %p338, %p339
      %p342 = scmp.ne.s32.totalorder %s327, %s341
      %p343 = scmp.eq.s32.totalorder %s39, 0
      %p344 = por %p342, %p343
      %s346 = sadd.s32 %s345, 1
      %p349 = scmp.eq.s32.totalorder %s33, 1
      %p350 = scmp.ne.s32.totalorder %s345, %s347
      %p351 = scmp.eq.s32.totalorder %s33, 0
      %p352 = por %p350, %p351
      %p353 = scmp.ne.s32.totalorder %s345, %s347
      %p354 = scmp.eq.s32.totalorder %s38, 1
      %p355 = por %p353, %p354
      %p356 = scmp.ne.s32.totalorder %s347, %s348
      %p357 = scmp.eq.s32.totalorder %s38, 0
      %p358 = por %p356, %p357
      %p359 = scmp.ne.s32.totalorder %s347, %s348
      %p360 = scmp.eq.s32.totalorder %s39, 1
      %p361 = por %p359, %p360
      %p363 = scmp.ne.s32.totalorder %s348, %s362
      %p364 = scmp.eq.s32.totalorder %s39, 0
      %p365 = por %p363, %p364
      %s366 = ssub.s32 %s33, %s40
      %p367 = scmp.eq.s32.totalorder %s366, 0
      %s369 = sadd.s32 %s368, 1
      %s370 = scalar_select %p367, %s368, %s369
      %p373 = pneg %p367
      %p374 = scmp.eq.s32.totalorder %s33, 1
      %p375 = por %p373, %p374
      %p376 = scmp.ne.s32.totalorder %s368, %s371
      %p377 = scmp.eq.s32.totalorder %s33, 0
      %p378 = por %p376, %p377
      %p379 = scmp.ne.s32.totalorder %s368, %s371
      %p380 = scmp.eq.s32.totalorder %s38, 1
      %p381 = por %p379, %p380
      %p382 = scmp.ne.s32.totalorder %s371, %s372
      %p383 = scmp.eq.s32.totalorder %s38, 0
      %p384 = por %p382, %p383
      %p385 = scmp.ne.s32.totalorder %s371, %s372
      %p386 = scmp.eq.s32.totalorder %s39, 1
      %p387 = por %p385, %p386
      %p389 = scmp.ne.s32.totalorder %s372, %s388
      %p390 = scmp.eq.s32.totalorder %s39, 0
      %p391 = por %p389, %p390
      %p392 = scmp.le.s32.totalorder 1, %s33
      %p393 = scmp.lt.s32.totalorder %s33, 3
      %p394 = pnand %p392, %p393
      %p395 = pneg %p394
      // Predicated region
      $region9: #{tpu_custom_call.1} parent=5 // pred_check
        _
      $region10: #{tpu_custom_call.1} parent=5 // pred_check_branch
        %397 = sbr.rel (%p394) target = $region12
      $region11: #{tpu_custom_call.1} parent=5 // pred_region
        %s398 = ssub.s32 %s33, 1
        // Predicated region
        $region13: #{tpu_custom_call.1} parent=11 // pred_check
          %p399 = pneg %p106
        $region14: #{tpu_custom_call.1} parent=11 // pred_check_branch
          %401 = sbr.rel (%p399) target = $region16
        $region15: #{tpu_custom_call.1} parent=11 // pred_region
          %s403 = ssub.s32 2048, 2048
          %404 = vsyncadd [#allocation6], %s403
          %s405 = sshll.u32 [#allocation7], 4
          %s406 = int_to_ptr.vmem [resolvable:$true] %s405
          %411 = dma.hbm_to_vmem [thread:$0]  %s2, 2048, %s406, [#allocation6], 128, 128, 8
        $region16: #{tpu_custom_call.1} parent=11 // pred_fallthru
          _
        // Predicated region
        $region17: #{tpu_custom_call.1} parent=11 // pred_check
          %p412 = pneg %p127
        $region18: #{tpu_custom_call.1} parent=11 // pred_check_branch
          %414 = sbr.rel (%p412) target = $region20
        $region19: #{tpu_custom_call.1} parent=11 // pred_region
          _
        $region20: #{tpu_custom_call.1} parent=11 // pred_fallthru
          _
        // Predicated region
        $region21: #{tpu_custom_call.1} parent=11 // pred_check
          %p415 = pneg %p148
        $region22: #{tpu_custom_call.1} parent=11 // pred_check_branch
          %417 = sbr.rel (%p415) target = $region24
        $region23: #{tpu_custom_call.1} parent=11 // pred_region
          %s419 = ssub.s32 2048, 2048
          %420 = vsyncadd [#allocation9], %s419
          %s421 = sshll.u32 [#allocation8], 4
          %s422 = int_to_ptr.vmem [resolvable:$true] %s421
          %427 = dma.hbm_to_vmem [thread:$0]  %s4, 2048, %s422, [#allocation9], 128, 128, 8
        $region24: #{tpu_custom_call.1} parent=11 // pred_fallthru
          _
        // Predicated region
        $region25: #{tpu_custom_call.1} parent=11 // pred_check
          %p428 = pneg %p169
        $region26: #{tpu_custom_call.1} parent=11 // pred_check_branch
          %430 = sbr.rel (%p428) target = $region28
        $region27: #{tpu_custom_call.1} parent=11 // pred_region
          _
        $region28: #{tpu_custom_call.1} parent=11 // pred_fallthru
          _
        // Predicated region
        $region29: #{tpu_custom_call.1} parent=11 // pred_check
          %p431 = pneg %p190
        $region30: #{tpu_custom_call.1} parent=11 // pred_check_branch
          %433 = sbr.rel (%p431) target = $region32
        $region31: #{tpu_custom_call.1} parent=11 // pred_region
          %s435 = ssub.s32 2048, 2048
          %436 = vsyncadd [#allocation9], %s435
          %s437 = sshll.u32 [#allocation10], 4
          %s438 = int_to_ptr.vmem [resolvable:$true] %s437
          %443 = dma.hbm_to_vmem [thread:$0]  %s6, 2048, %s438, [#allocation9], 128, 128, 8
        $region32: #{tpu_custom_call.1} parent=11 // pred_fallthru
          _
        // Predicated region
        $region33: #{tpu_custom_call.1} parent=11 // pred_check
          %p444 = pneg %p211
        $region34: #{tpu_custom_call.1} parent=11 // pred_check_branch
          %446 = sbr.rel (%p444) target = $region36
        $region35: #{tpu_custom_call.1} parent=11 // pred_region
          _
        $region36: #{tpu_custom_call.1} parent=11 // pred_fallthru
          _
        // Predicated region
        $region37: #{tpu_custom_call.1} parent=11 // pred_check
          %p447 = pneg %p232
        $region38: #{tpu_custom_call.1} parent=11 // pred_check_branch
          %449 = sbr.rel (%p447) target = $region40
        $region39: #{tpu_custom_call.1} parent=11 // pred_region
          %s451 = ssub.s32 2048, 2048
          %452 = vsyncadd [#allocation12], %s451
          %s453 = sshll.u32 [#allocation11], 4
          %s454 = int_to_ptr.vmem [resolvable:$true] %s453
          %459 = dma.hbm_to_vmem [thread:$0]  %s8, 2048, %s454, [#allocation12], 128, 128, 8
        $region40: #{tpu_custom_call.1} parent=11 // pred_fallthru
          _
        // Predicated region
        $region41: #{tpu_custom_call.1} parent=11 // pred_check
          %p460 = pneg %p253
        $region42: #{tpu_custom_call.1} parent=11 // pred_check_branch
          %462 = sbr.rel (%p460) target = $region44
        $region43: #{tpu_custom_call.1} parent=11 // pred_region
          _
        $region44: #{tpu_custom_call.1} parent=11 // pred_fallthru
          _
        // Predicated region
        $region45: #{tpu_custom_call.1} parent=11 // pred_check
          %p463 = pneg %p274
        $region46: #{tpu_custom_call.1} parent=11 // pred_check_branch
          %465 = sbr.rel (%p463) target = $region48
        $region47: #{tpu_custom_call.1} parent=11 // pred_region
          %s467 = ssub.s32 4096, 4096
          %468 = vsyncadd [#allocation12], %s467
          %s469 = sshll.u32 [#allocation13], 4
          %s470 = int_to_ptr.vmem [resolvable:$true] %s469
          %475 = dma.hbm_to_vmem [thread:$0]  %s10, 4096, %s470, [#allocation12], 256, 256, 16
        $region48: #{tpu_custom_call.1} parent=11 // pred_fallthru
          _
        // Predicated region
        $region49: #{tpu_custom_call.1} parent=11 // pred_check
          %p476 = pneg %p295
        $region50: #{tpu_custom_call.1} parent=11 // pred_check_branch
          %478 = sbr.rel (%p476) target = $region52
        $region51: #{tpu_custom_call.1} parent=11 // pred_region
          %s480 = ssub.s32 4096, 4096
          %481 = vsyncadd [#allocation15], %s480
          %s482 = sshll.u32 [#allocation14], 4
          %s483 = int_to_ptr.vmem [resolvable:$true] %s482
          %488 = dma.hbm_to_vmem [thread:$0]  %s11, 4096, %s483, [#allocation15], 256, 256, 16
        $region52: #{tpu_custom_call.1} parent=11 // pred_fallthru
          _
        // Predicated region
        $region53: #{tpu_custom_call.1} parent=11 // pred_check
          %p489 = pneg %p316
        $region54: #{tpu_custom_call.1} parent=11 // pred_check_branch
          %491 = sbr.rel (%p489) target = $region56
        $region55: #{tpu_custom_call.1} parent=11 // pred_region
          _
        $region56: #{tpu_custom_call.1} parent=11 // pred_fallthru
          _
        // Predicated region
        $region57: #{tpu_custom_call.1} parent=11 // pred_check
          %p492 = pneg %p337
        $region58: #{tpu_custom_call.1} parent=11 // pred_check_branch
          %494 = sbr.rel (%p492) target = $region60
        $region59: #{tpu_custom_call.1} parent=11 // pred_region
          %s496 = ssub.s32 4096, 4096
          %497 = vsyncadd [#allocation15], %s496
          %s498 = sshll.u32 [#allocation16], 4
          %s499 = int_to_ptr.vmem [resolvable:$true] %s498
          %504 = dma.hbm_to_vmem [thread:$0]  %s13, 4096, %s499, [#allocation15], 128, 128, 8
        $region60: #{tpu_custom_call.1} parent=11 // pred_fallthru
          _
        // Predicated region
        $region61: #{tpu_custom_call.1} parent=11 // pred_check
          %p505 = pneg %p358
        $region62: #{tpu_custom_call.1} parent=11 // pred_check_branch
          %507 = sbr.rel (%p505) target = $region64
        $region63: #{tpu_custom_call.1} parent=11 // pred_region
          _
        $region64: #{tpu_custom_call.1} parent=11 // pred_fallthru
          _
      $region12: #{tpu_custom_call.1} parent=5 // pred_fallthru
        _
      %p508 = scmp.lt.s32.totalorder %s33, 2
      // Predicated region
      $region65: #{tpu_custom_call.1} parent=5 // pred_check
        %p509 = pneg %p508
      $region66: #{tpu_custom_call.1} parent=5 // pred_check_branch
        %511 = sbr.rel (%p509) target = $region68
      $region67: #{tpu_custom_call.1} parent=5 // pred_region
        // Predicated region
        $region69: #{tpu_custom_call.1} parent=67 // pred_check
          %p512 = pneg %p53
        $region70: #{tpu_custom_call.1} parent=67 // pred_check_branch
          %514 = sbr.rel (%p512) target = $region72
        $region71: #{tpu_custom_call.1} parent=67 // pred_region
          %s515 = sand.u32 %s43, 1
          %s516 = scalar_lea.sflag [#allocation3], %s515
          %s517 = sand.u32 %s43, 1
          %s518 = smul.addr %s517, 128
          %s519 = scalar_lea.vmem [#allocation2], %s518
          %s521 = ssub.s32 2048, 2048
          %522 = vsyncadd %s516, %s521
          %s523 = smul.addr %s33, 16
          %s524 = smul.addr %s523, 128
          %s525 = scalar_lea.hbm %s0, %s524
          %s526 = sshll.u32 %s519, 4
          %s527 = int_to_ptr.vmem [resolvable:$true] %s526
          %532 = dma.hbm_to_vmem [thread:$0]  %s525, 2048, %s527, %s516, 128, 128, 8
        $region72: #{tpu_custom_call.1} parent=67 // pred_fallthru
          _
        // Predicated region
        $region73: #{tpu_custom_call.1} parent=67 // pred_check
          %p533 = pneg %p79
        $region74: #{tpu_custom_call.1} parent=67 // pred_check_branch
          %535 = sbr.rel (%p533) target = $region76
        $region75: #{tpu_custom_call.1} parent=67 // pred_region
          %s536 = sand.u32 %s33, 1
          %s537 = scalar_lea.sflag [#allocation6], %s536
          %s538 = sand.u32 %s69, 1
          %s539 = smul.addr %s538, 128
          %s540 = scalar_lea.vmem [#allocation5], %s539
          %s542 = ssub.s32 2048, 2048
          %543 = vsyncadd %s537, %s542
          %s544 = smul.addr %s33, 16
          %s545 = smul.addr %s544, 128
          %s546 = scalar_lea.hbm %s1, %s545
          %s547 = sshll.u32 %s540, 4
          %s548 = int_to_ptr.vmem [resolvable:$true] %s547
          %553 = dma.hbm_to_vmem [thread:$0]  %s546, 2048, %s548, %s537, 128, 128, 8
        $region76: #{tpu_custom_call.1} parent=67 // pred_fallthru
          _
      $region68: #{tpu_custom_call.1} parent=5 // pred_fallthru
        _
      %p554 = scmp.le.s32.totalorder 1, %s33
      %p555 = scmp.lt.s32.totalorder %s33, 3
      %p556 = pnand %p554, %p555
      %p557 = pneg %p556
      // Predicated region
      $region77: #{tpu_custom_call.1} parent=5 // pred_check
        _
      $region78: #{tpu_custom_call.1} parent=5 // pred_check_branch
        %559 = sbr.rel (%p556) target = $region80
      $region79: #{tpu_custom_call.1} parent=5 // pred_region
        %s560 = ssub.s32 %s33, 1
        %s561 = sand.u32 %s46, 1
        %s562 = scalar_lea.sflag [#allocation3], %s561
        %s563 = sand.u32 %s46, 1
        %s564 = smul.addr %s563, 128
        %s565 = scalar_lea.vmem [#allocation2], %s564
        // Predicated region
        $region81: #{tpu_custom_call.1} parent=79 // pred_check
          %p566 = pneg %p59
        $region82: #{tpu_custom_call.1} parent=79 // pred_check_branch
          %568 = sbr.rel (%p566) target = $region84
        $region83: #{tpu_custom_call.1} parent=79 // pred_region
          %569 = dma.done %s562, 2048
        $region84: #{tpu_custom_call.1} parent=79 // pred_fallthru
          _
        %s570 = sand.u32 %s38, 1
        %s571 = scalar_lea.sflag [#allocation6], %s570
        %s572 = sand.u32 %s72, 1
        %s573 = smul.addr %s572, 128
        %s574 = scalar_lea.vmem [#allocation5], %s573
        // Predicated region
        $region85: #{tpu_custom_call.1} parent=79 // pred_check
          %p575 = pneg %p85
        $region86: #{tpu_custom_call.1} parent=79 // pred_check_branch
          %577 = sbr.rel (%p575) target = $region88
        $region87: #{tpu_custom_call.1} parent=79 // pred_region
          %578 = dma.done %s571, 2048
        $region88: #{tpu_custom_call.1} parent=79 // pred_fallthru
          _
        // Predicated region
        $region89: #{tpu_custom_call.1} parent=79 // pred_check
          %p579 = pneg %p106
        $region90: #{tpu_custom_call.1} parent=79 // pred_check_branch
          %581 = sbr.rel (%p579) target = $region92
        $region91: #{tpu_custom_call.1} parent=79 // pred_region
          %582 = dma.done [#allocation6], 2048
        $region92: #{tpu_custom_call.1} parent=79 // pred_fallthru
          _
        // Predicated region
        $region93: #{tpu_custom_call.1} parent=79 // pred_check
          %p583 = pneg %p148
        $region94: #{tpu_custom_call.1} parent=79 // pred_check_branch
          %585 = sbr.rel (%p583) target = $region96
        $region95: #{tpu_custom_call.1} parent=79 // pred_region
          %586 = dma.done [#allocation9], 2048
        $region96: #{tpu_custom_call.1} parent=79 // pred_fallthru
          _
        // Predicated region
        $region97: #{tpu_custom_call.1} parent=79 // pred_check
          %p587 = pneg %p190
        $region98: #{tpu_custom_call.1} parent=79 // pred_check_branch
          %589 = sbr.rel (%p587) target = $region100
        $region99: #{tpu_custom_call.1} parent=79 // pred_region
          %590 = dma.done [#allocation9], 2048
        $region100: #{tpu_custom_call.1} parent=79 // pred_fallthru
          _
        // Predicated region
        $region101: #{tpu_custom_call.1} parent=79 // pred_check
          %p591 = pneg %p232
        $region102: #{tpu_custom_call.1} parent=79 // pred_check_branch
          %593 = sbr.rel (%p591) target = $region104
        $region103: #{tpu_custom_call.1} parent=79 // pred_region
          %594 = dma.done [#allocation12], 2048
        $region104: #{tpu_custom_call.1} parent=79 // pred_fallthru
          _
        // Predicated region
        $region105: #{tpu_custom_call.1} parent=79 // pred_check
          %p595 = pneg %p274
        $region106: #{tpu_custom_call.1} parent=79 // pred_check_branch
          %597 = sbr.rel (%p595) target = $region108
        $region107: #{tpu_custom_call.1} parent=79 // pred_region
          %598 = dma.done [#allocation12], 4096
        $region108: #{tpu_custom_call.1} parent=79 // pred_fallthru
          _
        // Predicated region
        $region109: #{tpu_custom_call.1} parent=79 // pred_check
          %p599 = pneg %p295
        $region110: #{tpu_custom_call.1} parent=79 // pred_check_branch
          %601 = sbr.rel (%p599) target = $region112
        $region111: #{tpu_custom_call.1} parent=79 // pred_region
          %602 = dma.done [#allocation15], 4096
        $region112: #{tpu_custom_call.1} parent=79 // pred_fallthru
          _
        // Predicated region
        $region113: #{tpu_custom_call.1} parent=79 // pred_check
          %p603 = pneg %p337
        $region114: #{tpu_custom_call.1} parent=79 // pred_check_branch
          %605 = sbr.rel (%p603) target = $region116
        $region115: #{tpu_custom_call.1} parent=79 // pred_region
          %606 = dma.done [#allocation15], 4096
        $region116: #{tpu_custom_call.1} parent=79 // pred_fallthru
          _
        %s607 = sand.u32 %s46, 1
        %s608 = scalar_lea.sflag [#allocation3], %s607
        %s609 = sand.u32 %s46, 1
        %s610 = smul.addr %s609, 128
        %s611 = scalar_lea.vmem [#allocation2], %s610
        %p612 = pneg %p59
        %p613 = pneg %p56
        %s614 = sand.u32 %s38, 1
        %s615 = scalar_lea.sflag [#allocation6], %s614
        %s616 = sand.u32 %s72, 1
        %s617 = smul.addr %s616, 128
        %s618 = scalar_lea.vmem [#allocation5], %s617
        %p619 = pneg %p85
        %p620 = pneg %p82
        %p621 = pneg %p106
        %p622 = pneg %p103
        %p623 = pneg %p127
        %p624 = pneg %p124
        %p625 = pneg %p148
        %p626 = pneg %p145
        %p627 = pneg %p169
        %p628 = pneg %p166
        %p629 = pneg %p190
        %p630 = pneg %p187
        %p631 = pneg %p211
        %p632 = pneg %p208
        %p633 = pneg %p232
        %p634 = pneg %p229
        %p635 = pneg %p253
        %p636 = pneg %p250
        %p637 = pneg %p274
        %p638 = pneg %p271
        %p639 = pneg %p295
        %p640 = pneg %p292
        %p641 = pneg %p316
        %p642 = pneg %p313
        %p643 = pneg %p337
        %p644 = pneg %p334
        %p645 = pneg %p358
        %p646 = pneg %p355
        %p647 = pneg %p384
        %p648 = pneg %p381
        %s649 = sand.u32 %s371, 1
        %s650 = scalar_lea.sflag [#allocation4], %s649
        %s651 = sand.u32 %s371, 1
        %s652 = smul.addr %s651, 128
        %s653 = scalar_lea.vmem [#allocation17], %s652
        %v654 = vld [vmem:[%s565] sm:$0xff]
        %v655 = vld [vmem:[%s565 + $0x8] sm:$0xff]
        %v656 = vld [vmem:[%s565 + $0x10] sm:$0xff]
        %v657 = vld [vmem:[%s565 + $0x18] sm:$0xff]
        %v658 = vld [vmem:[%s565 + $0x20] sm:$0xff]
        %v659 = vld [vmem:[%s565 + $0x28] sm:$0xff]
        %v660 = vld [vmem:[%s565 + $0x30] sm:$0xff]
        %v661 = vld [vmem:[%s565 + $0x38] sm:$0xff]
        %v662 = vld [vmem:[%s565 + $0x40] sm:$0xff]
        %v663 = vld [vmem:[%s565 + $0x48] sm:$0xff]
        %v664 = vld [vmem:[%s565 + $0x50] sm:$0xff]
        %v665 = vld [vmem:[%s565 + $0x58] sm:$0xff]
        %v666 = vld [vmem:[%s565 + $0x60] sm:$0xff]
        %v667 = vld [vmem:[%s565 + $0x68] sm:$0xff]
        %v668 = vld [vmem:[%s565 + $0x70] sm:$0xff]
        %v669 = vld [vmem:[%s565 + $0x78] sm:$0xff]
        %v670 = vld [vmem:[%s574] sm:$0xff]
        %v671 = vld [vmem:[%s574 + $0x8] sm:$0xff]
        %v672 = vld [vmem:[%s574 + $0x10] sm:$0xff]
        %v673 = vld [vmem:[%s574 + $0x18] sm:$0xff]
        %v674 = vld [vmem:[%s574 + $0x20] sm:$0xff]
        %v675 = vld [vmem:[%s574 + $0x28] sm:$0xff]
        %v676 = vld [vmem:[%s574 + $0x30] sm:$0xff]
        %v677 = vld [vmem:[%s574 + $0x38] sm:$0xff]
        %v678 = vld [vmem:[%s574 + $0x40] sm:$0xff]
        %v679 = vld [vmem:[%s574 + $0x48] sm:$0xff]
        %v680 = vld [vmem:[%s574 + $0x50] sm:$0xff]
        %v681 = vld [vmem:[%s574 + $0x58] sm:$0xff]
        %v682 = vld [vmem:[%s574 + $0x60] sm:$0xff]
        %v683 = vld [vmem:[%s574 + $0x68] sm:$0xff]
        %v684 = vld [vmem:[%s574 + $0x70] sm:$0xff]
        %v685 = vld [vmem:[%s574 + $0x78] sm:$0xff]
        %v686 = vld [vmem:[#allocation7] sm:$0xff]
        %v687 = vld [vmem:[#allocation7 + $0x8] sm:$0xff]
        %v688 = vld [vmem:[#allocation7 + $0x10] sm:$0xff]
        %v689 = vld [vmem:[#allocation7 + $0x18] sm:$0xff]
        %v690 = vld [vmem:[#allocation7 + $0x20] sm:$0xff]
        %v691 = vld [vmem:[#allocation7 + $0x28] sm:$0xff]
        %v692 = vld [vmem:[#allocation7 + $0x30] sm:$0xff]
        %v693 = vld [vmem:[#allocation7 + $0x38] sm:$0xff]
        %v694 = vld [vmem:[#allocation7 + $0x40] sm:$0xff]
        %v695 = vld [vmem:[#allocation7 + $0x48] sm:$0xff]
        %v696 = vld [vmem:[#allocation7 + $0x50] sm:$0xff]
        %v697 = vld [vmem:[#allocation7 + $0x58] sm:$0xff]
        %v698 = vld [vmem:[#allocation7 + $0x60] sm:$0xff]
        %v699 = vld [vmem:[#allocation7 + $0x68] sm:$0xff]
        %v700 = vld [vmem:[#allocation7 + $0x70] sm:$0xff]
        %v701 = vld [vmem:[#allocation7 + $0x78] sm:$0xff]
        %v702 = vld [vmem:[%s3] sm:$0x1]
        %v704 = vlaneseq
        %v705 = vshrl.u32 %v704, 7
        %v706 = vsub.s32 0, %v705
        %v707 = vrot.slane %v702, %v706
        %709 = vmatprep.subr.mxu0 0.0
        %710 = vmatpush1.msra.mxu0 %v686
        %711 = vmatprep.subr.mxu0 0.0
        %712 = vmatpush1.msra.mxu0 %v687
        %713 = vmatprep.subr.mxu0 0.0
        %714 = vmatpush1.msra.mxu0 %v688
        %715 = vmatprep.subr.mxu0 0.0
        %716 = vmatpush1.msra.mxu0 %v689
        %717 = vmatprep.subr.mxu0 0.0
        %718 = vmatpush1.msra.mxu0 %v690
        %719 = vmatprep.subr.mxu0 0.0
        %720 = vmatpush1.msra.mxu0 %v691
        %721 = vmatprep.subr.mxu0 0.0
        %722 = vmatpush1.msra.mxu0 %v692
        %723 = vmatprep.subr.mxu0 0.0
        %724 = vmatpush1.msra.mxu0 %v693
        %725 = vmatprep.subr.mxu0 0.0
        %726 = vmatpush1.msra.mxu0 %v694
        %727 = vmatprep.subr.mxu0 0.0
        %728 = vmatpush1.msra.mxu0 %v695
        %729 = vmatprep.subr.mxu0 0.0
        %730 = vmatpush1.msra.mxu0 %v696
        %731 = vmatprep.subr.mxu0 0.0
        %732 = vmatpush1.msra.mxu0 %v697
        %733 = vmatprep.subr.mxu0 0.0
        %734 = vmatpush1.msra.mxu0 %v698
        %735 = vmatprep.subr.mxu0 0.0
        %736 = vmatpush1.msra.mxu0 %v699
        %737 = vmatprep.subr.mxu0 0.0
        %738 = vmatpush1.msra.mxu0 %v700
        %739 = vmatprep.subr.mxu0 0.0
        %740 = vmatpush1.msra.mxu0 %v701
        %741 = vmatprep.subr.mxu0 0.0
        %742 = vmatpush1.msra.mxu0 0.0
        %743 = vmatprep.subr.mxu0 0.0
        %744 = vmatpush1.msra.mxu0 0.0
        %745 = vmatprep.subr.mxu0 0.0
        %746 = vmatpush1.msra.mxu0 0.0
        %747 = vmatprep.subr.mxu0 0.0
        %748 = vmatpush1.msra.mxu0 0.0
        %749 = vmatprep.subr.mxu0 0.0
        %750 = vmatpush1.msra.mxu0 0.0
        %751 = vmatprep.subr.mxu0 0.0
        %752 = vmatpush1.msra.mxu0 0.0
        %753 = vmatprep.subr.mxu0 0.0
        %754 = vmatpush1.msra.mxu0 0.0
        %755 = vmatprep.subr.mxu0 0.0
        %756 = vmatpush1.msra.mxu0 0.0
        %757 = vmatprep.subr.mxu0 0.0
        %758 = vmatpush1.msra.mxu0 0.0
        %759 = vmatprep.subr.mxu0 0.0
        %760 = vmatpush1.msra.mxu0 0.0
        %761 = vmatprep.subr.mxu0 0.0
        %762 = vmatpush1.msra.mxu0 0.0
        %763 = vmatprep.subr.mxu0 0.0
        %764 = vmatpush1.msra.mxu0 0.0
        %765 = vmatprep.subr.mxu0 0.0
        %766 = vmatpush1.msra.mxu0 0.0
        %767 = vmatprep.subr.mxu0 0.0
        %768 = vmatpush1.msra.mxu0 0.0
        %769 = vmatprep.subr.mxu0 0.0
        %770 = vmatpush1.msra.mxu0 0.0
        %771 = vmatprep.subr.mxu0 0.0
        %772 = vmatpush1.msra.mxu0 0.0
        %773 = vmatprep.mubr.f32.mxu0 0.0
        %774 = vmatmul.mubr.f32.gmra.mrb[0].mxu0 %v654
        %v775 = vpop.f32.mrb[0].mxu0
        %v776 = vadd.f32 %v707, %v775
        %v777 = vpop.f32.mrb[0].mxu0
        %778 = vmatprep.mubr.f32.mxu0 0.0
        %779 = vmatmul.mubr.f32.gmra.mrb[0].mxu0 %v655
        %v780 = vpop.f32.mrb[0].mxu0
        %v781 = vadd.f32 %v707, %v780
        %v782 = vpop.f32.mrb[0].mxu0
        %783 = vmatprep.mubr.f32.mxu0 0.0
        %784 = vmatmul.mubr.f32.gmra.mrb[0].mxu0 %v656
        %v785 = vpop.f32.mrb[0].mxu0
        %v786 = vadd.f32 %v707, %v785
        %v787 = vpop.f32.mrb[0].mxu0
        %788 = vmatprep.mubr.f32.mxu0 0.0
        %789 = vmatmul.mubr.f32.gmra.mrb[0].mxu0 %v657
        %v790 = vpop.f32.mrb[0].mxu0
        %v791 = vadd.f32 %v707, %v790
        %v792 = vpop.f32.mrb[0].mxu0
        %793 = vmatprep.mubr.f32.mxu0 0.0
        %794 = vmatmul.mubr.f32.gmra.mrb[0].mxu0 %v658
        %v795 = vpop.f32.mrb[0].mxu0
        %v796 = vadd.f32 %v707, %v795
        %v797 = vpop.f32.mrb[0].mxu0
        %798 = vmatprep.mubr.f32.mxu0 0.0
        %799 = vmatmul.mubr.f32.gmra.mrb[0].mxu0 %v659
        %v800 = vpop.f32.mrb[0].mxu0
        %v801 = vadd.f32 %v707, %v800
        %v802 = vpop.f32.mrb[0].mxu0
        %803 = vmatprep.mubr.f32.mxu0 0.0
        %804 = vmatmul.mubr.f32.gmra.mrb[0].mxu0 %v660
        %v805 = vpop.f32.mrb[0].mxu0
        %v806 = vadd.f32 %v707, %v805
        %v807 = vpop.f32.mrb[0].mxu0
        %808 = vmatprep.mubr.f32.mxu0 0.0
        %809 = vmatmul.mubr.f32.gmra.mrb[0].mxu0 %v661
        %v810 = vpop.f32.mrb[0].mxu0
        %v811 = vadd.f32 %v707, %v810
        %v812 = vpop.f32.mrb[0].mxu0
        %813 = vmatprep.mubr.f32.mxu0 0.0
        %814 = vmatmul.mubr.f32.gmra.mrb[0].mxu0 %v662
        %v815 = vpop.f32.mrb[0].mxu0
        %v816 = vadd.f32 %v707, %v815
        %v817 = vpop.f32.mrb[0].mxu0
        %818 = vmatprep.mubr.f32.mxu0 0.0
        %819 = vmatmul.mubr.f32.gmra.mrb[0].mxu0 %v663
        %v820 = vpop.f32.mrb[0].mxu0
        %v821 = vadd.f32 %v707, %v820
        %v822 = vpop.f32.mrb[0].mxu0
        %823 = vmatprep.mubr.f32.mxu0 0.0
        %824 = vmatmul.mubr.f32.gmra.mrb[0].mxu0 %v664
        %v825 = vpop.f32.mrb[0].mxu0
        %v826 = vadd.f32 %v707, %v825
        %v827 = vpop.f32.mrb[0].mxu0
        %828 = vmatprep.mubr.f32.mxu0 0.0
        %829 = vmatmul.mubr.f32.gmra.mrb[0].mxu0 %v665
        %v830 = vpop.f32.mrb[0].mxu0
        %v831 = vadd.f32 %v707, %v830
        %v832 = vpop.f32.mrb[0].mxu0
        %833 = vmatprep.mubr.f32.mxu0 0.0
        %834 = vmatmul.mubr.f32.gmra.mrb[0].mxu0 %v666
        %v835 = vpop.f32.mrb[0].mxu0
        %v836 = vadd.f32 %v707, %v835
        %v837 = vpop.f32.mrb[0].mxu0
        %838 = vmatprep.mubr.f32.mxu0 0.0
        %839 = vmatmul.mubr.f32.gmra.mrb[0].mxu0 %v667
        %v840 = vpop.f32.mrb[0].mxu0
        %v841 = vadd.f32 %v707, %v840
        %v842 = vpop.f32.mrb[0].mxu0
        %843 = vmatprep.mubr.f32.mxu0 0.0
        %844 = vmatmul.mubr.f32.gmra.mrb[0].mxu0 %v668
        %v845 = vpop.f32.mrb[0].mxu0
        %v846 = vadd.f32 %v707, %v845
        %v847 = vpop.f32.mrb[0].mxu0
        %848 = vmatprep.mubr.f32.mxu0 0.0
        %849 = vmatmul.mubr.f32.gmra.mrb[0].mxu0 %v669
        %v850 = vpop.f32.mrb[0].mxu0
        %v851 = vadd.f32 %v707, %v850
        %v852 = vpop.f32.mrb[0].mxu0
        %853 = vdwg.mxu0
        %v854 = vld [vmem:[#allocation8] sm:$0xff]
        %v855 = vld [vmem:[#allocation8 + $0x8] sm:$0xff]
        %v856 = vld [vmem:[#allocation8 + $0x10] sm:$0xff]
        %v857 = vld [vmem:[#allocation8 + $0x18] sm:$0xff]
        %v858 = vld [vmem:[#allocation8 + $0x20] sm:$0xff]
        %v859 = vld [vmem:[#allocation8 + $0x28] sm:$0xff]
        %v860 = vld [vmem:[#allocation8 + $0x30] sm:$0xff]
        %v861 = vld [vmem:[#allocation8 + $0x38] sm:$0xff]
        %v862 = vld [vmem:[#allocation8 + $0x40] sm:$0xff]
        %v863 = vld [vmem:[#allocation8 + $0x48] sm:$0xff]
        %v864 = vld [vmem:[#allocation8 + $0x50] sm:$0xff]
        %v865 = vld [vmem:[#allocation8 + $0x58] sm:$0xff]
        %v866 = vld [vmem:[#allocation8 + $0x60] sm:$0xff]
        %v867 = vld [vmem:[#allocation8 + $0x68] sm:$0xff]
        %v868 = vld [vmem:[#allocation8 + $0x70] sm:$0xff]
        %v869 = vld [vmem:[#allocation8 + $0x78] sm:$0xff]
        %v870 = vld [vmem:[%s5] sm:$0x1]
        %v872 = vlaneseq
        %v873 = vshrl.u32 %v872, 7
        %v874 = vsub.s32 0, %v873
        %v875 = vrot.slane %v870, %v874
        %877 = vmatprep.subr.mxu0 0.0
        %878 = vmatpush1.msra.mxu0 %v854
        %879 = vmatprep.subr.mxu0 0.0
        %880 = vmatpush1.msra.mxu0 %v855
        %881 = vmatprep.subr.mxu0 0.0
        %882 = vmatpush1.msra.mxu0 %v856
        %883 = vmatprep.subr.mxu0 0.0
        %884 = vmatpush1.msra.mxu0 %v857
        %885 = vmatprep.subr.mxu0 0.0
        %886 = vmatpush1.msra.mxu0 %v858
        %887 = vmatprep.subr.mxu0 0.0
        %888 = vmatpush1.msra.mxu0 %v859
        %889 = vmatprep.subr.mxu0 0.0
        %890 = vmatpush1.msra.mxu0 %v860
        %891 = vmatprep.subr.mxu0 0.0
        %892 = vmatpush1.msra.mxu0 %v861
        %893 = vmatprep.subr.mxu0 0.0
        %894 = vmatpush1.msra.mxu0 %v862
        %895 = vmatprep.subr.mxu0 0.0
        %896 = vmatpush1.msra.mxu0 %v863
        %897 = vmatprep.subr.mxu0 0.0
        %898 = vmatpush1.msra.mxu0 %v864
        %899 = vmatprep.subr.mxu0 0.0
        %900 = vmatpush1.msra.mxu0 %v865
        %901 = vmatprep.subr.mxu0 0.0
        %902 = vmatpush1.msra.mxu0 %v866
        %903 = vmatprep.subr.mxu0 0.0
        %904 = vmatpush1.msra.mxu0 %v867
        %905 = vmatprep.subr.mxu0 0.0
        %906 = vmatpush1.msra.mxu0 %v868
        %907 = vmatprep.subr.mxu0 0.0
        %908 = vmatpush1.msra.mxu0 %v869
        %909 = vmatprep.subr.mxu0 0.0
        %910 = vmatpush1.msra.mxu0 0.0
        %911 = vmatprep.subr.mxu0 0.0
        %912 = vmatpush1.msra.mxu0 0.0
        %913 = vmatprep.subr.mxu0 0.0
        %914 = vmatpush1.msra.mxu0 0.0
        %915 = vmatprep.subr.mxu0 0.0
        %916 = vmatpush1.msra.mxu0 0.0
        %917 = vmatprep.subr.mxu0 0.0
        %918 = vmatpush1.msra.mxu0 0.0
        %919 = vmatprep.subr.mxu0 0.0
        %920 = vmatpush1.msra.mxu0 0.0
        %921 = vmatprep.subr.mxu0 0.0
        %922 = vmatpush1.msra.mxu0 0.0
        %923 = vmatprep.subr.mxu0 0.0
        %924 = vmatpush1.msra.mxu0 0.0
        %925 = vmatprep.subr.mxu0 0.0
        %926 = vmatpush1.msra.mxu0 0.0
        %927 = vmatprep.subr.mxu0 0.0
        %928 = vmatpush1.msra.mxu0 0.0
        %929 = vmatprep.subr.mxu0 0.0
        %930 = vmatpush1.msra.mxu0 0.0
        %931 = vmatprep.subr.mxu0 0.0
        %932 = vmatpush1.msra.mxu0 0.0
        %933 = vmatprep.subr.mxu0 0.0
        %934 = vmatpush1.msra.mxu0 0.0
        %935 = vmatprep.subr.mxu0 0.0
        %936 = vmatpush1.msra.mxu0 0.0
        %937 = vmatprep.subr.mxu0 0.0
        %938 = vmatpush1.msra.mxu0 0.0
        %939 = vmatprep.subr.mxu0 0.0
        %940 = vmatpush1.msra.mxu0 0.0
        %941 = vmatprep.mubr.f32.mxu0 0.0
        %942 = vmatmul.mubr.f32.gmra.mrb[0].mxu0 %v670
        %v943 = vpop.f32.mrb[0].mxu0
        %v944 = vadd.f32 %v875, %v943
        %v945 = vpop.f32.mrb[0].mxu0
        %946 = vmatprep.mubr.f32.mxu0 0.0
        %947 = vmatmul.mubr.f32.gmra.mrb[0].mxu0 %v671
        %v948 = vpop.f32.mrb[0].mxu0
        %v949 = vadd.f32 %v875, %v948
        %v950 = vpop.f32.mrb[0].mxu0
        %951 = vmatprep.mubr.f32.mxu0 0.0
        %952 = vmatmul.mubr.f32.gmra.mrb[0].mxu0 %v672
        %v953 = vpop.f32.mrb[0].mxu0
        %v954 = vadd.f32 %v875, %v953
        %v955 = vpop.f32.mrb[0].mxu0
        %956 = vmatprep.mubr.f32.mxu0 0.0
        %957 = vmatmul.mubr.f32.gmra.mrb[0].mxu0 %v673
        %v958 = vpop.f32.mrb[0].mxu0
        %v959 = vadd.f32 %v875, %v958
        %v960 = vpop.f32.mrb[0].mxu0
        %961 = vmatprep.mubr.f32.mxu0 0.0
        %962 = vmatmul.mubr.f32.gmra.mrb[0].mxu0 %v674
        %v963 = vpop.f32.mrb[0].mxu0
        %v964 = vadd.f32 %v875, %v963
        %v965 = vpop.f32.mrb[0].mxu0
        %966 = vmatprep.mubr.f32.mxu0 0.0
        %967 = vmatmul.mubr.f32.gmra.mrb[0].mxu0 %v675
        %v968 = vpop.f32.mrb[0].mxu0
        %v969 = vadd.f32 %v875, %v968
        %v970 = vpop.f32.mrb[0].mxu0
        %971 = vmatprep.mubr.f32.mxu0 0.0
        %972 = vmatmul.mubr.f32.gmra.mrb[0].mxu0 %v676
        %v973 = vpop.f32.mrb[0].mxu0
        %v974 = vadd.f32 %v875, %v973
        %v975 = vpop.f32.mrb[0].mxu0
        %976 = vmatprep.mubr.f32.mxu0 0.0
        %977 = vmatmul.mubr.f32.gmra.mrb[0].mxu0 %v677
        %v978 = vpop.f32.mrb[0].mxu0
        %v979 = vadd.f32 %v875, %v978
        %v980 = vpop.f32.mrb[0].mxu0
        %981 = vmatprep.mubr.f32.mxu0 0.0
        %982 = vmatmul.mubr.f32.gmra.mrb[0].mxu0 %v678
        %v983 = vpop.f32.mrb[0].mxu0
        %v984 = vadd.f32 %v875, %v983
        %v985 = vpop.f32.mrb[0].mxu0
        %986 = vmatprep.mubr.f32.mxu0 0.0
        %987 = vmatmul.mubr.f32.gmra.mrb[0].mxu0 %v679
        %v988 = vpop.f32.mrb[0].mxu0
        %v989 = vadd.f32 %v875, %v988
        %v990 = vpop.f32.mrb[0].mxu0
        %991 = vmatprep.mubr.f32.mxu0 0.0
        %992 = vmatmul.mubr.f32.gmra.mrb[0].mxu0 %v680
        %v993 = vpop.f32.mrb[0].mxu0
        %v994 = vadd.f32 %v875, %v993
        %v995 = vpop.f32.mrb[0].mxu0
        %996 = vmatprep.mubr.f32.mxu0 0.0
        %997 = vmatmul.mubr.f32.gmra.mrb[0].mxu0 %v681
        %v998 = vpop.f32.mrb[0].mxu0
        %v999 = vadd.f32 %v875, %v998
        %v1000 = vpop.f32.mrb[0].mxu0
        %1001 = vmatprep.mubr.f32.mxu0 0.0
        %1002 = vmatmul.mubr.f32.gmra.mrb[0].mxu0 %v682
        %v1003 = vpop.f32.mrb[0].mxu0
        %v1004 = vadd.f32 %v875, %v1003
        %v1005 = vpop.f32.mrb[0].mxu0
        %1006 = vmatprep.mubr.f32.mxu0 0.0
        %1007 = vmatmul.mubr.f32.gmra.mrb[0].mxu0 %v683
        %v1008 = vpop.f32.mrb[0].mxu0
        %v1009 = vadd.f32 %v875, %v1008
        %v1010 = vpop.f32.mrb[0].mxu0
        %1011 = vmatprep.mubr.f32.mxu0 0.0
        %1012 = vmatmul.mubr.f32.gmra.mrb[0].mxu0 %v684
        %v1013 = vpop.f32.mrb[0].mxu0
        %v1014 = vadd.f32 %v875, %v1013
        %v1015 = vpop.f32.mrb[0].mxu0
        %1016 = vmatprep.mubr.f32.mxu0 0.0
        %1017 = vmatmul.mubr.f32.gmra.mrb[0].mxu0 %v685
        %v1018 = vpop.f32.mrb[0].mxu0
        %v1019 = vadd.f32 %v875, %v1018
        %v1020 = vpop.f32.mrb[0].mxu0
        %1021 = vdwg.mxu0
        %v1022 = vld [vmem:[#allocation10] sm:$0xff]
        %v1023 = vld [vmem:[#allocation10 + $0x8] sm:$0xff]
        %v1024 = vld [vmem:[#allocation10 + $0x10] sm:$0xff]
        %v1025 = vld [vmem:[#allocation10 + $0x18] sm:$0xff]
        %v1026 = vld [vmem:[#allocation10 + $0x20] sm:$0xff]
        %v1027 = vld [vmem:[#allocation10 + $0x28] sm:$0xff]
        %v1028 = vld [vmem:[#allocation10 + $0x30] sm:$0xff]
        %v1029 = vld [vmem:[#allocation10 + $0x38] sm:$0xff]
        %v1030 = vld [vmem:[#allocation10 + $0x40] sm:$0xff]
        %v1031 = vld [vmem:[#allocation10 + $0x48] sm:$0xff]
        %v1032 = vld [vmem:[#allocation10 + $0x50] sm:$0xff]
        %v1033 = vld [vmem:[#allocation10 + $0x58] sm:$0xff]
        %v1034 = vld [vmem:[#allocation10 + $0x60] sm:$0xff]
        %v1035 = vld [vmem:[#allocation10 + $0x68] sm:$0xff]
        %v1036 = vld [vmem:[#allocation10 + $0x70] sm:$0xff]
        %v1037 = vld [vmem:[#allocation10 + $0x78] sm:$0xff]
        %v1038 = vld [vmem:[%s7] sm:$0x1]
        %v1040 = vlaneseq
        %v1041 = vshrl.u32 %v1040, 7
        %v1042 = vsub.s32 0, %v1041
        %v1043 = vrot.slane %v1038, %v1042
        %1045 = vmatprep.subr.mxu0 0.0
        %1046 = vmatpush1.msra.mxu0 %v1022
        %1047 = vmatprep.subr.mxu0 0.0
        %1048 = vmatpush1.msra.mxu0 %v1023
        %1049 = vmatprep.subr.mxu0 0.0
        %1050 = vmatpush1.msra.mxu0 %v1024
        %1051 = vmatprep.subr.mxu0 0.0
        %1052 = vmatpush1.msra.mxu0 %v1025
        %1053 = vmatprep.subr.mxu0 0.0
        %1054 = vmatpush1.msra.mxu0 %v1026
        %1055 = vmatprep.subr.mxu0 0.0
        %1056 = vmatpush1.msra.mxu0 %v1027
        %1057 = vmatprep.subr.mxu0 0.0
        %1058 = vmatpush1.msra.mxu0 %v1028
        %1059 = vmatprep.subr.mxu0 0.0
        %1060 = vmatpush1.msra.mxu0 %v1029
        %1061 = vmatprep.subr.mxu0 0.0
        %1062 = vmatpush1.msra.mxu0 %v1030
        %1063 = vmatprep.subr.mxu0 0.0
        %1064 = vmatpush1.msra.mxu0 %v1031
        %1065 = vmatprep.subr.mxu0 0.0
        %1066 = vmatpush1.msra.mxu0 %v1032
        %1067 = vmatprep.subr.mxu0 0.0
        %1068 = vmatpush1.msra.mxu0 %v1033
        %1069 = vmatprep.subr.mxu0 0.0
        %1070 = vmatpush1.msra.mxu0 %v1034
        %1071 = vmatprep.subr.mxu0 0.0
        %1072 = vmatpush1.msra.mxu0 %v1035
        %1073 = vmatprep.subr.mxu0 0.0
        %1074 = vmatpush1.msra.mxu0 %v1036
        %1075 = vmatprep.subr.mxu0 0.0
        %1076 = vmatpush1.msra.mxu0 %v1037
        %1077 = vmatprep.subr.mxu0 0.0
        %1078 = vmatpush1.msra.mxu0 0.0
        %1079 = vmatprep.subr.mxu0 0.0
        %1080 = vmatpush1.msra.mxu0 0.0
        %1081 = vmatprep.subr.mxu0 0.0
        %1082 = vmatpush1.msra.mxu0 0.0
        %1083 = vmatprep.subr.mxu0 0.0
        %1084 = vmatpush1.msra.mxu0 0.0
        %1085 = vmatprep.subr.mxu0 0.0
        %1086 = vmatpush1.msra.mxu0 0.0
        %1087 = vmatprep.subr.mxu0 0.0
        %1088 = vmatpush1.msra.mxu0 0.0
        %1089 = vmatprep.subr.mxu0 0.0
        %1090 = vmatpush1.msra.mxu0 0.0
        %1091 = vmatprep.subr.mxu0 0.0
        %1092 = vmatpush1.msra.mxu0 0.0
        %1093 = vmatprep.subr.mxu0 0.0
        %1094 = vmatpush1.msra.mxu0 0.0
        %1095 = vmatprep.subr.mxu0 0.0
        %1096 = vmatpush1.msra.mxu0 0.0
        %1097 = vmatprep.subr.mxu0 0.0
        %1098 = vmatpush1.msra.mxu0 0.0
        %1099 = vmatprep.subr.mxu0 0.0
        %1100 = vmatpush1.msra.mxu0 0.0
        %1101 = vmatprep.subr.mxu0 0.0
        %1102 = vmatpush1.msra.mxu0 0.0
        %1103 = vmatprep.subr.mxu0 0.0
        %1104 = vmatpush1.msra.mxu0 0.0
        %1105 = vmatprep.subr.mxu0 0.0
        %1106 = vmatpush1.msra.mxu0 0.0
        %1107 = vmatprep.subr.mxu0 0.0
        %1108 = vmatpush1.msra.mxu0 0.0
        %1109 = vmatprep.mubr.f32.mxu0 0.0
        %1110 = vmatmul.mubr.f32.gmra.mrb[0].mxu0 %v670
        %v1111 = vpop.f32.mrb[0].mxu0
        %v1112 = vadd.f32 %v1043, %v1111
        %v1113 = vpop.f32.mrb[0].mxu0
        %1114 = vmatprep.mubr.f32.mxu0 0.0
        %1115 = vmatmul.mubr.f32.gmra.mrb[0].mxu0 %v671
        %v1116 = vpop.f32.mrb[0].mxu0
        %v1117 = vadd.f32 %v1043, %v1116
        %v1118 = vpop.f32.mrb[0].mxu0
        %1119 = vmatprep.mubr.f32.mxu0 0.0
        %1120 = vmatmul.mubr.f32.gmra.mrb[0].mxu0 %v672
        %v1121 = vpop.f32.mrb[0].mxu0
        %v1122 = vadd.f32 %v1043, %v1121
        %v1123 = vpop.f32.mrb[0].mxu0
        %1124 = vmatprep.mubr.f32.mxu0 0.0
        %1125 = vmatmul.mubr.f32.gmra.mrb[0].mxu0 %v673
        %v1126 = vpop.f32.mrb[0].mxu0
        %v1127 = vadd.f32 %v1043, %v1126
        %v1128 = vpop.f32.mrb[0].mxu0
        %1129 = vmatprep.mubr.f32.mxu0 0.0
        %1130 = vmatmul.mubr.f32.gmra.mrb[0].mxu0 %v674
        %v1131 = vpop.f32.mrb[0].mxu0
        %v1132 = vadd.f32 %v1043, %v1131
        %v1133 = vpop.f32.mrb[0].mxu0
        %1134 = vmatprep.mubr.f32.mxu0 0.0
        %1135 = vmatmul.mubr.f32.gmra.mrb[0].mxu0 %v675
        %v1136 = vpop.f32.mrb[0].mxu0
        %v1137 = vadd.f32 %v1043, %v1136
        %v1138 = vpop.f32.mrb[0].mxu0
        %1139 = vmatprep.mubr.f32.mxu0 0.0
        %1140 = vmatmul.mubr.f32.gmra.mrb[0].mxu0 %v676
        %v1141 = vpop.f32.mrb[0].mxu0
        %v1142 = vadd.f32 %v1043, %v1141
        %v1143 = vpop.f32.mrb[0].mxu0
        %1144 = vmatprep.mubr.f32.mxu0 0.0
        %1145 = vmatmul.mubr.f32.gmra.mrb[0].mxu0 %v677
        %v1146 = vpop.f32.mrb[0].mxu0
        %v1147 = vadd.f32 %v1043, %v1146
        %v1148 = vpop.f32.mrb[0].mxu0
        %1149 = vmatprep.mubr.f32.mxu0 0.0
        %1150 = vmatmul.mubr.f32.gmra.mrb[0].mxu0 %v678
        %v1151 = vpop.f32.mrb[0].mxu0
        %v1152 = vadd.f32 %v1043, %v1151
        %v1153 = vpop.f32.mrb[0].mxu0
        %1154 = vmatprep.mubr.f32.mxu0 0.0
        %1155 = vmatmul.mubr.f32.gmra.mrb[0].mxu0 %v679
        %v1156 = vpop.f32.mrb[0].mxu0
        %v1157 = vadd.f32 %v1043, %v1156
        %v1158 = vpop.f32.mrb[0].mxu0
        %1159 = vmatprep.mubr.f32.mxu0 0.0
        %1160 = vmatmul.mubr.f32.gmra.mrb[0].mxu0 %v680
        %v1161 = vpop.f32.mrb[0].mxu0
        %v1162 = vadd.f32 %v1043, %v1161
        %v1163 = vpop.f32.mrb[0].mxu0
        %1164 = vmatprep.mubr.f32.mxu0 0.0
        %1165 = vmatmul.mubr.f32.gmra.mrb[0].mxu0 %v681
        %v1166 = vpop.f32.mrb[0].mxu0
        %v1167 = vadd.f32 %v1043, %v1166
        %v1168 = vpop.f32.mrb[0].mxu0
        %1169 = vmatprep.mubr.f32.mxu0 0.0
        %1170 = vmatmul.mubr.f32.gmra.mrb[0].mxu0 %v682
        %v1171 = vpop.f32.mrb[0].mxu0
        %v1172 = vadd.f32 %v1043, %v1171
        %v1173 = vpop.f32.mrb[0].mxu0
        %1174 = vmatprep.mubr.f32.mxu0 0.0
        %1175 = vmatmul.mubr.f32.gmra.mrb[0].mxu0 %v683
        %v1176 = vpop.f32.mrb[0].mxu0
        %v1177 = vadd.f32 %v1043, %v1176
        %v1178 = vpop.f32.mrb[0].mxu0
        %1179 = vmatprep.mubr.f32.mxu0 0.0
        %1180 = vmatmul.mubr.f32.gmra.mrb[0].mxu0 %v684
        %v1181 = vpop.f32.mrb[0].mxu0
        %v1182 = vadd.f32 %v1043, %v1181
        %v1183 = vpop.f32.mrb[0].mxu0
        %1184 = vmatprep.mubr.f32.mxu0 0.0
        %1185 = vmatmul.mubr.f32.gmra.mrb[0].mxu0 %v685
        %v1186 = vpop.f32.mrb[0].mxu0
        %v1187 = vadd.f32 %v1043, %v1186
        %v1188 = vpop.f32.mrb[0].mxu0
        %1189 = vdwg.mxu0
        %vm1190 = vcmask 261120
        %v1192 = vsel %vm1190, %v776, 0
        %v1195 = vsel %vm1190, %v781, 0
        %v1198 = vsel %vm1190, %v786, 0
        %v1201 = vsel %vm1190, %v791, 0
        %v1204 = vsel %vm1190, %v796, 0
        %v1207 = vsel %vm1190, %v801, 0
        %v1210 = vsel %vm1190, %v806, 0
        %v1213 = vsel %vm1190, %v811, 0
        %v1216 = vsel %vm1190, %v816, 0
        %v1219 = vsel %vm1190, %v821, 0
        %v1222 = vsel %vm1190, %v826, 0
        %v1225 = vsel %vm1190, %v831, 0
        %v1228 = vsel %vm1190, %v836, 0
        %v1231 = vsel %vm1190, %v841, 0
        %v1234 = vsel %vm1190, %v846, 0
        %v1237 = vsel %vm1190, %v851, 0
        %v1240 = vsel %vm1190, %v944, 0
        %v1243 = vsel %vm1190, %v949, 0
        %v1246 = vsel %vm1190, %v954, 0
        %v1249 = vsel %vm1190, %v959, 0
        %v1252 = vsel %vm1190, %v964, 0
        %v1255 = vsel %vm1190, %v969, 0
        %v1258 = vsel %vm1190, %v974, 0
        %v1261 = vsel %vm1190, %v979, 0
        %v1264 = vsel %vm1190, %v984, 0
        %v1267 = vsel %vm1190, %v989, 0
        %v1270 = vsel %vm1190, %v994, 0
        %v1273 = vsel %vm1190, %v999, 0
        %v1276 = vsel %vm1190, %v1004, 0
        %v1279 = vsel %vm1190, %v1009, 0
        %v1282 = vsel %vm1190, %v1014, 0
        %v1285 = vsel %vm1190, %v1019, 0
        %1287 = vmatprep.subr.mxu0 0.0
        %1288 = vmatpush1.xpose.msra.mxu0 %v1240
        %1289 = vmatprep.subr.mxu0 0.0
        %1290 = vmatpush1.xpose.msra.mxu0 %v1243
        %1291 = vmatprep.subr.mxu0 0.0
        %1292 = vmatpush1.xpose.msra.mxu0 %v1246
        %1293 = vmatprep.subr.mxu0 0.0
        %1294 = vmatpush1.xpose.msra.mxu0 %v1249
        %1295 = vmatprep.subr.mxu0 0.0
        %1296 = vmatpush1.xpose.msra.mxu0 %v1252
        %1297 = vmatprep.subr.mxu0 0.0
        %1298 = vmatpush1.xpose.msra.mxu0 %v1255
        %1299 = vmatprep.subr.mxu0 0.0
        %1300 = vmatpush1.xpose.msra.mxu0 %v1258
        %1301 = vmatprep.subr.mxu0 0.0
        %1302 = vmatpush1.xpose.msra.mxu0 %v1261
        %1303 = vmatprep.subr.mxu0 0.0
        %1304 = vmatpush1.xpose.msra.mxu0 %v1264
        %1305 = vmatprep.subr.mxu0 0.0
        %1306 = vmatpush1.xpose.msra.mxu0 %v1267
        %1307 = vmatprep.subr.mxu0 0.0
        %1308 = vmatpush1.xpose.msra.mxu0 %v1270
        %1309 = vmatprep.subr.mxu0 0.0
        %1310 = vmatpush1.xpose.msra.mxu0 %v1273
        %1311 = vmatprep.subr.mxu0 0.0
        %1312 = vmatpush1.xpose.msra.mxu0 %v1276
        %1313 = vmatprep.subr.mxu0 0.0
        %1314 = vmatpush1.xpose.msra.mxu0 %v1279
        %1315 = vmatprep.subr.mxu0 0.0
        %1316 = vmatpush1.xpose.msra.mxu0 %v1282
        %1317 = vmatprep.subr.mxu0 0.0
        %1318 = vmatpush1.xpose.msra.mxu0 %v1285
        %1319 = vmatprep.subr.mxu0 0.0
        %1320 = vmatpush1.xpose.msra.mxu0 0.0
        %1321 = vmatprep.subr.mxu0 0.0
        %1322 = vmatpush1.xpose.msra.mxu0 0.0
        %1323 = vmatprep.subr.mxu0 0.0
        %1324 = vmatpush1.xpose.msra.mxu0 0.0
        %1325 = vmatprep.subr.mxu0 0.0
        %1326 = vmatpush1.xpose.msra.mxu0 0.0
        %1327 = vmatprep.subr.mxu0 0.0
        %1328 = vmatpush1.xpose.msra.mxu0 0.0
        %1329 = vmatprep.subr.mxu0 0.0
        %1330 = vmatpush1.xpose.msra.mxu0 0.0
        %1331 = vmatprep.subr.mxu0 0.0
        %1332 = vmatpush1.xpose.msra.mxu0 0.0
        %1333 = vmatprep.subr.mxu0 0.0
        %1334 = vmatpush1.xpose.msra.mxu0 0.0
        %1335 = vmatprep.subr.mxu0 0.0
        %1336 = vmatpush1.xpose.msra.mxu0 0.0
        %1337 = vmatprep.subr.mxu0 0.0
        %1338 = vmatpush1.xpose.msra.mxu0 0.0
        %1339 = vmatprep.subr.mxu0 0.0
        %1340 = vmatpush1.xpose.msra.mxu0 0.0
        %1341 = vmatprep.subr.mxu0 0.0
        %1342 = vmatpush1.xpose.msra.mxu0 0.0
        %1343 = vmatprep.subr.mxu0 0.0
        %1344 = vmatpush1.xpose.msra.mxu0 0.0
        %1345 = vmatprep.subr.mxu0 0.0
        %1346 = vmatpush1.xpose.msra.mxu0 0.0
        %1347 = vmatprep.subr.mxu0 0.0
        %1348 = vmatpush1.xpose.msra.mxu0 0.0
        %1349 = vmatprep.subr.mxu0 0.0
        %1350 = vmatpush1.xpose.msra.mxu0 0.0
        %1351 = vmatprep.mubr.f32.mxu0 0.0
        %1352 = vmatmul.mubr.f32.gmra.mrb[0].mxu0 %v1192
        %v1353 = vpop.f32.mrb[0].mxu0
        %v1354 = vadd.f32 0.0, %v1353
        %v1355 = vpop.f32.mrb[0].mxu0
        %1356 = vmatprep.mubr.f32.mxu0 0.0
        %1357 = vmatmul.mubr.f32.gmra.mrb[0].mxu0 %v1195
        %v1358 = vpop.f32.mrb[0].mxu0
        %v1359 = vadd.f32 0.0, %v1358
        %v1360 = vpop.f32.mrb[0].mxu0
        %1361 = vmatprep.mubr.f32.mxu0 0.0
        %1362 = vmatmul.mubr.f32.gmra.mrb[0].mxu0 %v1198
        %v1363 = vpop.f32.mrb[0].mxu0
        %v1364 = vadd.f32 0.0, %v1363
        %v1365 = vpop.f32.mrb[0].mxu0
        %1366 = vmatprep.mubr.f32.mxu0 0.0
        %1367 = vmatmul.mubr.f32.gmra.mrb[0].mxu0 %v1201
        %v1368 = vpop.f32.mrb[0].mxu0
        %v1369 = vadd.f32 0.0, %v1368
        %v1370 = vpop.f32.mrb[0].mxu0
        %1371 = vmatprep.mubr.f32.mxu0 0.0
        %1372 = vmatmul.mubr.f32.gmra.mrb[0].mxu0 %v1204
        %v1373 = vpop.f32.mrb[0].mxu0
        %v1374 = vadd.f32 0.0, %v1373
        %v1375 = vpop.f32.mrb[0].mxu0
        %1376 = vmatprep.mubr.f32.mxu0 0.0
        %1377 = vmatmul.mubr.f32.gmra.mrb[0].mxu0 %v1207
        %v1378 = vpop.f32.mrb[0].mxu0
        %v1379 = vadd.f32 0.0, %v1378
        %v1380 = vpop.f32.mrb[0].mxu0
        %1381 = vmatprep.mubr.f32.mxu0 0.0
        %1382 = vmatmul.mubr.f32.gmra.mrb[0].mxu0 %v1210
        %v1383 = vpop.f32.mrb[0].mxu0
        %v1384 = vadd.f32 0.0, %v1383
        %v1385 = vpop.f32.mrb[0].mxu0
        %1386 = vmatprep.mubr.f32.mxu0 0.0
        %1387 = vmatmul.mubr.f32.gmra.mrb[0].mxu0 %v1213
        %v1388 = vpop.f32.mrb[0].mxu0
        %v1389 = vadd.f32 0.0, %v1388
        %v1390 = vpop.f32.mrb[0].mxu0
        %1391 = vmatprep.mubr.f32.mxu0 0.0
        %1392 = vmatmul.mubr.f32.gmra.mrb[0].mxu0 %v1216
        %v1393 = vpop.f32.mrb[0].mxu0
        %v1394 = vadd.f32 0.0, %v1393
        %v1395 = vpop.f32.mrb[0].mxu0
        %1396 = vmatprep.mubr.f32.mxu0 0.0
        %1397 = vmatmul.mubr.f32.gmra.mrb[0].mxu0 %v1219
        %v1398 = vpop.f32.mrb[0].mxu0
        %v1399 = vadd.f32 0.0, %v1398
        %v1400 = vpop.f32.mrb[0].mxu0
        %1401 = vmatprep.mubr.f32.mxu0 0.0
        %1402 = vmatmul.mubr.f32.gmra.mrb[0].mxu0 %v1222
        %v1403 = vpop.f32.mrb[0].mxu0
        %v1404 = vadd.f32 0.0, %v1403
        %v1405 = vpop.f32.mrb[0].mxu0
        %1406 = vmatprep.mubr.f32.mxu0 0.0
        %1407 = vmatmul.mubr.f32.gmra.mrb[0].mxu0 %v1225
        %v1408 = vpop.f32.mrb[0].mxu0
        %v1409 = vadd.f32 0.0, %v1408
        %v1410 = vpop.f32.mrb[0].mxu0
        %1411 = vmatprep.mubr.f32.mxu0 0.0
        %1412 = vmatmul.mubr.f32.gmra.mrb[0].mxu0 %v1228
        %v1413 = vpop.f32.mrb[0].mxu0
        %v1414 = vadd.f32 0.0, %v1413
        %v1415 = vpop.f32.mrb[0].mxu0
        %1416 = vmatprep.mubr.f32.mxu0 0.0
        %1417 = vmatmul.mubr.f32.gmra.mrb[0].mxu0 %v1231
        %v1418 = vpop.f32.mrb[0].mxu0
        %v1419 = vadd.f32 0.0, %v1418
        %v1420 = vpop.f32.mrb[0].mxu0
        %1421 = vmatprep.mubr.f32.mxu0 0.0
        %1422 = vmatmul.mubr.f32.gmra.mrb[0].mxu0 %v1234
        %v1423 = vpop.f32.mrb[0].mxu0
        %v1424 = vadd.f32 0.0, %v1423
        %v1425 = vpop.f32.mrb[0].mxu0
        %1426 = vmatprep.mubr.f32.mxu0 0.0
        %1427 = vmatmul.mubr.f32.gmra.mrb[0].mxu0 %v1237
        %v1428 = vpop.f32.mrb[0].mxu0
        %v1429 = vadd.f32 0.0, %v1428
        %v1430 = vpop.f32.mrb[0].mxu0
        %1431 = vdwg.mxu0
        %1432 = vmax.xlane.f32.xlu0 %v1354
        %v1433 = vpop.xlane.xlu0 %1432
        %1434 = vmax.xlane.f32.xlu0 %v1359
        %v1435 = vpop.xlane.xlu0 %1434
        %1436 = vmax.xlane.f32.xlu0 %v1364
        %v1437 = vpop.xlane.xlu0 %1436
        %1438 = vmax.xlane.f32.xlu0 %v1369
        %v1439 = vpop.xlane.xlu0 %1438
        %1440 = vmax.xlane.f32.xlu0 %v1374
        %v1441 = vpop.xlane.xlu0 %1440
        %1442 = vmax.xlane.f32.xlu0 %v1379
        %v1443 = vpop.xlane.xlu0 %1442
        %1444 = vmax.xlane.f32.xlu0 %v1384
        %v1445 = vpop.xlane.xlu0 %1444
        %1446 = vmax.xlane.f32.xlu0 %v1389
        %v1447 = vpop.xlane.xlu0 %1446
        %1448 = vmax.xlane.f32.xlu0 %v1394
        %v1449 = vpop.xlane.xlu0 %1448
        %1450 = vmax.xlane.f32.xlu0 %v1399
        %v1451 = vpop.xlane.xlu0 %1450
        %1452 = vmax.xlane.f32.xlu0 %v1404
        %v1453 = vpop.xlane.xlu0 %1452
        %1454 = vmax.xlane.f32.xlu0 %v1409
        %v1455 = vpop.xlane.xlu0 %1454
        %1456 = vmax.xlane.f32.xlu0 %v1414
        %v1457 = vpop.xlane.xlu0 %1456
        %1458 = vmax.xlane.f32.xlu0 %v1419
        %v1459 = vpop.xlane.xlu0 %1458
        %1460 = vmax.xlane.f32.xlu0 %v1424
        %v1461 = vpop.xlane.xlu0 %1460
        %1462 = vmax.xlane.f32.xlu0 %v1429
        %v1463 = vpop.xlane.xlu0 %1462
        %v1464 = vsub.f32 %v1354, %v1433
        %v1465 = vsub.f32 %v1359, %v1435
        %v1466 = vsub.f32 %v1364, %v1437
        %v1467 = vsub.f32 %v1369, %v1439
        %v1468 = vsub.f32 %v1374, %v1441
        %v1469 = vsub.f32 %v1379, %v1443
        %v1470 = vsub.f32 %v1384, %v1445
        %v1471 = vsub.f32 %v1389, %v1447
        %v1472 = vsub.f32 %v1394, %v1449
        %v1473 = vsub.f32 %v1399, %v1451
        %v1474 = vsub.f32 %v1404, %v1453
        %v1475 = vsub.f32 %v1409, %v1455
        %v1476 = vsub.f32 %v1414, %v1457
        %v1477 = vsub.f32 %v1419, %v1459
        %v1478 = vsub.f32 %v1424, %v1461
        %v1479 = vsub.f32 %v1429, %v1463
        %v1480 = vmul.f32 %v1464, 1.442695
        %v1481 = vpow.pop %v1480
        %v1482 = vmul.f32 %v1465, 1.442695
        %v1483 = vpow.pop %v1482
        %v1484 = vmul.f32 %v1466, 1.442695
        %v1485 = vpow.pop %v1484
        %v1486 = vmul.f32 %v1467, 1.442695
        %v1487 = vpow.pop %v1486
        %v1488 = vmul.f32 %v1468, 1.442695
        %v1489 = vpow.pop %v1488
        %v1490 = vmul.f32 %v1469, 1.442695
        %v1491 = vpow.pop %v1490
        %v1492 = vmul.f32 %v1470, 1.442695
        %v1493 = vpow.pop %v1492
        %v1494 = vmul.f32 %v1471, 1.442695
        %v1495 = vpow.pop %v1494
        %v1496 = vmul.f32 %v1472, 1.442695
        %v1497 = vpow.pop %v1496
        %v1498 = vmul.f32 %v1473, 1.442695
        %v1499 = vpow.pop %v1498
        %v1500 = vmul.f32 %v1474, 1.442695
        %v1501 = vpow.pop %v1500
        %v1502 = vmul.f32 %v1475, 1.442695
        %v1503 = vpow.pop %v1502
        %v1504 = vmul.f32 %v1476, 1.442695
        %v1505 = vpow.pop %v1504
        %v1506 = vmul.f32 %v1477, 1.442695
        %v1507 = vpow.pop %v1506
        %v1508 = vmul.f32 %v1478, 1.442695
        %v1509 = vpow.pop %v1508
        %v1510 = vmul.f32 %v1479, 1.442695
        %v1511 = vpow.pop %v1510
        %1512 = vadd.xlane.f32.xlu0 %v1481
        %v1513 = vpop.xlane.xlu0 %1512
        %1514 = vadd.xlane.f32.xlu0 %v1483
        %v1515 = vpop.xlane.xlu0 %1514
        %1516 = vadd.xlane.f32.xlu0 %v1485
        %v1517 = vpop.xlane.xlu0 %1516
        %1518 = vadd.xlane.f32.xlu0 %v1487
        %v1519 = vpop.xlane.xlu0 %1518
        %1520 = vadd.xlane.f32.xlu0 %v1489
        %v1521 = vpop.xlane.xlu0 %1520
        %1522 = vadd.xlane.f32.xlu0 %v1491
        %v1523 = vpop.xlane.xlu0 %1522
        %1524 = vadd.xlane.f32.xlu0 %v1493
        %v1525 = vpop.xlane.xlu0 %1524
        %1526 = vadd.xlane.f32.xlu0 %v1495
        %v1527 = vpop.xlane.xlu0 %1526
        %1528 = vadd.xlane.f32.xlu0 %v1497
        %v1529 = vpop.xlane.xlu0 %1528
        %1530 = vadd.xlane.f32.xlu0 %v1499
        %v1531 = vpop.xlane.xlu0 %1530
        %1532 = vadd.xlane.f32.xlu0 %v1501
        %v1533 = vpop.xlane.xlu0 %1532
        %1534 = vadd.xlane.f32.xlu0 %v1503
        %v1535 = vpop.xlane.xlu0 %1534
        %1536 = vadd.xlane.f32.xlu0 %v1505
        %v1537 = vpop.xlane.xlu0 %1536
        %1538 = vadd.xlane.f32.xlu0 %v1507
        %v1539 = vpop.xlane.xlu0 %1538
        %1540 = vadd.xlane.f32.xlu0 %v1509
        %v1541 = vpop.xlane.xlu0 %1540
        %1542 = vadd.xlane.f32.xlu0 %v1511
        %v1543 = vpop.xlane.xlu0 %1542
        %v1544 = vrcp.pop %v1513
        %v1545 = vmul.f32 %v1481, %v1544
        %v1546 = vrcp.pop %v1515
        %v1547 = vmul.f32 %v1483, %v1546
        %v1548 = vrcp.pop %v1517
        %v1549 = vmul.f32 %v1485, %v1548
        %v1550 = vrcp.pop %v1519
        %v1551 = vmul.f32 %v1487, %v1550
        %v1552 = vrcp.pop %v1521
        %v1553 = vmul.f32 %v1489, %v1552
        %v1554 = vrcp.pop %v1523
        %v1555 = vmul.f32 %v1491, %v1554
        %v1556 = vrcp.pop %v1525
        %v1557 = vmul.f32 %v1493, %v1556
        %v1558 = vrcp.pop %v1527
        %v1559 = vmul.f32 %v1495, %v1558
        %v1560 = vrcp.pop %v1529
        %v1561 = vmul.f32 %v1497, %v1560
        %v1562 = vrcp.pop %v1531
        %v1563 = vmul.f32 %v1499, %v1562
        %v1564 = vrcp.pop %v1533
        %v1565 = vmul.f32 %v1501, %v1564
        %v1566 = vrcp.pop %v1535
        %v1567 = vmul.f32 %v1503, %v1566
        %v1568 = vrcp.pop %v1537
        %v1569 = vmul.f32 %v1505, %v1568
        %v1570 = vrcp.pop %v1539
        %v1571 = vmul.f32 %v1507, %v1570
        %v1572 = vrcp.pop %v1541
        %v1573 = vmul.f32 %v1509, %v1572
        %v1574 = vrcp.pop %v1543
        %v1575 = vmul.f32 %v1511, %v1574
        %1576 = vmatprep.subr.mxu0 0.0
        %1577 = vmatpush1.msra.mxu0 %v1112
        %1578 = vmatprep.subr.mxu0 0.0
        %1579 = vmatpush1.msra.mxu0 %v1117
        %1580 = vmatprep.subr.mxu0 0.0
        %1581 = vmatpush1.msra.mxu0 %v1122
        %1582 = vmatprep.subr.mxu0 0.0
        %1583 = vmatpush1.msra.mxu0 %v1127
        %1584 = vmatprep.subr.mxu0 0.0
        %1585 = vmatpush1.msra.mxu0 %v1132
        %1586 = vmatprep.subr.mxu0 0.0
        %1587 = vmatpush1.msra.mxu0 %v1137
        %1588 = vmatprep.subr.mxu0 0.0
        %1589 = vmatpush1.msra.mxu0 %v1142
        %1590 = vmatprep.subr.mxu0 0.0
        %1591 = vmatpush1.msra.mxu0 %v1147
        %1592 = vmatprep.subr.mxu0 0.0
        %1593 = vmatpush1.msra.mxu0 %v1152
        %1594 = vmatprep.subr.mxu0 0.0
        %1595 = vmatpush1.msra.mxu0 %v1157
        %1596 = vmatprep.subr.mxu0 0.0
        %1597 = vmatpush1.msra.mxu0 %v1162
        %1598 = vmatprep.subr.mxu0 0.0
        %1599 = vmatpush1.msra.mxu0 %v1167
        %1600 = vmatprep.subr.mxu0 0.0
        %1601 = vmatpush1.msra.mxu0 %v1172
        %1602 = vmatprep.subr.mxu0 0.0
        %1603 = vmatpush1.msra.mxu0 %v1177
        %1604 = vmatprep.subr.mxu0 0.0
        %1605 = vmatpush1.msra.mxu0 %v1182
        %1606 = vmatprep.subr.mxu0 0.0
        %1607 = vmatpush1.msra.mxu0 %v1187
        %1608 = vmatprep.subr.mxu0 0.0
        %1609 = vmatpush1.msra.mxu0 0.0
        %1610 = vmatprep.subr.mxu0 0.0
        %1611 = vmatpush1.msra.mxu0 0.0
        %1612 = vmatprep.subr.mxu0 0.0
        %1613 = vmatpush1.msra.mxu0 0.0
        %1614 = vmatprep.subr.mxu0 0.0
        %1615 = vmatpush1.msra.mxu0 0.0
        %1616 = vmatprep.subr.mxu0 0.0
        %1617 = vmatpush1.msra.mxu0 0.0
        %1618 = vmatprep.subr.mxu0 0.0
        %1619 = vmatpush1.msra.mxu0 0.0
        %1620 = vmatprep.subr.mxu0 0.0
        %1621 = vmatpush1.msra.mxu0 0.0
        %1622 = vmatprep.subr.mxu0 0.0
        %1623 = vmatpush1.msra.mxu0 0.0
        %1624 = vmatprep.subr.mxu0 0.0
        %1625 = vmatpush1.msra.mxu0 0.0
        %1626 = vmatprep.subr.mxu0 0.0
        %1627 = vmatpush1.msra.mxu0 0.0
        %1628 = vmatprep.subr.mxu0 0.0
        %1629 = vmatpush1.msra.mxu0 0.0
        %1630 = vmatprep.subr.mxu0 0.0
        %1631 = vmatpush1.msra.mxu0 0.0
        %1632 = vmatprep.subr.mxu0 0.0
        %1633 = vmatpush1.msra.mxu0 0.0
        %1634 = vmatprep.subr.mxu0 0.0
        %1635 = vmatpush1.msra.mxu0 0.0
        %1636 = vmatprep.subr.mxu0 0.0
        %1637 = vmatpush1.msra.mxu0 0.0
        %1638 = vmatprep.subr.mxu0 0.0
        %1639 = vmatpush1.msra.mxu0 0.0
        %1640 = vmatprep.mubr.f32.mxu0 0.0
        %1641 = vmatmul.mubr.f32.gmra.mrb[0].mxu0 %v1545
        %v1642 = vpop.f32.mrb[0].mxu0
        %v1643 = vadd.f32 0.0, %v1642
        %v1644 = vpop.f32.mrb[0].mxu0
        %1645 = vmatprep.mubr.f32.mxu0 0.0
        %1646 = vmatmul.mubr.f32.gmra.mrb[0].mxu0 %v1547
        %v1647 = vpop.f32.mrb[0].mxu0
        %v1648 = vadd.f32 0.0, %v1647
        %v1649 = vpop.f32.mrb[0].mxu0
        %1650 = vmatprep.mubr.f32.mxu0 0.0
        %1651 = vmatmul.mubr.f32.gmra.mrb[0].mxu0 %v1549
        %v1652 = vpop.f32.mrb[0].mxu0
        %v1653 = vadd.f32 0.0, %v1652
        %v1654 = vpop.f32.mrb[0].mxu0
        %1655 = vmatprep.mubr.f32.mxu0 0.0
        %1656 = vmatmul.mubr.f32.gmra.mrb[0].mxu0 %v1551
        %v1657 = vpop.f32.mrb[0].mxu0
        %v1658 = vadd.f32 0.0, %v1657
        %v1659 = vpop.f32.mrb[0].mxu0
        %1660 = vmatprep.mubr.f32.mxu0 0.0
        %1661 = vmatmul.mubr.f32.gmra.mrb[0].mxu0 %v1553
        %v1662 = vpop.f32.mrb[0].mxu0
        %v1663 = vadd.f32 0.0, %v1662
        %v1664 = vpop.f32.mrb[0].mxu0
        %1665 = vmatprep.mubr.f32.mxu0 0.0
        %1666 = vmatmul.mubr.f32.gmra.mrb[0].mxu0 %v1555
        %v1667 = vpop.f32.mrb[0].mxu0
        %v1668 = vadd.f32 0.0, %v1667
        %v1669 = vpop.f32.mrb[0].mxu0
        %1670 = vmatprep.mubr.f32.mxu0 0.0
        %1671 = vmatmul.mubr.f32.gmra.mrb[0].mxu0 %v1557
        %v1672 = vpop.f32.mrb[0].mxu0
        %v1673 = vadd.f32 0.0, %v1672
        %v1674 = vpop.f32.mrb[0].mxu0
        %1675 = vmatprep.mubr.f32.mxu0 0.0
        %1676 = vmatmul.mubr.f32.gmra.mrb[0].mxu0 %v1559
        %v1677 = vpop.f32.mrb[0].mxu0
        %v1678 = vadd.f32 0.0, %v1677
        %v1679 = vpop.f32.mrb[0].mxu0
        %1680 = vmatprep.mubr.f32.mxu0 0.0
        %1681 = vmatmul.mubr.f32.gmra.mrb[0].mxu0 %v1561
        %v1682 = vpop.f32.mrb[0].mxu0
        %v1683 = vadd.f32 0.0, %v1682
        %v1684 = vpop.f32.mrb[0].mxu0
        %1685 = vmatprep.mubr.f32.mxu0 0.0
        %1686 = vmatmul.mubr.f32.gmra.mrb[0].mxu0 %v1563
        %v1687 = vpop.f32.mrb[0].mxu0
        %v1688 = vadd.f32 0.0, %v1687
        %v1689 = vpop.f32.mrb[0].mxu0
        %1690 = vmatprep.mubr.f32.mxu0 0.0
        %1691 = vmatmul.mubr.f32.gmra.mrb[0].mxu0 %v1565
        %v1692 = vpop.f32.mrb[0].mxu0
        %v1693 = vadd.f32 0.0, %v1692
        %v1694 = vpop.f32.mrb[0].mxu0
        %1695 = vmatprep.mubr.f32.mxu0 0.0
        %1696 = vmatmul.mubr.f32.gmra.mrb[0].mxu0 %v1567
        %v1697 = vpop.f32.mrb[0].mxu0
        %v1698 = vadd.f32 0.0, %v1697
        %v1699 = vpop.f32.mrb[0].mxu0
        %1700 = vmatprep.mubr.f32.mxu0 0.0
        %1701 = vmatmul.mubr.f32.gmra.mrb[0].mxu0 %v1569
        %v1702 = vpop.f32.mrb[0].mxu0
        %v1703 = vadd.f32 0.0, %v1702
        %v1704 = vpop.f32.mrb[0].mxu0
        %1705 = vmatprep.mubr.f32.mxu0 0.0
        %1706 = vmatmul.mubr.f32.gmra.mrb[0].mxu0 %v1571
        %v1707 = vpop.f32.mrb[0].mxu0
        %v1708 = vadd.f32 0.0, %v1707
        %v1709 = vpop.f32.mrb[0].mxu0
        %1710 = vmatprep.mubr.f32.mxu0 0.0
        %1711 = vmatmul.mubr.f32.gmra.mrb[0].mxu0 %v1573
        %v1712 = vpop.f32.mrb[0].mxu0
        %v1713 = vadd.f32 0.0, %v1712
        %v1714 = vpop.f32.mrb[0].mxu0
        %1715 = vmatprep.mubr.f32.mxu0 0.0
        %1716 = vmatmul.mubr.f32.gmra.mrb[0].mxu0 %v1575
        %v1717 = vpop.f32.mrb[0].mxu0
        %v1718 = vadd.f32 0.0, %v1717
        %v1719 = vpop.f32.mrb[0].mxu0
        %1720 = vdwg.mxu0
        %1721 = vrot.lane.b32.xlu0 %v776, 96
        %v1722 = vpop.permute.xlu0 %1721
        %1723 = vrot.lane.b32.xlu0 %v781, 96
        %v1724 = vpop.permute.xlu0 %1723
        %1725 = vrot.lane.b32.xlu0 %v786, 96
        %v1726 = vpop.permute.xlu0 %1725
        %1727 = vrot.lane.b32.xlu0 %v791, 96
        %v1728 = vpop.permute.xlu0 %1727
        %1729 = vrot.lane.b32.xlu0 %v796, 96
        %v1730 = vpop.permute.xlu0 %1729
        %1731 = vrot.lane.b32.xlu0 %v801, 96
        %v1732 = vpop.permute.xlu0 %1731
        %1733 = vrot.lane.b32.xlu0 %v806, 96
        %v1734 = vpop.permute.xlu0 %1733
        %1735 = vrot.lane.b32.xlu0 %v811, 96
        %v1736 = vpop.permute.xlu0 %1735
        %1737 = vrot.lane.b32.xlu0 %v816, 96
        %v1738 = vpop.permute.xlu0 %1737
        %1739 = vrot.lane.b32.xlu0 %v821, 96
        %v1740 = vpop.permute.xlu0 %1739
        %1741 = vrot.lane.b32.xlu0 %v826, 96
        %v1742 = vpop.permute.xlu0 %1741
        %1743 = vrot.lane.b32.xlu0 %v831, 96
        %v1744 = vpop.permute.xlu0 %1743
        %1745 = vrot.lane.b32.xlu0 %v836, 96
        %v1746 = vpop.permute.xlu0 %1745
        %1747 = vrot.lane.b32.xlu0 %v841, 96
        %v1748 = vpop.permute.xlu0 %1747
        %1749 = vrot.lane.b32.xlu0 %v846, 96
        %v1750 = vpop.permute.xlu0 %1749
        %1751 = vrot.lane.b32.xlu0 %v851, 96
        %v1752 = vpop.permute.xlu0 %1751
        %1753 = vrot.lane.b32.xlu0 %v944, 96
        %v1754 = vpop.permute.xlu0 %1753
        %1755 = vrot.lane.b32.xlu0 %v949, 96
        %v1756 = vpop.permute.xlu0 %1755
        %1757 = vrot.lane.b32.xlu0 %v954, 96
        %v1758 = vpop.permute.xlu0 %1757
        %1759 = vrot.lane.b32.xlu0 %v959, 96
        %v1760 = vpop.permute.xlu0 %1759
        %1761 = vrot.lane.b32.xlu0 %v964, 96
        %v1762 = vpop.permute.xlu0 %1761
        %1763 = vrot.lane.b32.xlu0 %v969, 96
        %v1764 = vpop.permute.xlu0 %1763
        %1765 = vrot.lane.b32.xlu0 %v974, 96
        %v1766 = vpop.permute.xlu0 %1765
        %1767 = vrot.lane.b32.xlu0 %v979, 96
        %v1768 = vpop.permute.xlu0 %1767
        %1769 = vrot.lane.b32.xlu0 %v984, 96
        %v1770 = vpop.permute.xlu0 %1769
        %1771 = vrot.lane.b32.xlu0 %v989, 96
        %v1772 = vpop.permute.xlu0 %1771
        %1773 = vrot.lane.b32.xlu0 %v994, 96
        %v1774 = vpop.permute.xlu0 %1773
        %1775 = vrot.lane.b32.xlu0 %v999, 96
        %v1776 = vpop.permute.xlu0 %1775
        %1777 = vrot.lane.b32.xlu0 %v1004, 96
        %v1778 = vpop.permute.xlu0 %1777
        %1779 = vrot.lane.b32.xlu0 %v1009, 96
        %v1780 = vpop.permute.xlu0 %1779
        %1781 = vrot.lane.b32.xlu0 %v1014, 96
        %v1782 = vpop.permute.xlu0 %1781
        %1783 = vrot.lane.b32.xlu0 %v1019, 96
        %v1784 = vpop.permute.xlu0 %1783
        %v1785 = vsel %vm1190, %v1722, 0
        %v1787 = vsel %vm1190, %v1724, 0
        %v1789 = vsel %vm1190, %v1726, 0
        %v1791 = vsel %vm1190, %v1728, 0
        %v1793 = vsel %vm1190, %v1730, 0
        %v1795 = vsel %vm1190, %v1732, 0
        %v1797 = vsel %vm1190, %v1734, 0
        %v1799 = vsel %vm1190, %v1736, 0
        %v1801 = vsel %vm1190, %v1738, 0
        %v1803 = vsel %vm1190, %v1740, 0
        %v1805 = vsel %vm1190, %v1742, 0
        %v1807 = vsel %vm1190, %v1744, 0
        %v1809 = vsel %vm1190, %v1746, 0
        %v1811 = vsel %vm1190, %v1748, 0
        %v1813 = vsel %vm1190, %v1750, 0
        %v1815 = vsel %vm1190, %v1752, 0
        %v1817 = vsel %vm1190, %v1754, 0
        %v1819 = vsel %vm1190, %v1756, 0
        %v1821 = vsel %vm1190, %v1758, 0
        %v1823 = vsel %vm1190, %v1760, 0
        %v1825 = vsel %vm1190, %v1762, 0
        %v1827 = vsel %vm1190, %v1764, 0
        %v1829 = vsel %vm1190, %v1766, 0
        %v1831 = vsel %vm1190, %v1768, 0
        %v1833 = vsel %vm1190, %v1770, 0
        %v1835 = vsel %vm1190, %v1772, 0
        %v1837 = vsel %vm1190, %v1774, 0
        %v1839 = vsel %vm1190, %v1776, 0
        %v1841 = vsel %vm1190, %v1778, 0
        %v1843 = vsel %vm1190, %v1780, 0
        %v1845 = vsel %vm1190, %v1782, 0
        %v1847 = vsel %vm1190, %v1784, 0
        %1849 = vmatprep.subr.mxu0 0.0
        %1850 = vmatpush1.xpose.msra.mxu0 %v1817
        %1851 = vmatprep.subr.mxu0 0.0
        %1852 = vmatpush1.xpose.msra.mxu0 %v1819
        %1853 = vmatprep.subr.mxu0 0.0
        %1854 = vmatpush1.xpose.msra.mxu0 %v1821
        %1855 = vmatprep.subr.mxu0 0.0
        %1856 = vmatpush1.xpose.msra.mxu0 %v1823
        %1857 = vmatprep.subr.mxu0 0.0
        %1858 = vmatpush1.xpose.msra.mxu0 %v1825
        %1859 = vmatprep.subr.mxu0 0.0
        %1860 = vmatpush1.xpose.msra.mxu0 %v1827
        %1861 = vmatprep.subr.mxu0 0.0
        %1862 = vmatpush1.xpose.msra.mxu0 %v1829
        %1863 = vmatprep.subr.mxu0 0.0
        %1864 = vmatpush1.xpose.msra.mxu0 %v1831
        %1865 = vmatprep.subr.mxu0 0.0
        %1866 = vmatpush1.xpose.msra.mxu0 %v1833
        %1867 = vmatprep.subr.mxu0 0.0
        %1868 = vmatpush1.xpose.msra.mxu0 %v1835
        %1869 = vmatprep.subr.mxu0 0.0
        %1870 = vmatpush1.xpose.msra.mxu0 %v1837
        %1871 = vmatprep.subr.mxu0 0.0
        %1872 = vmatpush1.xpose.msra.mxu0 %v1839
        %1873 = vmatprep.subr.mxu0 0.0
        %1874 = vmatpush1.xpose.msra.mxu0 %v1841
        %1875 = vmatprep.subr.mxu0 0.0
        %1876 = vmatpush1.xpose.msra.mxu0 %v1843
        %1877 = vmatprep.subr.mxu0 0.0
        %1878 = vmatpush1.xpose.msra.mxu0 %v1845
        %1879 = vmatprep.subr.mxu0 0.0
        %1880 = vmatpush1.xpose.msra.mxu0 %v1847
        %1881 = vmatprep.subr.mxu0 0.0
        %1882 = vmatpush1.xpose.msra.mxu0 0.0
        %1883 = vmatprep.subr.mxu0 0.0
        %1884 = vmatpush1.xpose.msra.mxu0 0.0
        %1885 = vmatprep.subr.mxu0 0.0
        %1886 = vmatpush1.xpose.msra.mxu0 0.0
        %1887 = vmatprep.subr.mxu0 0.0
        %1888 = vmatpush1.xpose.msra.mxu0 0.0
        %1889 = vmatprep.subr.mxu0 0.0
        %1890 = vmatpush1.xpose.msra.mxu0 0.0
        %1891 = vmatprep.subr.mxu0 0.0
        %1892 = vmatpush1.xpose.msra.mxu0 0.0
        %1893 = vmatprep.subr.mxu0 0.0
        %1894 = vmatpush1.xpose.msra.mxu0 0.0
        %1895 = vmatprep.subr.mxu0 0.0
        %1896 = vmatpush1.xpose.msra.mxu0 0.0
        %1897 = vmatprep.subr.mxu0 0.0
        %1898 = vmatpush1.xpose.msra.mxu0 0.0
        %1899 = vmatprep.subr.mxu0 0.0
        %1900 = vmatpush1.xpose.msra.mxu0 0.0
        %1901 = vmatprep.subr.mxu0 0.0
        %1902 = vmatpush1.xpose.msra.mxu0 0.0
        %1903 = vmatprep.subr.mxu0 0.0
        %1904 = vmatpush1.xpose.msra.mxu0 0.0
        %1905 = vmatprep.subr.mxu0 0.0
        %1906 = vmatpush1.xpose.msra.mxu0 0.0
        %1907 = vmatprep.subr.mxu0 0.0
        %1908 = vmatpush1.xpose.msra.mxu0 0.0
        %1909 = vmatprep.subr.mxu0 0.0
        %1910 = vmatpush1.xpose.msra.mxu0 0.0
        %1911 = vmatprep.subr.mxu0 0.0
        %1912 = vmatpush1.xpose.msra.mxu0 0.0
        %1913 = vmatprep.mubr.f32.mxu0 0.0
        %1914 = vmatmul.mubr.f32.gmra.mrb[0].mxu0 %v1785
        %v1915 = vpop.f32.mrb[0].mxu0
        %v1916 = vadd.f32 0.0, %v1915
        %v1917 = vpop.f32.mrb[0].mxu0
        %1918 = vmatprep.mubr.f32.mxu0 0.0
        %1919 = vmatmul.mubr.f32.gmra.mrb[0].mxu0 %v1787
        %v1920 = vpop.f32.mrb[0].mxu0
        %v1921 = vadd.f32 0.0, %v1920
        %v1922 = vpop.f32.mrb[0].mxu0
        %1923 = vmatprep.mubr.f32.mxu0 0.0
        %1924 = vmatmul.mubr.f32.gmra.mrb[0].mxu0 %v1789
        %v1925 = vpop.f32.mrb[0].mxu0
        %v1926 = vadd.f32 0.0, %v1925
        %v1927 = vpop.f32.mrb[0].mxu0
        %1928 = vmatprep.mubr.f32.mxu0 0.0
        %1929 = vmatmul.mubr.f32.gmra.mrb[0].mxu0 %v1791
        %v1930 = vpop.f32.mrb[0].mxu0
        %v1931 = vadd.f32 0.0, %v1930
        %v1932 = vpop.f32.mrb[0].mxu0
        %1933 = vmatprep.mubr.f32.mxu0 0.0
        %1934 = vmatmul.mubr.f32.gmra.mrb[0].mxu0 %v1793
        %v1935 = vpop.f32.mrb[0].mxu0
        %v1936 = vadd.f32 0.0, %v1935
        %v1937 = vpop.f32.mrb[0].mxu0
        %1938 = vmatprep.mubr.f32.mxu0 0.0
        %1939 = vmatmul.mubr.f32.gmra.mrb[0].mxu0 %v1795
        %v1940 = vpop.f32.mrb[0].mxu0
        %v1941 = vadd.f32 0.0, %v1940
        %v1942 = vpop.f32.mrb[0].mxu0
        %1943 = vmatprep.mubr.f32.mxu0 0.0
        %1944 = vmatmul.mubr.f32.gmra.mrb[0].mxu0 %v1797
        %v1945 = vpop.f32.mrb[0].mxu0
        %v1946 = vadd.f32 0.0, %v1945
        %v1947 = vpop.f32.mrb[0].mxu0
        %1948 = vmatprep.mubr.f32.mxu0 0.0
        %1949 = vmatmul.mubr.f32.gmra.mrb[0].mxu0 %v1799
        %v1950 = vpop.f32.mrb[0].mxu0
        %v1951 = vadd.f32 0.0, %v1950
        %v1952 = vpop.f32.mrb[0].mxu0
        %1953 = vmatprep.mubr.f32.mxu0 0.0
        %1954 = vmatmul.mubr.f32.gmra.mrb[0].mxu0 %v1801
        %v1955 = vpop.f32.mrb[0].mxu0
        %v1956 = vadd.f32 0.0, %v1955
        %v1957 = vpop.f32.mrb[0].mxu0
        %1958 = vmatprep.mubr.f32.mxu0 0.0
        %1959 = vmatmul.mubr.f32.gmra.mrb[0].mxu0 %v1803
        %v1960 = vpop.f32.mrb[0].mxu0
        %v1961 = vadd.f32 0.0, %v1960
        %v1962 = vpop.f32.mrb[0].mxu0
        %1963 = vmatprep.mubr.f32.mxu0 0.0
        %1964 = vmatmul.mubr.f32.gmra.mrb[0].mxu0 %v1805
        %v1965 = vpop.f32.mrb[0].mxu0
        %v1966 = vadd.f32 0.0, %v1965
        %v1967 = vpop.f32.mrb[0].mxu0
        %1968 = vmatprep.mubr.f32.mxu0 0.0
        %1969 = vmatmul.mubr.f32.gmra.mrb[0].mxu0 %v1807
        %v1970 = vpop.f32.mrb[0].mxu0
        %v1971 = vadd.f32 0.0, %v1970
        %v1972 = vpop.f32.mrb[0].mxu0
        %1973 = vmatprep.mubr.f32.mxu0 0.0
        %1974 = vmatmul.mubr.f32.gmra.mrb[0].mxu0 %v1809
        %v1975 = vpop.f32.mrb[0].mxu0
        %v1976 = vadd.f32 0.0, %v1975
        %v1977 = vpop.f32.mrb[0].mxu0
        %1978 = vmatprep.mubr.f32.mxu0 0.0
        %1979 = vmatmul.mubr.f32.gmra.mrb[0].mxu0 %v1811
        %v1980 = vpop.f32.mrb[0].mxu0
        %v1981 = vadd.f32 0.0, %v1980
        %v1982 = vpop.f32.mrb[0].mxu0
        %1983 = vmatprep.mubr.f32.mxu0 0.0
        %1984 = vmatmul.mubr.f32.gmra.mrb[0].mxu0 %v1813
        %v1985 = vpop.f32.mrb[0].mxu0
        %v1986 = vadd.f32 0.0, %v1985
        %v1987 = vpop.f32.mrb[0].mxu0
        %1988 = vmatprep.mubr.f32.mxu0 0.0
        %1989 = vmatmul.mubr.f32.gmra.mrb[0].mxu0 %v1815
        %v1990 = vpop.f32.mrb[0].mxu0
        %v1991 = vadd.f32 0.0, %v1990
        %v1992 = vpop.f32.mrb[0].mxu0
        %1993 = vdwg.mxu0
        %1994 = vmax.xlane.f32.xlu0 %v1916
        %v1995 = vpop.xlane.xlu0 %1994
        %1996 = vmax.xlane.f32.xlu0 %v1921
        %v1997 = vpop.xlane.xlu0 %1996
        %1998 = vmax.xlane.f32.xlu0 %v1926
        %v1999 = vpop.xlane.xlu0 %1998
        %2000 = vmax.xlane.f32.xlu0 %v1931
        %v2001 = vpop.xlane.xlu0 %2000
        %2002 = vmax.xlane.f32.xlu0 %v1936
        %v2003 = vpop.xlane.xlu0 %2002
        %2004 = vmax.xlane.f32.xlu0 %v1941
        %v2005 = vpop.xlane.xlu0 %2004
        %2006 = vmax.xlane.f32.xlu0 %v1946
        %v2007 = vpop.xlane.xlu0 %2006
        %2008 = vmax.xlane.f32.xlu0 %v1951
        %v2009 = vpop.xlane.xlu0 %2008
        %2010 = vmax.xlane.f32.xlu0 %v1956
        %v2011 = vpop.xlane.xlu0 %2010
        %2012 = vmax.xlane.f32.xlu0 %v1961
        %v2013 = vpop.xlane.xlu0 %2012
        %2014 = vmax.xlane.f32.xlu0 %v1966
        %v2015 = vpop.xlane.xlu0 %2014
        %2016 = vmax.xlane.f32.xlu0 %v1971
        %v2017 = vpop.xlane.xlu0 %2016
        %2018 = vmax.xlane.f32.xlu0 %v1976
        %v2019 = vpop.xlane.xlu0 %2018
        %2020 = vmax.xlane.f32.xlu0 %v1981
        %v2021 = vpop.xlane.xlu0 %2020
        %2022 = vmax.xlane.f32.xlu0 %v1986
        %v2023 = vpop.xlane.xlu0 %2022
        %2024 = vmax.xlane.f32.xlu0 %v1991
        %v2025 = vpop.xlane.xlu0 %2024
        %v2026 = vsub.f32 %v1916, %v1995
        %v2027 = vsub.f32 %v1921, %v1997
        %v2028 = vsub.f32 %v1926, %v1999
        %v2029 = vsub.f32 %v1931, %v2001
        %v2030 = vsub.f32 %v1936, %v2003
        %v2031 = vsub.f32 %v1941, %v2005
        %v2032 = vsub.f32 %v1946, %v2007
        %v2033 = vsub.f32 %v1951, %v2009
        %v2034 = vsub.f32 %v1956, %v2011
        %v2035 = vsub.f32 %v1961, %v2013
        %v2036 = vsub.f32 %v1966, %v2015
        %v2037 = vsub.f32 %v1971, %v2017
        %v2038 = vsub.f32 %v1976, %v2019
        %v2039 = vsub.f32 %v1981, %v2021
        %v2040 = vsub.f32 %v1986, %v2023
        %v2041 = vsub.f32 %v1991, %v2025
        %v2042 = vmul.f32 %v2026, 1.442695
        %v2043 = vpow.pop %v2042
        %v2044 = vmul.f32 %v2027, 1.442695
        %v2045 = vpow.pop %v2044
        %v2046 = vmul.f32 %v2028, 1.442695
        %v2047 = vpow.pop %v2046
        %v2048 = vmul.f32 %v2029, 1.442695
        %v2049 = vpow.pop %v2048
        %v2050 = vmul.f32 %v2030, 1.442695
        %v2051 = vpow.pop %v2050
        %v2052 = vmul.f32 %v2031, 1.442695
        %v2053 = vpow.pop %v2052
        %v2054 = vmul.f32 %v2032, 1.442695
        %v2055 = vpow.pop %v2054
        %v2056 = vmul.f32 %v2033, 1.442695
        %v2057 = vpow.pop %v2056
        %v2058 = vmul.f32 %v2034, 1.442695
        %v2059 = vpow.pop %v2058
        %v2060 = vmul.f32 %v2035, 1.442695
        %v2061 = vpow.pop %v2060
        %v2062 = vmul.f32 %v2036, 1.442695
        %v2063 = vpow.pop %v2062
        %v2064 = vmul.f32 %v2037, 1.442695
        %v2065 = vpow.pop %v2064
        %v2066 = vmul.f32 %v2038, 1.442695
        %v2067 = vpow.pop %v2066
        %v2068 = vmul.f32 %v2039, 1.442695
        %v2069 = vpow.pop %v2068
        %v2070 = vmul.f32 %v2040, 1.442695
        %v2071 = vpow.pop %v2070
        %v2072 = vmul.f32 %v2041, 1.442695
        %v2073 = vpow.pop %v2072
        %2074 = vadd.xlane.f32.xlu0 %v2043
        %v2075 = vpop.xlane.xlu0 %2074
        %2076 = vadd.xlane.f32.xlu0 %v2045
        %v2077 = vpop.xlane.xlu0 %2076
        %2078 = vadd.xlane.f32.xlu0 %v2047
        %v2079 = vpop.xlane.xlu0 %2078
        %2080 = vadd.xlane.f32.xlu0 %v2049
        %v2081 = vpop.xlane.xlu0 %2080
        %2082 = vadd.xlane.f32.xlu0 %v2051
        %v2083 = vpop.xlane.xlu0 %2082
        %2084 = vadd.xlane.f32.xlu0 %v2053
        %v2085 = vpop.xlane.xlu0 %2084
        %2086 = vadd.xlane.f32.xlu0 %v2055
        %v2087 = vpop.xlane.xlu0 %2086
        %2088 = vadd.xlane.f32.xlu0 %v2057
        %v2089 = vpop.xlane.xlu0 %2088
        %2090 = vadd.xlane.f32.xlu0 %v2059
        %v2091 = vpop.xlane.xlu0 %2090
        %2092 = vadd.xlane.f32.xlu0 %v2061
        %v2093 = vpop.xlane.xlu0 %2092
        %2094 = vadd.xlane.f32.xlu0 %v2063
        %v2095 = vpop.xlane.xlu0 %2094
        %2096 = vadd.xlane.f32.xlu0 %v2065
        %v2097 = vpop.xlane.xlu0 %2096
        %2098 = vadd.xlane.f32.xlu0 %v2067
        %v2099 = vpop.xlane.xlu0 %2098
        %2100 = vadd.xlane.f32.xlu0 %v2069
        %v2101 = vpop.xlane.xlu0 %2100
        %2102 = vadd.xlane.f32.xlu0 %v2071
        %v2103 = vpop.xlane.xlu0 %2102
        %2104 = vadd.xlane.f32.xlu0 %v2073
        %v2105 = vpop.xlane.xlu0 %2104
        %v2106 = vrcp.pop %v2075
        %v2107 = vmul.f32 %v2043, %v2106
        %v2108 = vrcp.pop %v2077
        %v2109 = vmul.f32 %v2045, %v2108
        %v2110 = vrcp.pop %v2079
        %v2111 = vmul.f32 %v2047, %v2110
        %v2112 = vrcp.pop %v2081
        %v2113 = vmul.f32 %v2049, %v2112
        %v2114 = vrcp.pop %v2083
        %v2115 = vmul.f32 %v2051, %v2114
        %v2116 = vrcp.pop %v2085
        %v2117 = vmul.f32 %v2053, %v2116
        %v2118 = vrcp.pop %v2087
        %v2119 = vmul.f32 %v2055, %v2118
        %v2120 = vrcp.pop %v2089
        %v2121 = vmul.f32 %v2057, %v2120
        %v2122 = vrcp.pop %v2091
        %v2123 = vmul.f32 %v2059, %v2122
        %v2124 = vrcp.pop %v2093
        %v2125 = vmul.f32 %v2061, %v2124
        %v2126 = vrcp.pop %v2095
        %v2127 = vmul.f32 %v2063, %v2126
        %v2128 = vrcp.pop %v2097
        %v2129 = vmul.f32 %v2065, %v2128
        %v2130 = vrcp.pop %v2099
        %v2131 = vmul.f32 %v2067, %v2130
        %v2132 = vrcp.pop %v2101
        %v2133 = vmul.f32 %v2069, %v2132
        %v2134 = vrcp.pop %v2103
        %v2135 = vmul.f32 %v2071, %v2134
        %v2136 = vrcp.pop %v2105
        %v2137 = vmul.f32 %v2073, %v2136
        %2154 = vrot.lane.b32.xlu0 %v1112, 96
        %v2155 = vpop.permute.xlu0 %2154
        %2156 = vrot.lane.b32.xlu0 %v1117, 96
        %v2157 = vpop.permute.xlu0 %2156
        %2158 = vrot.lane.b32.xlu0 %v1122, 96
        %v2159 = vpop.permute.xlu0 %2158
        %2160 = vrot.lane.b32.xlu0 %v1127, 96
        %v2161 = vpop.permute.xlu0 %2160
        %2162 = vrot.lane.b32.xlu0 %v1132, 96
        %v2163 = vpop.permute.xlu0 %2162
        %2164 = vrot.lane.b32.xlu0 %v1137, 96
        %v2165 = vpop.permute.xlu0 %2164
        %2166 = vrot.lane.b32.xlu0 %v1142, 96
        %v2167 = vpop.permute.xlu0 %2166
        %2168 = vrot.lane.b32.xlu0 %v1147, 96
        %v2169 = vpop.permute.xlu0 %2168
        %2170 = vrot.lane.b32.xlu0 %v1152, 96
        %v2171 = vpop.permute.xlu0 %2170
        %2172 = vrot.lane.b32.xlu0 %v1157, 96
        %v2173 = vpop.permute.xlu0 %2172
        %2174 = vrot.lane.b32.xlu0 %v1162, 96
        %v2175 = vpop.permute.xlu0 %2174
        %2176 = vrot.lane.b32.xlu0 %v1167, 96
        %v2177 = vpop.permute.xlu0 %2176
        %2178 = vrot.lane.b32.xlu0 %v1172, 96
        %v2179 = vpop.permute.xlu0 %2178
        %2180 = vrot.lane.b32.xlu0 %v1177, 96
        %v2181 = vpop.permute.xlu0 %2180
        %2182 = vrot.lane.b32.xlu0 %v1182, 96
        %v2183 = vpop.permute.xlu0 %2182
        %2184 = vrot.lane.b32.xlu0 %v1187, 96
        %v2185 = vpop.permute.xlu0 %2184
        %2202 = vmatprep.subr.mxu0 0.0
        %2203 = vmatpush1.msra.mxu0 %v2155
        %2204 = vmatprep.subr.mxu0 0.0
        %2205 = vmatpush1.msra.mxu0 %v2157
        %2206 = vmatprep.subr.mxu0 0.0
        %2207 = vmatpush1.msra.mxu0 %v2159
        %2208 = vmatprep.subr.mxu0 0.0
        %2209 = vmatpush1.msra.mxu0 %v2161
        %2210 = vmatprep.subr.mxu0 0.0
        %2211 = vmatpush1.msra.mxu0 %v2163
        %2212 = vmatprep.subr.mxu0 0.0
        %2213 = vmatpush1.msra.mxu0 %v2165
        %2214 = vmatprep.subr.mxu0 0.0
        %2215 = vmatpush1.msra.mxu0 %v2167
        %2216 = vmatprep.subr.mxu0 0.0
        %2217 = vmatpush1.msra.mxu0 %v2169
        %2218 = vmatprep.subr.mxu0 0.0
        %2219 = vmatpush1.msra.mxu0 %v2171
        %2220 = vmatprep.subr.mxu0 0.0
        %2221 = vmatpush1.msra.mxu0 %v2173
        %2222 = vmatprep.subr.mxu0 0.0
        %2223 = vmatpush1.msra.mxu0 %v2175
        %2224 = vmatprep.subr.mxu0 0.0
        %2225 = vmatpush1.msra.mxu0 %v2177
        %2226 = vmatprep.subr.mxu0 0.0
        %2227 = vmatpush1.msra.mxu0 %v2179
        %2228 = vmatprep.subr.mxu0 0.0
        %2229 = vmatpush1.msra.mxu0 %v2181
        %2230 = vmatprep.subr.mxu0 0.0
        %2231 = vmatpush1.msra.mxu0 %v2183
        %2232 = vmatprep.subr.mxu0 0.0
        %2233 = vmatpush1.msra.mxu0 %v2185
        %2234 = vmatprep.subr.mxu0 0.0
        %2235 = vmatpush1.msra.mxu0 0.0
        %2236 = vmatprep.subr.mxu0 0.0
        %2237 = vmatpush1.msra.mxu0 0.0
        %2238 = vmatprep.subr.mxu0 0.0
        %2239 = vmatpush1.msra.mxu0 0.0
        %2240 = vmatprep.subr.mxu0 0.0
        %2241 = vmatpush1.msra.mxu0 0.0
        %2242 = vmatprep.subr.mxu0 0.0
        %2243 = vmatpush1.msra.mxu0 0.0
        %2244 = vmatprep.subr.mxu0 0.0
        %2245 = vmatpush1.msra.mxu0 0.0
        %2246 = vmatprep.subr.mxu0 0.0
        %2247 = vmatpush1.msra.mxu0 0.0
        %2248 = vmatprep.subr.mxu0 0.0
        %2249 = vmatpush1.msra.mxu0 0.0
        %2250 = vmatprep.subr.mxu0 0.0
        %2251 = vmatpush1.msra.mxu0 0.0
        %2252 = vmatprep.subr.mxu0 0.0
        %2253 = vmatpush1.msra.mxu0 0.0
        %2254 = vmatprep.subr.mxu0 0.0
        %2255 = vmatpush1.msra.mxu0 0.0
        %2256 = vmatprep.subr.mxu0 0.0
        %2257 = vmatpush1.msra.mxu0 0.0
        %2258 = vmatprep.subr.mxu0 0.0
        %2259 = vmatpush1.msra.mxu0 0.0
        %2260 = vmatprep.subr.mxu0 0.0
        %2261 = vmatpush1.msra.mxu0 0.0
        %2262 = vmatprep.subr.mxu0 0.0
        %2263 = vmatpush1.msra.mxu0 0.0
        %2264 = vmatprep.subr.mxu0 0.0
        %2265 = vmatpush1.msra.mxu0 0.0
        %2266 = vmatprep.mubr.f32.mxu0 0.0
        %2267 = vmatmul.mubr.f32.gmra.mrb[0].mxu0 %v2107
        %v2268 = vpop.f32.mrb[0].mxu0
        %v2269 = vadd.f32 0.0, %v2268
        %v2270 = vpop.f32.mrb[0].mxu0
        %2271 = vmatprep.mubr.f32.mxu0 0.0
        %2272 = vmatmul.mubr.f32.gmra.mrb[0].mxu0 %v2109
        %v2273 = vpop.f32.mrb[0].mxu0
        %v2274 = vadd.f32 0.0, %v2273
        %v2275 = vpop.f32.mrb[0].mxu0
        %2276 = vmatprep.mubr.f32.mxu0 0.0
        %2277 = vmatmul.mubr.f32.gmra.mrb[0].mxu0 %v2111
        %v2278 = vpop.f32.mrb[0].mxu0
        %v2279 = vadd.f32 0.0, %v2278
        %v2280 = vpop.f32.mrb[0].mxu0
        %2281 = vmatprep.mubr.f32.mxu0 0.0
        %2282 = vmatmul.mubr.f32.gmra.mrb[0].mxu0 %v2113
        %v2283 = vpop.f32.mrb[0].mxu0
        %v2284 = vadd.f32 0.0, %v2283
        %v2285 = vpop.f32.mrb[0].mxu0
        %2286 = vmatprep.mubr.f32.mxu0 0.0
        %2287 = vmatmul.mubr.f32.gmra.mrb[0].mxu0 %v2115
        %v2288 = vpop.f32.mrb[0].mxu0
        %v2289 = vadd.f32 0.0, %v2288
        %v2290 = vpop.f32.mrb[0].mxu0
        %2291 = vmatprep.mubr.f32.mxu0 0.0
        %2292 = vmatmul.mubr.f32.gmra.mrb[0].mxu0 %v2117
        %v2293 = vpop.f32.mrb[0].mxu0
        %v2294 = vadd.f32 0.0, %v2293
        %v2295 = vpop.f32.mrb[0].mxu0
        %2296 = vmatprep.mubr.f32.mxu0 0.0
        %2297 = vmatmul.mubr.f32.gmra.mrb[0].mxu0 %v2119
        %v2298 = vpop.f32.mrb[0].mxu0
        %v2299 = vadd.f32 0.0, %v2298
        %v2300 = vpop.f32.mrb[0].mxu0
        %2301 = vmatprep.mubr.f32.mxu0 0.0
        %2302 = vmatmul.mubr.f32.gmra.mrb[0].mxu0 %v2121
        %v2303 = vpop.f32.mrb[0].mxu0
        %v2304 = vadd.f32 0.0, %v2303
        %v2305 = vpop.f32.mrb[0].mxu0
        %2306 = vmatprep.mubr.f32.mxu0 0.0
        %2307 = vmatmul.mubr.f32.gmra.mrb[0].mxu0 %v2123
        %v2308 = vpop.f32.mrb[0].mxu0
        %v2309 = vadd.f32 0.0, %v2308
        %v2310 = vpop.f32.mrb[0].mxu0
        %2311 = vmatprep.mubr.f32.mxu0 0.0
        %2312 = vmatmul.mubr.f32.gmra.mrb[0].mxu0 %v2125
        %v2313 = vpop.f32.mrb[0].mxu0
        %v2314 = vadd.f32 0.0, %v2313
        %v2315 = vpop.f32.mrb[0].mxu0
        %2316 = vmatprep.mubr.f32.mxu0 0.0
        %2317 = vmatmul.mubr.f32.gmra.mrb[0].mxu0 %v2127
        %v2318 = vpop.f32.mrb[0].mxu0
        %v2319 = vadd.f32 0.0, %v2318
        %v2320 = vpop.f32.mrb[0].mxu0
        %2321 = vmatprep.mubr.f32.mxu0 0.0
        %2322 = vmatmul.mubr.f32.gmra.mrb[0].mxu0 %v2129
        %v2323 = vpop.f32.mrb[0].mxu0
        %v2324 = vadd.f32 0.0, %v2323
        %v2325 = vpop.f32.mrb[0].mxu0
        %2326 = vmatprep.mubr.f32.mxu0 0.0
        %2327 = vmatmul.mubr.f32.gmra.mrb[0].mxu0 %v2131
        %v2328 = vpop.f32.mrb[0].mxu0
        %v2329 = vadd.f32 0.0, %v2328
        %v2330 = vpop.f32.mrb[0].mxu0
        %2331 = vmatprep.mubr.f32.mxu0 0.0
        %2332 = vmatmul.mubr.f32.gmra.mrb[0].mxu0 %v2133
        %v2333 = vpop.f32.mrb[0].mxu0
        %v2334 = vadd.f32 0.0, %v2333
        %v2335 = vpop.f32.mrb[0].mxu0
        %2336 = vmatprep.mubr.f32.mxu0 0.0
        %2337 = vmatmul.mubr.f32.gmra.mrb[0].mxu0 %v2135
        %v2338 = vpop.f32.mrb[0].mxu0
        %v2339 = vadd.f32 0.0, %v2338
        %v2340 = vpop.f32.mrb[0].mxu0
        %2341 = vmatprep.mubr.f32.mxu0 0.0
        %2342 = vmatmul.mubr.f32.gmra.mrb[0].mxu0 %v2137
        %v2343 = vpop.f32.mrb[0].mxu0
        %v2344 = vadd.f32 0.0, %v2343
        %v2345 = vpop.f32.mrb[0].mxu0
        %2346 = vdwg.mxu0
        %2347 = vrot.lane.b32.xlu0 %v776, 64
        %v2348 = vpop.permute.xlu0 %2347
        %2349 = vrot.lane.b32.xlu0 %v781, 64
        %v2350 = vpop.permute.xlu0 %2349
        %2351 = vrot.lane.b32.xlu0 %v786, 64
        %v2352 = vpop.permute.xlu0 %2351
        %2353 = vrot.lane.b32.xlu0 %v791, 64
        %v2354 = vpop.permute.xlu0 %2353
        %2355 = vrot.lane.b32.xlu0 %v796, 64
        %v2356 = vpop.permute.xlu0 %2355
        %2357 = vrot.lane.b32.xlu0 %v801, 64
        %v2358 = vpop.permute.xlu0 %2357
        %2359 = vrot.lane.b32.xlu0 %v806, 64
        %v2360 = vpop.permute.xlu0 %2359
        %2361 = vrot.lane.b32.xlu0 %v811, 64
        %v2362 = vpop.permute.xlu0 %2361
        %2363 = vrot.lane.b32.xlu0 %v816, 64
        %v2364 = vpop.permute.xlu0 %2363
        %2365 = vrot.lane.b32.xlu0 %v821, 64
        %v2366 = vpop.permute.xlu0 %2365
        %2367 = vrot.lane.b32.xlu0 %v826, 64
        %v2368 = vpop.permute.xlu0 %2367
        %2369 = vrot.lane.b32.xlu0 %v831, 64
        %v2370 = vpop.permute.xlu0 %2369
        %2371 = vrot.lane.b32.xlu0 %v836, 64
        %v2372 = vpop.permute.xlu0 %2371
        %2373 = vrot.lane.b32.xlu0 %v841, 64
        %v2374 = vpop.permute.xlu0 %2373
        %2375 = vrot.lane.b32.xlu0 %v846, 64
        %v2376 = vpop.permute.xlu0 %2375
        %2377 = vrot.lane.b32.xlu0 %v851, 64
        %v2378 = vpop.permute.xlu0 %2377
        %2379 = vrot.lane.b32.xlu0 %v944, 64
        %v2380 = vpop.permute.xlu0 %2379
        %2381 = vrot.lane.b32.xlu0 %v949, 64
        %v2382 = vpop.permute.xlu0 %2381
        %2383 = vrot.lane.b32.xlu0 %v954, 64
        %v2384 = vpop.permute.xlu0 %2383
        %2385 = vrot.lane.b32.xlu0 %v959, 64
        %v2386 = vpop.permute.xlu0 %2385
        %2387 = vrot.lane.b32.xlu0 %v964, 64
        %v2388 = vpop.permute.xlu0 %2387
        %2389 = vrot.lane.b32.xlu0 %v969, 64
        %v2390 = vpop.permute.xlu0 %2389
        %2391 = vrot.lane.b32.xlu0 %v974, 64
        %v2392 = vpop.permute.xlu0 %2391
        %2393 = vrot.lane.b32.xlu0 %v979, 64
        %v2394 = vpop.permute.xlu0 %2393
        %2395 = vrot.lane.b32.xlu0 %v984, 64
        %v2396 = vpop.permute.xlu0 %2395
        %2397 = vrot.lane.b32.xlu0 %v989, 64
        %v2398 = vpop.permute.xlu0 %2397
        %2399 = vrot.lane.b32.xlu0 %v994, 64
        %v2400 = vpop.permute.xlu0 %2399
        %2401 = vrot.lane.b32.xlu0 %v999, 64
        %v2402 = vpop.permute.xlu0 %2401
        %2403 = vrot.lane.b32.xlu0 %v1004, 64
        %v2404 = vpop.permute.xlu0 %2403
        %2405 = vrot.lane.b32.xlu0 %v1009, 64
        %v2406 = vpop.permute.xlu0 %2405
        %2407 = vrot.lane.b32.xlu0 %v1014, 64
        %v2408 = vpop.permute.xlu0 %2407
        %2409 = vrot.lane.b32.xlu0 %v1019, 64
        %v2410 = vpop.permute.xlu0 %2409
        %v2411 = vsel %vm1190, %v2348, 0
        %v2413 = vsel %vm1190, %v2350, 0
        %v2415 = vsel %vm1190, %v2352, 0
        %v2417 = vsel %vm1190, %v2354, 0
        %v2419 = vsel %vm1190, %v2356, 0
        %v2421 = vsel %vm1190, %v2358, 0
        %v2423 = vsel %vm1190, %v2360, 0
        %v2425 = vsel %vm1190, %v2362, 0
        %v2427 = vsel %vm1190, %v2364, 0
        %v2429 = vsel %vm1190, %v2366, 0
        %v2431 = vsel %vm1190, %v2368, 0
        %v2433 = vsel %vm1190, %v2370, 0
        %v2435 = vsel %vm1190, %v2372, 0
        %v2437 = vsel %vm1190, %v2374, 0
        %v2439 = vsel %vm1190, %v2376, 0
        %v2441 = vsel %vm1190, %v2378, 0
        %v2443 = vsel %vm1190, %v2380, 0
        %v2445 = vsel %vm1190, %v2382, 0
        %v2447 = vsel %vm1190, %v2384, 0
        %v2449 = vsel %vm1190, %v2386, 0
        %v2451 = vsel %vm1190, %v2388, 0
        %v2453 = vsel %vm1190, %v2390, 0
        %v2455 = vsel %vm1190, %v2392, 0
        %v2457 = vsel %vm1190, %v2394, 0
        %v2459 = vsel %vm1190, %v2396, 0
        %v2461 = vsel %vm1190, %v2398, 0
        %v2463 = vsel %vm1190, %v2400, 0
        %v2465 = vsel %vm1190, %v2402, 0
        %v2467 = vsel %vm1190, %v2404, 0
        %v2469 = vsel %vm1190, %v2406, 0
        %v2471 = vsel %vm1190, %v2408, 0
        %v2473 = vsel %vm1190, %v2410, 0
        %2475 = vmatprep.subr.mxu0 0.0
        %2476 = vmatpush1.xpose.msra.mxu0 %v2443
        %2477 = vmatprep.subr.mxu0 0.0
        %2478 = vmatpush1.xpose.msra.mxu0 %v2445
        %2479 = vmatprep.subr.mxu0 0.0
        %2480 = vmatpush1.xpose.msra.mxu0 %v2447
        %2481 = vmatprep.subr.mxu0 0.0
        %2482 = vmatpush1.xpose.msra.mxu0 %v2449
        %2483 = vmatprep.subr.mxu0 0.0
        %2484 = vmatpush1.xpose.msra.mxu0 %v2451
        %2485 = vmatprep.subr.mxu0 0.0
        %2486 = vmatpush1.xpose.msra.mxu0 %v2453
        %2487 = vmatprep.subr.mxu0 0.0
        %2488 = vmatpush1.xpose.msra.mxu0 %v2455
        %2489 = vmatprep.subr.mxu0 0.0
        %2490 = vmatpush1.xpose.msra.mxu0 %v2457
        %2491 = vmatprep.subr.mxu0 0.0
        %2492 = vmatpush1.xpose.msra.mxu0 %v2459
        %2493 = vmatprep.subr.mxu0 0.0
        %2494 = vmatpush1.xpose.msra.mxu0 %v2461
        %2495 = vmatprep.subr.mxu0 0.0
        %2496 = vmatpush1.xpose.msra.mxu0 %v2463
        %2497 = vmatprep.subr.mxu0 0.0
        %2498 = vmatpush1.xpose.msra.mxu0 %v2465
        %2499 = vmatprep.subr.mxu0 0.0
        %2500 = vmatpush1.xpose.msra.mxu0 %v2467
        %2501 = vmatprep.subr.mxu0 0.0
        %2502 = vmatpush1.xpose.msra.mxu0 %v2469
        %2503 = vmatprep.subr.mxu0 0.0
        %2504 = vmatpush1.xpose.msra.mxu0 %v2471
        %2505 = vmatprep.subr.mxu0 0.0
        %2506 = vmatpush1.xpose.msra.mxu0 %v2473
        %2507 = vmatprep.subr.mxu0 0.0
        %2508 = vmatpush1.xpose.msra.mxu0 0.0
        %2509 = vmatprep.subr.mxu0 0.0
        %2510 = vmatpush1.xpose.msra.mxu0 0.0
        %2511 = vmatprep.subr.mxu0 0.0
        %2512 = vmatpush1.xpose.msra.mxu0 0.0
        %2513 = vmatprep.subr.mxu0 0.0
        %2514 = vmatpush1.xpose.msra.mxu0 0.0
        %2515 = vmatprep.subr.mxu0 0.0
        %2516 = vmatpush1.xpose.msra.mxu0 0.0
        %2517 = vmatprep.subr.mxu0 0.0
        %2518 = vmatpush1.xpose.msra.mxu0 0.0
        %2519 = vmatprep.subr.mxu0 0.0
        %2520 = vmatpush1.xpose.msra.mxu0 0.0
        %2521 = vmatprep.subr.mxu0 0.0
        %2522 = vmatpush1.xpose.msra.mxu0 0.0
        %2523 = vmatprep.subr.mxu0 0.0
        %2524 = vmatpush1.xpose.msra.mxu0 0.0
        %2525 = vmatprep.subr.mxu0 0.0
        %2526 = vmatpush1.xpose.msra.mxu0 0.0
        %2527 = vmatprep.subr.mxu0 0.0
        %2528 = vmatpush1.xpose.msra.mxu0 0.0
        %2529 = vmatprep.subr.mxu0 0.0
        %2530 = vmatpush1.xpose.msra.mxu0 0.0
        %2531 = vmatprep.subr.mxu0 0.0
        %2532 = vmatpush1.xpose.msra.mxu0 0.0
        %2533 = vmatprep.subr.mxu0 0.0
        %2534 = vmatpush1.xpose.msra.mxu0 0.0
        %2535 = vmatprep.subr.mxu0 0.0
        %2536 = vmatpush1.xpose.msra.mxu0 0.0
        %2537 = vmatprep.subr.mxu0 0.0
        %2538 = vmatpush1.xpose.msra.mxu0 0.0
        %2539 = vmatprep.mubr.f32.mxu0 0.0
        %2540 = vmatmul.mubr.f32.gmra.mrb[0].mxu0 %v2411
        %v2541 = vpop.f32.mrb[0].mxu0
        %v2542 = vadd.f32 0.0, %v2541
        %v2543 = vpop.f32.mrb[0].mxu0
        %2544 = vmatprep.mubr.f32.mxu0 0.0
        %2545 = vmatmul.mubr.f32.gmra.mrb[0].mxu0 %v2413
        %v2546 = vpop.f32.mrb[0].mxu0
        %v2547 = vadd.f32 0.0, %v2546
        %v2548 = vpop.f32.mrb[0].mxu0
        %2549 = vmatprep.mubr.f32.mxu0 0.0
        %2550 = vmatmul.mubr.f32.gmra.mrb[0].mxu0 %v2415
        %v2551 = vpop.f32.mrb[0].mxu0
        %v2552 = vadd.f32 0.0, %v2551
        %v2553 = vpop.f32.mrb[0].mxu0
        %2554 = vmatprep.mubr.f32.mxu0 0.0
        %2555 = vmatmul.mubr.f32.gmra.mrb[0].mxu0 %v2417
        %v2556 = vpop.f32.mrb[0].mxu0
        %v2557 = vadd.f32 0.0, %v2556
        %v2558 = vpop.f32.mrb[0].mxu0
        %2559 = vmatprep.mubr.f32.mxu0 0.0
        %2560 = vmatmul.mubr.f32.gmra.mrb[0].mxu0 %v2419
        %v2561 = vpop.f32.mrb[0].mxu0
        %v2562 = vadd.f32 0.0, %v2561
        %v2563 = vpop.f32.mrb[0].mxu0
        %2564 = vmatprep.mubr.f32.mxu0 0.0
        %2565 = vmatmul.mubr.f32.gmra.mrb[0].mxu0 %v2421
        %v2566 = vpop.f32.mrb[0].mxu0
        %v2567 = vadd.f32 0.0, %v2566
        %v2568 = vpop.f32.mrb[0].mxu0
        %2569 = vmatprep.mubr.f32.mxu0 0.0
        %2570 = vmatmul.mubr.f32.gmra.mrb[0].mxu0 %v2423
        %v2571 = vpop.f32.mrb[0].mxu0
        %v2572 = vadd.f32 0.0, %v2571
        %v2573 = vpop.f32.mrb[0].mxu0
        %2574 = vmatprep.mubr.f32.mxu0 0.0
        %2575 = vmatmul.mubr.f32.gmra.mrb[0].mxu0 %v2425
        %v2576 = vpop.f32.mrb[0].mxu0
        %v2577 = vadd.f32 0.0, %v2576
        %v2578 = vpop.f32.mrb[0].mxu0
        %2579 = vmatprep.mubr.f32.mxu0 0.0
        %2580 = vmatmul.mubr.f32.gmra.mrb[0].mxu0 %v2427
        %v2581 = vpop.f32.mrb[0].mxu0
        %v2582 = vadd.f32 0.0, %v2581
        %v2583 = vpop.f32.mrb[0].mxu0
        %2584 = vmatprep.mubr.f32.mxu0 0.0
        %2585 = vmatmul.mubr.f32.gmra.mrb[0].mxu0 %v2429
        %v2586 = vpop.f32.mrb[0].mxu0
        %v2587 = vadd.f32 0.0, %v2586
        %v2588 = vpop.f32.mrb[0].mxu0
        %2589 = vmatprep.mubr.f32.mxu0 0.0
        %2590 = vmatmul.mubr.f32.gmra.mrb[0].mxu0 %v2431
        %v2591 = vpop.f32.mrb[0].mxu0
        %v2592 = vadd.f32 0.0, %v2591
        %v2593 = vpop.f32.mrb[0].mxu0
        %2594 = vmatprep.mubr.f32.mxu0 0.0
        %2595 = vmatmul.mubr.f32.gmra.mrb[0].mxu0 %v2433
        %v2596 = vpop.f32.mrb[0].mxu0
        %v2597 = vadd.f32 0.0, %v2596
        %v2598 = vpop.f32.mrb[0].mxu0
        %2599 = vmatprep.mubr.f32.mxu0 0.0
        %2600 = vmatmul.mubr.f32.gmra.mrb[0].mxu0 %v2435
        %v2601 = vpop.f32.mrb[0].mxu0
        %v2602 = vadd.f32 0.0, %v2601
        %v2603 = vpop.f32.mrb[0].mxu0
        %2604 = vmatprep.mubr.f32.mxu0 0.0
        %2605 = vmatmul.mubr.f32.gmra.mrb[0].mxu0 %v2437
        %v2606 = vpop.f32.mrb[0].mxu0
        %v2607 = vadd.f32 0.0, %v2606
        %v2608 = vpop.f32.mrb[0].mxu0
        %2609 = vmatprep.mubr.f32.mxu0 0.0
        %2610 = vmatmul.mubr.f32.gmra.mrb[0].mxu0 %v2439
        %v2611 = vpop.f32.mrb[0].mxu0
        %v2612 = vadd.f32 0.0, %v2611
        %v2613 = vpop.f32.mrb[0].mxu0
        %2614 = vmatprep.mubr.f32.mxu0 0.0
        %2615 = vmatmul.mubr.f32.gmra.mrb[0].mxu0 %v2441
        %v2616 = vpop.f32.mrb[0].mxu0
        %v2617 = vadd.f32 0.0, %v2616
        %v2618 = vpop.f32.mrb[0].mxu0
        %2619 = vdwg.mxu0
        %2620 = vmax.xlane.f32.xlu0 %v2542
        %v2621 = vpop.xlane.xlu0 %2620
        %2622 = vmax.xlane.f32.xlu0 %v2547
        %v2623 = vpop.xlane.xlu0 %2622
        %2624 = vmax.xlane.f32.xlu0 %v2552
        %v2625 = vpop.xlane.xlu0 %2624
        %2626 = vmax.xlane.f32.xlu0 %v2557
        %v2627 = vpop.xlane.xlu0 %2626
        %2628 = vmax.xlane.f32.xlu0 %v2562
        %v2629 = vpop.xlane.xlu0 %2628
        %2630 = vmax.xlane.f32.xlu0 %v2567
        %v2631 = vpop.xlane.xlu0 %2630
        %2632 = vmax.xlane.f32.xlu0 %v2572
        %v2633 = vpop.xlane.xlu0 %2632
        %2634 = vmax.xlane.f32.xlu0 %v2577
        %v2635 = vpop.xlane.xlu0 %2634
        %2636 = vmax.xlane.f32.xlu0 %v2582
        %v2637 = vpop.xlane.xlu0 %2636
        %2638 = vmax.xlane.f32.xlu0 %v2587
        %v2639 = vpop.xlane.xlu0 %2638
        %2640 = vmax.xlane.f32.xlu0 %v2592
        %v2641 = vpop.xlane.xlu0 %2640
        %2642 = vmax.xlane.f32.xlu0 %v2597
        %v2643 = vpop.xlane.xlu0 %2642
        %2644 = vmax.xlane.f32.xlu0 %v2602
        %v2645 = vpop.xlane.xlu0 %2644
        %2646 = vmax.xlane.f32.xlu0 %v2607
        %v2647 = vpop.xlane.xlu0 %2646
        %2648 = vmax.xlane.f32.xlu0 %v2612
        %v2649 = vpop.xlane.xlu0 %2648
        %2650 = vmax.xlane.f32.xlu0 %v2617
        %v2651 = vpop.xlane.xlu0 %2650
        %v2652 = vsub.f32 %v2542, %v2621
        %v2653 = vsub.f32 %v2547, %v2623
        %v2654 = vsub.f32 %v2552, %v2625
        %v2655 = vsub.f32 %v2557, %v2627
        %v2656 = vsub.f32 %v2562, %v2629
        %v2657 = vsub.f32 %v2567, %v2631
        %v2658 = vsub.f32 %v2572, %v2633
        %v2659 = vsub.f32 %v2577, %v2635
        %v2660 = vsub.f32 %v2582, %v2637
        %v2661 = vsub.f32 %v2587, %v2639
        %v2662 = vsub.f32 %v2592, %v2641
        %v2663 = vsub.f32 %v2597, %v2643
        %v2664 = vsub.f32 %v2602, %v2645
        %v2665 = vsub.f32 %v2607, %v2647
        %v2666 = vsub.f32 %v2612, %v2649
        %v2667 = vsub.f32 %v2617, %v2651
        %v2668 = vmul.f32 %v2652, 1.442695
        %v2669 = vpow.pop %v2668
        %v2670 = vmul.f32 %v2653, 1.442695
        %v2671 = vpow.pop %v2670
        %v2672 = vmul.f32 %v2654, 1.442695
        %v2673 = vpow.pop %v2672
        %v2674 = vmul.f32 %v2655, 1.442695
        %v2675 = vpow.pop %v2674
        %v2676 = vmul.f32 %v2656, 1.442695
        %v2677 = vpow.pop %v2676
        %v2678 = vmul.f32 %v2657, 1.442695
        %v2679 = vpow.pop %v2678
        %v2680 = vmul.f32 %v2658, 1.442695
        %v2681 = vpow.pop %v2680
        %v2682 = vmul.f32 %v2659, 1.442695
        %v2683 = vpow.pop %v2682
        %v2684 = vmul.f32 %v2660, 1.442695
        %v2685 = vpow.pop %v2684
        %v2686 = vmul.f32 %v2661, 1.442695
        %v2687 = vpow.pop %v2686
        %v2688 = vmul.f32 %v2662, 1.442695
        %v2689 = vpow.pop %v2688
        %v2690 = vmul.f32 %v2663, 1.442695
        %v2691 = vpow.pop %v2690
        %v2692 = vmul.f32 %v2664, 1.442695
        %v2693 = vpow.pop %v2692
        %v2694 = vmul.f32 %v2665, 1.442695
        %v2695 = vpow.pop %v2694
        %v2696 = vmul.f32 %v2666, 1.442695
        %v2697 = vpow.pop %v2696
        %v2698 = vmul.f32 %v2667, 1.442695
        %v2699 = vpow.pop %v2698
        %2700 = vadd.xlane.f32.xlu0 %v2669
        %v2701 = vpop.xlane.xlu0 %2700
        %2702 = vadd.xlane.f32.xlu0 %v2671
        %v2703 = vpop.xlane.xlu0 %2702
        %2704 = vadd.xlane.f32.xlu0 %v2673
        %v2705 = vpop.xlane.xlu0 %2704
        %2706 = vadd.xlane.f32.xlu0 %v2675
        %v2707 = vpop.xlane.xlu0 %2706
        %2708 = vadd.xlane.f32.xlu0 %v2677
        %v2709 = vpop.xlane.xlu0 %2708
        %2710 = vadd.xlane.f32.xlu0 %v2679
        %v2711 = vpop.xlane.xlu0 %2710
        %2712 = vadd.xlane.f32.xlu0 %v2681
        %v2713 = vpop.xlane.xlu0 %2712
        %2714 = vadd.xlane.f32.xlu0 %v2683
        %v2715 = vpop.xlane.xlu0 %2714
        %2716 = vadd.xlane.f32.xlu0 %v2685
        %v2717 = vpop.xlane.xlu0 %2716
        %2718 = vadd.xlane.f32.xlu0 %v2687
        %v2719 = vpop.xlane.xlu0 %2718
        %2720 = vadd.xlane.f32.xlu0 %v2689
        %v2721 = vpop.xlane.xlu0 %2720
        %2722 = vadd.xlane.f32.xlu0 %v2691
        %v2723 = vpop.xlane.xlu0 %2722
        %2724 = vadd.xlane.f32.xlu0 %v2693
        %v2725 = vpop.xlane.xlu0 %2724
        %2726 = vadd.xlane.f32.xlu0 %v2695
        %v2727 = vpop.xlane.xlu0 %2726
        %2728 = vadd.xlane.f32.xlu0 %v2697
        %v2729 = vpop.xlane.xlu0 %2728
        %2730 = vadd.xlane.f32.xlu0 %v2699
        %v2731 = vpop.xlane.xlu0 %2730
        %v2732 = vrcp.pop %v2701
        %v2733 = vmul.f32 %v2669, %v2732
        %v2734 = vrcp.pop %v2703
        %v2735 = vmul.f32 %v2671, %v2734
        %v2736 = vrcp.pop %v2705
        %v2737 = vmul.f32 %v2673, %v2736
        %v2738 = vrcp.pop %v2707
        %v2739 = vmul.f32 %v2675, %v2738
        %v2740 = vrcp.pop %v2709
        %v2741 = vmul.f32 %v2677, %v2740
        %v2742 = vrcp.pop %v2711
        %v2743 = vmul.f32 %v2679, %v2742
        %v2744 = vrcp.pop %v2713
        %v2745 = vmul.f32 %v2681, %v2744
        %v2746 = vrcp.pop %v2715
        %v2747 = vmul.f32 %v2683, %v2746
        %v2748 = vrcp.pop %v2717
        %v2749 = vmul.f32 %v2685, %v2748
        %v2750 = vrcp.pop %v2719
        %v2751 = vmul.f32 %v2687, %v2750
        %v2752 = vrcp.pop %v2721
        %v2753 = vmul.f32 %v2689, %v2752
        %v2754 = vrcp.pop %v2723
        %v2755 = vmul.f32 %v2691, %v2754
        %v2756 = vrcp.pop %v2725
        %v2757 = vmul.f32 %v2693, %v2756
        %v2758 = vrcp.pop %v2727
        %v2759 = vmul.f32 %v2695, %v2758
        %v2760 = vrcp.pop %v2729
        %v2761 = vmul.f32 %v2697, %v2760
        %v2762 = vrcp.pop %v2731
        %v2763 = vmul.f32 %v2699, %v2762
        %2764 = vrot.lane.b32.xlu0 %v1112, 64
        %v2765 = vpop.permute.xlu0 %2764
        %2766 = vrot.lane.b32.xlu0 %v1117, 64
        %v2767 = vpop.permute.xlu0 %2766
        %2768 = vrot.lane.b32.xlu0 %v1122, 64
        %v2769 = vpop.permute.xlu0 %2768
        %2770 = vrot.lane.b32.xlu0 %v1127, 64
        %v2771 = vpop.permute.xlu0 %2770
        %2772 = vrot.lane.b32.xlu0 %v1132, 64
        %v2773 = vpop.permute.xlu0 %2772
        %2774 = vrot.lane.b32.xlu0 %v1137, 64
        %v2775 = vpop.permute.xlu0 %2774
        %2776 = vrot.lane.b32.xlu0 %v1142, 64
        %v2777 = vpop.permute.xlu0 %2776
        %2778 = vrot.lane.b32.xlu0 %v1147, 64
        %v2779 = vpop.permute.xlu0 %2778
        %2780 = vrot.lane.b32.xlu0 %v1152, 64
        %v2781 = vpop.permute.xlu0 %2780
        %2782 = vrot.lane.b32.xlu0 %v1157, 64
        %v2783 = vpop.permute.xlu0 %2782
        %2784 = vrot.lane.b32.xlu0 %v1162, 64
        %v2785 = vpop.permute.xlu0 %2784
        %2786 = vrot.lane.b32.xlu0 %v1167, 64
        %v2787 = vpop.permute.xlu0 %2786
        %2788 = vrot.lane.b32.xlu0 %v1172, 64
        %v2789 = vpop.permute.xlu0 %2788
        %2790 = vrot.lane.b32.xlu0 %v1177, 64
        %v2791 = vpop.permute.xlu0 %2790
        %2792 = vrot.lane.b32.xlu0 %v1182, 64
        %v2793 = vpop.permute.xlu0 %2792
        %2794 = vrot.lane.b32.xlu0 %v1187, 64
        %v2795 = vpop.permute.xlu0 %2794
        %2812 = vmatprep.subr.mxu0 0.0
        %2813 = vmatpush1.msra.mxu0 %v2765
        %2814 = vmatprep.subr.mxu0 0.0
        %2815 = vmatpush1.msra.mxu0 %v2767
        %2816 = vmatprep.subr.mxu0 0.0
        %2817 = vmatpush1.msra.mxu0 %v2769
        %2818 = vmatprep.subr.mxu0 0.0
        %2819 = vmatpush1.msra.mxu0 %v2771
        %2820 = vmatprep.subr.mxu0 0.0
        %2821 = vmatpush1.msra.mxu0 %v2773
        %2822 = vmatprep.subr.mxu0 0.0
        %2823 = vmatpush1.msra.mxu0 %v2775
        %2824 = vmatprep.subr.mxu0 0.0
        %2825 = vmatpush1.msra.mxu0 %v2777
        %2826 = vmatprep.subr.mxu0 0.0
        %2827 = vmatpush1.msra.mxu0 %v2779
        %2828 = vmatprep.subr.mxu0 0.0
        %2829 = vmatpush1.msra.mxu0 %v2781
        %2830 = vmatprep.subr.mxu0 0.0
        %2831 = vmatpush1.msra.mxu0 %v2783
        %2832 = vmatprep.subr.mxu0 0.0
        %2833 = vmatpush1.msra.mxu0 %v2785
        %2834 = vmatprep.subr.mxu0 0.0
        %2835 = vmatpush1.msra.mxu0 %v2787
        %2836 = vmatprep.subr.mxu0 0.0
        %2837 = vmatpush1.msra.mxu0 %v2789
        %2838 = vmatprep.subr.mxu0 0.0
        %2839 = vmatpush1.msra.mxu0 %v2791
        %2840 = vmatprep.subr.mxu0 0.0
        %2841 = vmatpush1.msra.mxu0 %v2793
        %2842 = vmatprep.subr.mxu0 0.0
        %2843 = vmatpush1.msra.mxu0 %v2795
        %2844 = vmatprep.subr.mxu0 0.0
        %2845 = vmatpush1.msra.mxu0 0.0
        %2846 = vmatprep.subr.mxu0 0.0
        %2847 = vmatpush1.msra.mxu0 0.0
        %2848 = vmatprep.subr.mxu0 0.0
        %2849 = vmatpush1.msra.mxu0 0.0
        %2850 = vmatprep.subr.mxu0 0.0
        %2851 = vmatpush1.msra.mxu0 0.0
        %2852 = vmatprep.subr.mxu0 0.0
        %2853 = vmatpush1.msra.mxu0 0.0
        %2854 = vmatprep.subr.mxu0 0.0
        %2855 = vmatpush1.msra.mxu0 0.0
        %2856 = vmatprep.subr.mxu0 0.0
        %2857 = vmatpush1.msra.mxu0 0.0
        %2858 = vmatprep.subr.mxu0 0.0
        %2859 = vmatpush1.msra.mxu0 0.0
        %2860 = vmatprep.subr.mxu0 0.0
        %2861 = vmatpush1.msra.mxu0 0.0
        %2862 = vmatprep.subr.mxu0 0.0
        %2863 = vmatpush1.msra.mxu0 0.0
        %2864 = vmatprep.subr.mxu0 0.0
        %2865 = vmatpush1.msra.mxu0 0.0
        %2866 = vmatprep.subr.mxu0 0.0
        %2867 = vmatpush1.msra.mxu0 0.0
        %2868 = vmatprep.subr.mxu0 0.0
        %2869 = vmatpush1.msra.mxu0 0.0
        %2870 = vmatprep.subr.mxu0 0.0
        %2871 = vmatpush1.msra.mxu0 0.0
        %2872 = vmatprep.subr.mxu0 0.0
        %2873 = vmatpush1.msra.mxu0 0.0
        %2874 = vmatprep.subr.mxu0 0.0
        %2875 = vmatpush1.msra.mxu0 0.0
        %2876 = vmatprep.mubr.f32.mxu0 0.0
        %2877 = vmatmul.mubr.f32.gmra.mrb[0].mxu0 %v2733
        %v2878 = vpop.f32.mrb[0].mxu0
        %v2879 = vadd.f32 0.0, %v2878
        %v2880 = vpop.f32.mrb[0].mxu0
        %2881 = vmatprep.mubr.f32.mxu0 0.0
        %2882 = vmatmul.mubr.f32.gmra.mrb[0].mxu0 %v2735
        %v2883 = vpop.f32.mrb[0].mxu0
        %v2884 = vadd.f32 0.0, %v2883
        %v2885 = vpop.f32.mrb[0].mxu0
        %2886 = vmatprep.mubr.f32.mxu0 0.0
        %2887 = vmatmul.mubr.f32.gmra.mrb[0].mxu0 %v2737
        %v2888 = vpop.f32.mrb[0].mxu0
        %v2889 = vadd.f32 0.0, %v2888
        %v2890 = vpop.f32.mrb[0].mxu0
        %2891 = vmatprep.mubr.f32.mxu0 0.0
        %2892 = vmatmul.mubr.f32.gmra.mrb[0].mxu0 %v2739
        %v2893 = vpop.f32.mrb[0].mxu0
        %v2894 = vadd.f32 0.0, %v2893
        %v2895 = vpop.f32.mrb[0].mxu0
        %2896 = vmatprep.mubr.f32.mxu0 0.0
        %2897 = vmatmul.mubr.f32.gmra.mrb[0].mxu0 %v2741
        %v2898 = vpop.f32.mrb[0].mxu0
        %v2899 = vadd.f32 0.0, %v2898
        %v2900 = vpop.f32.mrb[0].mxu0
        %2901 = vmatprep.mubr.f32.mxu0 0.0
        %2902 = vmatmul.mubr.f32.gmra.mrb[0].mxu0 %v2743
        %v2903 = vpop.f32.mrb[0].mxu0
        %v2904 = vadd.f32 0.0, %v2903
        %v2905 = vpop.f32.mrb[0].mxu0
        %2906 = vmatprep.mubr.f32.mxu0 0.0
        %2907 = vmatmul.mubr.f32.gmra.mrb[0].mxu0 %v2745
        %v2908 = vpop.f32.mrb[0].mxu0
        %v2909 = vadd.f32 0.0, %v2908
        %v2910 = vpop.f32.mrb[0].mxu0
        %2911 = vmatprep.mubr.f32.mxu0 0.0
        %2912 = vmatmul.mubr.f32.gmra.mrb[0].mxu0 %v2747
        %v2913 = vpop.f32.mrb[0].mxu0
        %v2914 = vadd.f32 0.0, %v2913
        %v2915 = vpop.f32.mrb[0].mxu0
        %2916 = vmatprep.mubr.f32.mxu0 0.0
        %2917 = vmatmul.mubr.f32.gmra.mrb[0].mxu0 %v2749
        %v2918 = vpop.f32.mrb[0].mxu0
        %v2919 = vadd.f32 0.0, %v2918
        %v2920 = vpop.f32.mrb[0].mxu0
        %2921 = vmatprep.mubr.f32.mxu0 0.0
        %2922 = vmatmul.mubr.f32.gmra.mrb[0].mxu0 %v2751
        %v2923 = vpop.f32.mrb[0].mxu0
        %v2924 = vadd.f32 0.0, %v2923
        %v2925 = vpop.f32.mrb[0].mxu0
        %2926 = vmatprep.mubr.f32.mxu0 0.0
        %2927 = vmatmul.mubr.f32.gmra.mrb[0].mxu0 %v2753
        %v2928 = vpop.f32.mrb[0].mxu0
        %v2929 = vadd.f32 0.0, %v2928
        %v2930 = vpop.f32.mrb[0].mxu0
        %2931 = vmatprep.mubr.f32.mxu0 0.0
        %2932 = vmatmul.mubr.f32.gmra.mrb[0].mxu0 %v2755
        %v2933 = vpop.f32.mrb[0].mxu0
        %v2934 = vadd.f32 0.0, %v2933
        %v2935 = vpop.f32.mrb[0].mxu0
        %2936 = vmatprep.mubr.f32.mxu0 0.0
        %2937 = vmatmul.mubr.f32.gmra.mrb[0].mxu0 %v2757
        %v2938 = vpop.f32.mrb[0].mxu0
        %v2939 = vadd.f32 0.0, %v2938
        %v2940 = vpop.f32.mrb[0].mxu0
        %2941 = vmatprep.mubr.f32.mxu0 0.0
        %2942 = vmatmul.mubr.f32.gmra.mrb[0].mxu0 %v2759
        %v2943 = vpop.f32.mrb[0].mxu0
        %v2944 = vadd.f32 0.0, %v2943
        %v2945 = vpop.f32.mrb[0].mxu0
        %2946 = vmatprep.mubr.f32.mxu0 0.0
        %2947 = vmatmul.mubr.f32.gmra.mrb[0].mxu0 %v2761
        %v2948 = vpop.f32.mrb[0].mxu0
        %v2949 = vadd.f32 0.0, %v2948
        %v2950 = vpop.f32.mrb[0].mxu0
        %2951 = vmatprep.mubr.f32.mxu0 0.0
        %2952 = vmatmul.mubr.f32.gmra.mrb[0].mxu0 %v2763
        %v2953 = vpop.f32.mrb[0].mxu0
        %v2954 = vadd.f32 0.0, %v2953
        %v2955 = vpop.f32.mrb[0].mxu0
        %2956 = vdwg.mxu0
        %2957 = vrot.lane.b32.xlu0 %v776, 32
        %v2958 = vpop.permute.xlu0 %2957
        %2959 = vrot.lane.b32.xlu0 %v781, 32
        %v2960 = vpop.permute.xlu0 %2959
        %2961 = vrot.lane.b32.xlu0 %v786, 32
        %v2962 = vpop.permute.xlu0 %2961
        %2963 = vrot.lane.b32.xlu0 %v791, 32
        %v2964 = vpop.permute.xlu0 %2963
        %2965 = vrot.lane.b32.xlu0 %v796, 32
        %v2966 = vpop.permute.xlu0 %2965
        %2967 = vrot.lane.b32.xlu0 %v801, 32
        %v2968 = vpop.permute.xlu0 %2967
        %2969 = vrot.lane.b32.xlu0 %v806, 32
        %v2970 = vpop.permute.xlu0 %2969
        %2971 = vrot.lane.b32.xlu0 %v811, 32
        %v2972 = vpop.permute.xlu0 %2971
        %2973 = vrot.lane.b32.xlu0 %v816, 32
        %v2974 = vpop.permute.xlu0 %2973
        %2975 = vrot.lane.b32.xlu0 %v821, 32
        %v2976 = vpop.permute.xlu0 %2975
        %2977 = vrot.lane.b32.xlu0 %v826, 32
        %v2978 = vpop.permute.xlu0 %2977
        %2979 = vrot.lane.b32.xlu0 %v831, 32
        %v2980 = vpop.permute.xlu0 %2979
        %2981 = vrot.lane.b32.xlu0 %v836, 32
        %v2982 = vpop.permute.xlu0 %2981
        %2983 = vrot.lane.b32.xlu0 %v841, 32
        %v2984 = vpop.permute.xlu0 %2983
        %2985 = vrot.lane.b32.xlu0 %v846, 32
        %v2986 = vpop.permute.xlu0 %2985
        %2987 = vrot.lane.b32.xlu0 %v851, 32
        %v2988 = vpop.permute.xlu0 %2987
        %2989 = vrot.lane.b32.xlu0 %v944, 32
        %v2990 = vpop.permute.xlu0 %2989
        %2991 = vrot.lane.b32.xlu0 %v949, 32
        %v2992 = vpop.permute.xlu0 %2991
        %2993 = vrot.lane.b32.xlu0 %v954, 32
        %v2994 = vpop.permute.xlu0 %2993
        %2995 = vrot.lane.b32.xlu0 %v959, 32
        %v2996 = vpop.permute.xlu0 %2995
        %2997 = vrot.lane.b32.xlu0 %v964, 32
        %v2998 = vpop.permute.xlu0 %2997
        %2999 = vrot.lane.b32.xlu0 %v969, 32
        %v3000 = vpop.permute.xlu0 %2999
        %3001 = vrot.lane.b32.xlu0 %v974, 32
        %v3002 = vpop.permute.xlu0 %3001
        %3003 = vrot.lane.b32.xlu0 %v979, 32
        %v3004 = vpop.permute.xlu0 %3003
        %3005 = vrot.lane.b32.xlu0 %v984, 32
        %v3006 = vpop.permute.xlu0 %3005
        %3007 = vrot.lane.b32.xlu0 %v989, 32
        %v3008 = vpop.permute.xlu0 %3007
        %3009 = vrot.lane.b32.xlu0 %v994, 32
        %v3010 = vpop.permute.xlu0 %3009
        %3011 = vrot.lane.b32.xlu0 %v999, 32
        %v3012 = vpop.permute.xlu0 %3011
        %3013 = vrot.lane.b32.xlu0 %v1004, 32
        %v3014 = vpop.permute.xlu0 %3013
        %3015 = vrot.lane.b32.xlu0 %v1009, 32
        %v3016 = vpop.permute.xlu0 %3015
        %3017 = vrot.lane.b32.xlu0 %v1014, 32
        %v3018 = vpop.permute.xlu0 %3017
        %3019 = vrot.lane.b32.xlu0 %v1019, 32
        %v3020 = vpop.permute.xlu0 %3019
        %v3021 = vsel %vm1190, %v2958, 0
        %v3023 = vsel %vm1190, %v2960, 0
        %v3025 = vsel %vm1190, %v2962, 0
        %v3027 = vsel %vm1190, %v2964, 0
        %v3029 = vsel %vm1190, %v2966, 0
        %v3031 = vsel %vm1190, %v2968, 0
        %v3033 = vsel %vm1190, %v2970, 0
        %v3035 = vsel %vm1190, %v2972, 0
        %v3037 = vsel %vm1190, %v2974, 0
        %v3039 = vsel %vm1190, %v2976, 0
        %v3041 = vsel %vm1190, %v2978, 0
        %v3043 = vsel %vm1190, %v2980, 0
        %v3045 = vsel %vm1190, %v2982, 0
        %v3047 = vsel %vm1190, %v2984, 0
        %v3049 = vsel %vm1190, %v2986, 0
        %v3051 = vsel %vm1190, %v2988, 0
        %v3053 = vsel %vm1190, %v2990, 0
        %v3055 = vsel %vm1190, %v2992, 0
        %v3057 = vsel %vm1190, %v2994, 0
        %v3059 = vsel %vm1190, %v2996, 0
        %v3061 = vsel %vm1190, %v2998, 0
        %v3063 = vsel %vm1190, %v3000, 0
        %v3065 = vsel %vm1190, %v3002, 0
        %v3067 = vsel %vm1190, %v3004, 0
        %v3069 = vsel %vm1190, %v3006, 0
        %v3071 = vsel %vm1190, %v3008, 0
        %v3073 = vsel %vm1190, %v3010, 0
        %v3075 = vsel %vm1190, %v3012, 0
        %v3077 = vsel %vm1190, %v3014, 0
        %v3079 = vsel %vm1190, %v3016, 0
        %v3081 = vsel %vm1190, %v3018, 0
        %v3083 = vsel %vm1190, %v3020, 0
        %3085 = vmatprep.subr.mxu0 0.0
        %3086 = vmatpush1.xpose.msra.mxu0 %v3053
        %3087 = vmatprep.subr.mxu0 0.0
        %3088 = vmatpush1.xpose.msra.mxu0 %v3055
        %3089 = vmatprep.subr.mxu0 0.0
        %3090 = vmatpush1.xpose.msra.mxu0 %v3057
        %3091 = vmatprep.subr.mxu0 0.0
        %3092 = vmatpush1.xpose.msra.mxu0 %v3059
        %3093 = vmatprep.subr.mxu0 0.0
        %3094 = vmatpush1.xpose.msra.mxu0 %v3061
        %3095 = vmatprep.subr.mxu0 0.0
        %3096 = vmatpush1.xpose.msra.mxu0 %v3063
        %3097 = vmatprep.subr.mxu0 0.0
        %3098 = vmatpush1.xpose.msra.mxu0 %v3065
        %3099 = vmatprep.subr.mxu0 0.0
        %3100 = vmatpush1.xpose.msra.mxu0 %v3067
        %3101 = vmatprep.subr.mxu0 0.0
        %3102 = vmatpush1.xpose.msra.mxu0 %v3069
        %3103 = vmatprep.subr.mxu0 0.0
        %3104 = vmatpush1.xpose.msra.mxu0 %v3071
        %3105 = vmatprep.subr.mxu0 0.0
        %3106 = vmatpush1.xpose.msra.mxu0 %v3073
        %3107 = vmatprep.subr.mxu0 0.0
        %3108 = vmatpush1.xpose.msra.mxu0 %v3075
        %3109 = vmatprep.subr.mxu0 0.0
        %3110 = vmatpush1.xpose.msra.mxu0 %v3077
        %3111 = vmatprep.subr.mxu0 0.0
        %3112 = vmatpush1.xpose.msra.mxu0 %v3079
        %3113 = vmatprep.subr.mxu0 0.0
        %3114 = vmatpush1.xpose.msra.mxu0 %v3081
        %3115 = vmatprep.subr.mxu0 0.0
        %3116 = vmatpush1.xpose.msra.mxu0 %v3083
        %3117 = vmatprep.subr.mxu0 0.0
        %3118 = vmatpush1.xpose.msra.mxu0 0.0
        %3119 = vmatprep.subr.mxu0 0.0
        %3120 = vmatpush1.xpose.msra.mxu0 0.0
        %3121 = vmatprep.subr.mxu0 0.0
        %3122 = vmatpush1.xpose.msra.mxu0 0.0
        %3123 = vmatprep.subr.mxu0 0.0
        %3124 = vmatpush1.xpose.msra.mxu0 0.0
        %3125 = vmatprep.subr.mxu0 0.0
        %3126 = vmatpush1.xpose.msra.mxu0 0.0
        %3127 = vmatprep.subr.mxu0 0.0
        %3128 = vmatpush1.xpose.msra.mxu0 0.0
        %3129 = vmatprep.subr.mxu0 0.0
        %3130 = vmatpush1.xpose.msra.mxu0 0.0
        %3131 = vmatprep.subr.mxu0 0.0
        %3132 = vmatpush1.xpose.msra.mxu0 0.0
        %3133 = vmatprep.subr.mxu0 0.0
        %3134 = vmatpush1.xpose.msra.mxu0 0.0
        %3135 = vmatprep.subr.mxu0 0.0
        %3136 = vmatpush1.xpose.msra.mxu0 0.0
        %3137 = vmatprep.subr.mxu0 0.0
        %3138 = vmatpush1.xpose.msra.mxu0 0.0
        %3139 = vmatprep.subr.mxu0 0.0
        %3140 = vmatpush1.xpose.msra.mxu0 0.0
        %3141 = vmatprep.subr.mxu0 0.0
        %3142 = vmatpush1.xpose.msra.mxu0 0.0
        %3143 = vmatprep.subr.mxu0 0.0
        %3144 = vmatpush1.xpose.msra.mxu0 0.0
        %3145 = vmatprep.subr.mxu0 0.0
        %3146 = vmatpush1.xpose.msra.mxu0 0.0
        %3147 = vmatprep.subr.mxu0 0.0
        %3148 = vmatpush1.xpose.msra.mxu0 0.0
        %3149 = vmatprep.mubr.f32.mxu0 0.0
        %3150 = vmatmul.mubr.f32.gmra.mrb[0].mxu0 %v3021
        %v3151 = vpop.f32.mrb[0].mxu0
        %v3152 = vadd.f32 0.0, %v3151
        %v3153 = vpop.f32.mrb[0].mxu0
        %3154 = vmatprep.mubr.f32.mxu0 0.0
        %3155 = vmatmul.mubr.f32.gmra.mrb[0].mxu0 %v3023
        %v3156 = vpop.f32.mrb[0].mxu0
        %v3157 = vadd.f32 0.0, %v3156
        %v3158 = vpop.f32.mrb[0].mxu0
        %3159 = vmatprep.mubr.f32.mxu0 0.0
        %3160 = vmatmul.mubr.f32.gmra.mrb[0].mxu0 %v3025
        %v3161 = vpop.f32.mrb[0].mxu0
        %v3162 = vadd.f32 0.0, %v3161
        %v3163 = vpop.f32.mrb[0].mxu0
        %3164 = vmatprep.mubr.f32.mxu0 0.0
        %3165 = vmatmul.mubr.f32.gmra.mrb[0].mxu0 %v3027
        %v3166 = vpop.f32.mrb[0].mxu0
        %v3167 = vadd.f32 0.0, %v3166
        %v3168 = vpop.f32.mrb[0].mxu0
        %3169 = vmatprep.mubr.f32.mxu0 0.0
        %3170 = vmatmul.mubr.f32.gmra.mrb[0].mxu0 %v3029
        %v3171 = vpop.f32.mrb[0].mxu0
        %v3172 = vadd.f32 0.0, %v3171
        %v3173 = vpop.f32.mrb[0].mxu0
        %3174 = vmatprep.mubr.f32.mxu0 0.0
        %3175 = vmatmul.mubr.f32.gmra.mrb[0].mxu0 %v3031
        %v3176 = vpop.f32.mrb[0].mxu0
        %v3177 = vadd.f32 0.0, %v3176
        %v3178 = vpop.f32.mrb[0].mxu0
        %3179 = vmatprep.mubr.f32.mxu0 0.0
        %3180 = vmatmul.mubr.f32.gmra.mrb[0].mxu0 %v3033
        %v3181 = vpop.f32.mrb[0].mxu0
        %v3182 = vadd.f32 0.0, %v3181
        %v3183 = vpop.f32.mrb[0].mxu0
        %3184 = vmatprep.mubr.f32.mxu0 0.0
        %3185 = vmatmul.mubr.f32.gmra.mrb[0].mxu0 %v3035
        %v3186 = vpop.f32.mrb[0].mxu0
        %v3187 = vadd.f32 0.0, %v3186
        %v3188 = vpop.f32.mrb[0].mxu0
        %3189 = vmatprep.mubr.f32.mxu0 0.0
        %3190 = vmatmul.mubr.f32.gmra.mrb[0].mxu0 %v3037
        %v3191 = vpop.f32.mrb[0].mxu0
        %v3192 = vadd.f32 0.0, %v3191
        %v3193 = vpop.f32.mrb[0].mxu0
        %3194 = vmatprep.mubr.f32.mxu0 0.0
        %3195 = vmatmul.mubr.f32.gmra.mrb[0].mxu0 %v3039
        %v3196 = vpop.f32.mrb[0].mxu0
        %v3197 = vadd.f32 0.0, %v3196
        %v3198 = vpop.f32.mrb[0].mxu0
        %3199 = vmatprep.mubr.f32.mxu0 0.0
        %3200 = vmatmul.mubr.f32.gmra.mrb[0].mxu0 %v3041
        %v3201 = vpop.f32.mrb[0].mxu0
        %v3202 = vadd.f32 0.0, %v3201
        %v3203 = vpop.f32.mrb[0].mxu0
        %3204 = vmatprep.mubr.f32.mxu0 0.0
        %3205 = vmatmul.mubr.f32.gmra.mrb[0].mxu0 %v3043
        %v3206 = vpop.f32.mrb[0].mxu0
        %v3207 = vadd.f32 0.0, %v3206
        %v3208 = vpop.f32.mrb[0].mxu0
        %3209 = vmatprep.mubr.f32.mxu0 0.0
        %3210 = vmatmul.mubr.f32.gmra.mrb[0].mxu0 %v3045
        %v3211 = vpop.f32.mrb[0].mxu0
        %v3212 = vadd.f32 0.0, %v3211
        %v3213 = vpop.f32.mrb[0].mxu0
        %3214 = vmatprep.mubr.f32.mxu0 0.0
        %3215 = vmatmul.mubr.f32.gmra.mrb[0].mxu0 %v3047
        %v3216 = vpop.f32.mrb[0].mxu0
        %v3217 = vadd.f32 0.0, %v3216
        %v3218 = vpop.f32.mrb[0].mxu0
        %3219 = vmatprep.mubr.f32.mxu0 0.0
        %3220 = vmatmul.mubr.f32.gmra.mrb[0].mxu0 %v3049
        %v3221 = vpop.f32.mrb[0].mxu0
        %v3222 = vadd.f32 0.0, %v3221
        %v3223 = vpop.f32.mrb[0].mxu0
        %3224 = vmatprep.mubr.f32.mxu0 0.0
        %3225 = vmatmul.mubr.f32.gmra.mrb[0].mxu0 %v3051
        %v3226 = vpop.f32.mrb[0].mxu0
        %v3227 = vadd.f32 0.0, %v3226
        %v3228 = vpop.f32.mrb[0].mxu0
        %3229 = vdwg.mxu0
        %3230 = vmax.xlane.f32.xlu0 %v3152
        %v3231 = vpop.xlane.xlu0 %3230
        %3232 = vmax.xlane.f32.xlu0 %v3157
        %v3233 = vpop.xlane.xlu0 %3232
        %3234 = vmax.xlane.f32.xlu0 %v3162
        %v3235 = vpop.xlane.xlu0 %3234
        %3236 = vmax.xlane.f32.xlu0 %v3167
        %v3237 = vpop.xlane.xlu0 %3236
        %3238 = vmax.xlane.f32.xlu0 %v3172
        %v3239 = vpop.xlane.xlu0 %3238
        %3240 = vmax.xlane.f32.xlu0 %v3177
        %v3241 = vpop.xlane.xlu0 %3240
        %3242 = vmax.xlane.f32.xlu0 %v3182
        %v3243 = vpop.xlane.xlu0 %3242
        %3244 = vmax.xlane.f32.xlu0 %v3187
        %v3245 = vpop.xlane.xlu0 %3244
        %3246 = vmax.xlane.f32.xlu0 %v3192
        %v3247 = vpop.xlane.xlu0 %3246
        %3248 = vmax.xlane.f32.xlu0 %v3197
        %v3249 = vpop.xlane.xlu0 %3248
        %3250 = vmax.xlane.f32.xlu0 %v3202
        %v3251 = vpop.xlane.xlu0 %3250
        %3252 = vmax.xlane.f32.xlu0 %v3207
        %v3253 = vpop.xlane.xlu0 %3252
        %3254 = vmax.xlane.f32.xlu0 %v3212
        %v3255 = vpop.xlane.xlu0 %3254
        %3256 = vmax.xlane.f32.xlu0 %v3217
        %v3257 = vpop.xlane.xlu0 %3256
        %3258 = vmax.xlane.f32.xlu0 %v3222
        %v3259 = vpop.xlane.xlu0 %3258
        %3260 = vmax.xlane.f32.xlu0 %v3227
        %v3261 = vpop.xlane.xlu0 %3260
        %v3262 = vsub.f32 %v3152, %v3231
        %v3263 = vsub.f32 %v3157, %v3233
        %v3264 = vsub.f32 %v3162, %v3235
        %v3265 = vsub.f32 %v3167, %v3237
        %v3266 = vsub.f32 %v3172, %v3239
        %v3267 = vsub.f32 %v3177, %v3241
        %v3268 = vsub.f32 %v3182, %v3243
        %v3269 = vsub.f32 %v3187, %v3245
        %v3270 = vsub.f32 %v3192, %v3247
        %v3271 = vsub.f32 %v3197, %v3249
        %v3272 = vsub.f32 %v3202, %v3251
        %v3273 = vsub.f32 %v3207, %v3253
        %v3274 = vsub.f32 %v3212, %v3255
        %v3275 = vsub.f32 %v3217, %v3257
        %v3276 = vsub.f32 %v3222, %v3259
        %v3277 = vsub.f32 %v3227, %v3261
        %v3278 = vmul.f32 %v3262, 1.442695
        %v3279 = vpow.pop %v3278
        %v3280 = vmul.f32 %v3263, 1.442695
        %v3281 = vpow.pop %v3280
        %v3282 = vmul.f32 %v3264, 1.442695
        %v3283 = vpow.pop %v3282
        %v3284 = vmul.f32 %v3265, 1.442695
        %v3285 = vpow.pop %v3284
        %v3286 = vmul.f32 %v3266, 1.442695
        %v3287 = vpow.pop %v3286
        %v3288 = vmul.f32 %v3267, 1.442695
        %v3289 = vpow.pop %v3288
        %v3290 = vmul.f32 %v3268, 1.442695
        %v3291 = vpow.pop %v3290
        %v3292 = vmul.f32 %v3269, 1.442695
        %v3293 = vpow.pop %v3292
        %v3294 = vmul.f32 %v3270, 1.442695
        %v3295 = vpow.pop %v3294
        %v3296 = vmul.f32 %v3271, 1.442695
        %v3297 = vpow.pop %v3296
        %v3298 = vmul.f32 %v3272, 1.442695
        %v3299 = vpow.pop %v3298
        %v3300 = vmul.f32 %v3273, 1.442695
        %v3301 = vpow.pop %v3300
        %v3302 = vmul.f32 %v3274, 1.442695
        %v3303 = vpow.pop %v3302
        %v3304 = vmul.f32 %v3275, 1.442695
        %v3305 = vpow.pop %v3304
        %v3306 = vmul.f32 %v3276, 1.442695
        %v3307 = vpow.pop %v3306
        %v3308 = vmul.f32 %v3277, 1.442695
        %v3309 = vpow.pop %v3308
        %3310 = vadd.xlane.f32.xlu0 %v3279
        %v3311 = vpop.xlane.xlu0 %3310
        %3312 = vadd.xlane.f32.xlu0 %v3281
        %v3313 = vpop.xlane.xlu0 %3312
        %3314 = vadd.xlane.f32.xlu0 %v3283
        %v3315 = vpop.xlane.xlu0 %3314
        %3316 = vadd.xlane.f32.xlu0 %v3285
        %v3317 = vpop.xlane.xlu0 %3316
        %3318 = vadd.xlane.f32.xlu0 %v3287
        %v3319 = vpop.xlane.xlu0 %3318
        %3320 = vadd.xlane.f32.xlu0 %v3289
        %v3321 = vpop.xlane.xlu0 %3320
        %3322 = vadd.xlane.f32.xlu0 %v3291
        %v3323 = vpop.xlane.xlu0 %3322
        %3324 = vadd.xlane.f32.xlu0 %v3293
        %v3325 = vpop.xlane.xlu0 %3324
        %3326 = vadd.xlane.f32.xlu0 %v3295
        %v3327 = vpop.xlane.xlu0 %3326
        %3328 = vadd.xlane.f32.xlu0 %v3297
        %v3329 = vpop.xlane.xlu0 %3328
        %3330 = vadd.xlane.f32.xlu0 %v3299
        %v3331 = vpop.xlane.xlu0 %3330
        %3332 = vadd.xlane.f32.xlu0 %v3301
        %v3333 = vpop.xlane.xlu0 %3332
        %3334 = vadd.xlane.f32.xlu0 %v3303
        %v3335 = vpop.xlane.xlu0 %3334
        %3336 = vadd.xlane.f32.xlu0 %v3305
        %v3337 = vpop.xlane.xlu0 %3336
        %3338 = vadd.xlane.f32.xlu0 %v3307
        %v3339 = vpop.xlane.xlu0 %3338
        %3340 = vadd.xlane.f32.xlu0 %v3309
        %v3341 = vpop.xlane.xlu0 %3340
        %v3342 = vrcp.pop %v3311
        %v3343 = vmul.f32 %v3279, %v3342
        %v3344 = vrcp.pop %v3313
        %v3345 = vmul.f32 %v3281, %v3344
        %v3346 = vrcp.pop %v3315
        %v3347 = vmul.f32 %v3283, %v3346
        %v3348 = vrcp.pop %v3317
        %v3349 = vmul.f32 %v3285, %v3348
        %v3350 = vrcp.pop %v3319
        %v3351 = vmul.f32 %v3287, %v3350
        %v3352 = vrcp.pop %v3321
        %v3353 = vmul.f32 %v3289, %v3352
        %v3354 = vrcp.pop %v3323
        %v3355 = vmul.f32 %v3291, %v3354
        %v3356 = vrcp.pop %v3325
        %v3357 = vmul.f32 %v3293, %v3356
        %v3358 = vrcp.pop %v3327
        %v3359 = vmul.f32 %v3295, %v3358
        %v3360 = vrcp.pop %v3329
        %v3361 = vmul.f32 %v3297, %v3360
        %v3362 = vrcp.pop %v3331
        %v3363 = vmul.f32 %v3299, %v3362
        %v3364 = vrcp.pop %v3333
        %v3365 = vmul.f32 %v3301, %v3364
        %v3366 = vrcp.pop %v3335
        %v3367 = vmul.f32 %v3303, %v3366
        %v3368 = vrcp.pop %v3337
        %v3369 = vmul.f32 %v3305, %v3368
        %v3370 = vrcp.pop %v3339
        %v3371 = vmul.f32 %v3307, %v3370
        %v3372 = vrcp.pop %v3341
        %v3373 = vmul.f32 %v3309, %v3372
        %3374 = vrot.lane.b32.xlu0 %v1112, 32
        %v3375 = vpop.permute.xlu0 %3374
        %3376 = vrot.lane.b32.xlu0 %v1117, 32
        %v3377 = vpop.permute.xlu0 %3376
        %3378 = vrot.lane.b32.xlu0 %v1122, 32
        %v3379 = vpop.permute.xlu0 %3378
        %3380 = vrot.lane.b32.xlu0 %v1127, 32
        %v3381 = vpop.permute.xlu0 %3380
        %3382 = vrot.lane.b32.xlu0 %v1132, 32
        %v3383 = vpop.permute.xlu0 %3382
        %3384 = vrot.lane.b32.xlu0 %v1137, 32
        %v3385 = vpop.permute.xlu0 %3384
        %3386 = vrot.lane.b32.xlu0 %v1142, 32
        %v3387 = vpop.permute.xlu0 %3386
        %3388 = vrot.lane.b32.xlu0 %v1147, 32
        %v3389 = vpop.permute.xlu0 %3388
        %3390 = vrot.lane.b32.xlu0 %v1152, 32
        %v3391 = vpop.permute.xlu0 %3390
        %3392 = vrot.lane.b32.xlu0 %v1157, 32
        %v3393 = vpop.permute.xlu0 %3392
        %3394 = vrot.lane.b32.xlu0 %v1162, 32
        %v3395 = vpop.permute.xlu0 %3394
        %3396 = vrot.lane.b32.xlu0 %v1167, 32
        %v3397 = vpop.permute.xlu0 %3396
        %3398 = vrot.lane.b32.xlu0 %v1172, 32
        %v3399 = vpop.permute.xlu0 %3398
        %3400 = vrot.lane.b32.xlu0 %v1177, 32
        %v3401 = vpop.permute.xlu0 %3400
        %3402 = vrot.lane.b32.xlu0 %v1182, 32
        %v3403 = vpop.permute.xlu0 %3402
        %3404 = vrot.lane.b32.xlu0 %v1187, 32
        %v3405 = vpop.permute.xlu0 %3404
        %3422 = vmatprep.subr.mxu0 0.0
        %3423 = vmatpush1.msra.mxu0 %v3375
        %3424 = vmatprep.subr.mxu0 0.0
        %3425 = vmatpush1.msra.mxu0 %v3377
        %3426 = vmatprep.subr.mxu0 0.0
        %3427 = vmatpush1.msra.mxu0 %v3379
        %3428 = vmatprep.subr.mxu0 0.0
        %3429 = vmatpush1.msra.mxu0 %v3381
        %3430 = vmatprep.subr.mxu0 0.0
        %3431 = vmatpush1.msra.mxu0 %v3383
        %3432 = vmatprep.subr.mxu0 0.0
        %3433 = vmatpush1.msra.mxu0 %v3385
        %3434 = vmatprep.subr.mxu0 0.0
        %3435 = vmatpush1.msra.mxu0 %v3387
        %3436 = vmatprep.subr.mxu0 0.0
        %3437 = vmatpush1.msra.mxu0 %v3389
        %3438 = vmatprep.subr.mxu0 0.0
        %3439 = vmatpush1.msra.mxu0 %v3391
        %3440 = vmatprep.subr.mxu0 0.0
        %3441 = vmatpush1.msra.mxu0 %v3393
        %3442 = vmatprep.subr.mxu0 0.0
        %3443 = vmatpush1.msra.mxu0 %v3395
        %3444 = vmatprep.subr.mxu0 0.0
        %3445 = vmatpush1.msra.mxu0 %v3397
        %3446 = vmatprep.subr.mxu0 0.0
        %3447 = vmatpush1.msra.mxu0 %v3399
        %3448 = vmatprep.subr.mxu0 0.0
        %3449 = vmatpush1.msra.mxu0 %v3401
        %3450 = vmatprep.subr.mxu0 0.0
        %3451 = vmatpush1.msra.mxu0 %v3403
        %3452 = vmatprep.subr.mxu0 0.0
        %3453 = vmatpush1.msra.mxu0 %v3405
        %3454 = vmatprep.subr.mxu0 0.0
        %3455 = vmatpush1.msra.mxu0 0.0
        %3456 = vmatprep.subr.mxu0 0.0
        %3457 = vmatpush1.msra.mxu0 0.0
        %3458 = vmatprep.subr.mxu0 0.0
        %3459 = vmatpush1.msra.mxu0 0.0
        %3460 = vmatprep.subr.mxu0 0.0
        %3461 = vmatpush1.msra.mxu0 0.0
        %3462 = vmatprep.subr.mxu0 0.0
        %3463 = vmatpush1.msra.mxu0 0.0
        %3464 = vmatprep.subr.mxu0 0.0
        %3465 = vmatpush1.msra.mxu0 0.0
        %3466 = vmatprep.subr.mxu0 0.0
        %3467 = vmatpush1.msra.mxu0 0.0
        %3468 = vmatprep.subr.mxu0 0.0
        %3469 = vmatpush1.msra.mxu0 0.0
        %3470 = vmatprep.subr.mxu0 0.0
        %3471 = vmatpush1.msra.mxu0 0.0
        %3472 = vmatprep.subr.mxu0 0.0
        %3473 = vmatpush1.msra.mxu0 0.0
        %3474 = vmatprep.subr.mxu0 0.0
        %3475 = vmatpush1.msra.mxu0 0.0
        %3476 = vmatprep.subr.mxu0 0.0
        %3477 = vmatpush1.msra.mxu0 0.0
        %3478 = vmatprep.subr.mxu0 0.0
        %3479 = vmatpush1.msra.mxu0 0.0
        %3480 = vmatprep.subr.mxu0 0.0
        %3481 = vmatpush1.msra.mxu0 0.0
        %3482 = vmatprep.subr.mxu0 0.0
        %3483 = vmatpush1.msra.mxu0 0.0
        %3484 = vmatprep.subr.mxu0 0.0
        %3485 = vmatpush1.msra.mxu0 0.0
        %3486 = vmatprep.mubr.f32.mxu0 0.0
        %3487 = vmatmul.mubr.f32.gmra.mrb[0].mxu0 %v3343
        %v3488 = vpop.f32.mrb[0].mxu0
        %v3489 = vadd.f32 0.0, %v3488
        %v3490 = vpop.f32.mrb[0].mxu0
        %3491 = vmatprep.mubr.f32.mxu0 0.0
        %3492 = vmatmul.mubr.f32.gmra.mrb[0].mxu0 %v3345
        %v3493 = vpop.f32.mrb[0].mxu0
        %v3494 = vadd.f32 0.0, %v3493
        %v3495 = vpop.f32.mrb[0].mxu0
        %3496 = vmatprep.mubr.f32.mxu0 0.0
        %3497 = vmatmul.mubr.f32.gmra.mrb[0].mxu0 %v3347
        %v3498 = vpop.f32.mrb[0].mxu0
        %v3499 = vadd.f32 0.0, %v3498
        %v3500 = vpop.f32.mrb[0].mxu0
        %3501 = vmatprep.mubr.f32.mxu0 0.0
        %3502 = vmatmul.mubr.f32.gmra.mrb[0].mxu0 %v3349
        %v3503 = vpop.f32.mrb[0].mxu0
        %v3504 = vadd.f32 0.0, %v3503
        %v3505 = vpop.f32.mrb[0].mxu0
        %3506 = vmatprep.mubr.f32.mxu0 0.0
        %3507 = vmatmul.mubr.f32.gmra.mrb[0].mxu0 %v3351
        %v3508 = vpop.f32.mrb[0].mxu0
        %v3509 = vadd.f32 0.0, %v3508
        %v3510 = vpop.f32.mrb[0].mxu0
        %3511 = vmatprep.mubr.f32.mxu0 0.0
        %3512 = vmatmul.mubr.f32.gmra.mrb[0].mxu0 %v3353
        %v3513 = vpop.f32.mrb[0].mxu0
        %v3514 = vadd.f32 0.0, %v3513
        %v3515 = vpop.f32.mrb[0].mxu0
        %3516 = vmatprep.mubr.f32.mxu0 0.0
        %3517 = vmatmul.mubr.f32.gmra.mrb[0].mxu0 %v3355
        %v3518 = vpop.f32.mrb[0].mxu0
        %v3519 = vadd.f32 0.0, %v3518
        %v3520 = vpop.f32.mrb[0].mxu0
        %3521 = vmatprep.mubr.f32.mxu0 0.0
        %3522 = vmatmul.mubr.f32.gmra.mrb[0].mxu0 %v3357
        %v3523 = vpop.f32.mrb[0].mxu0
        %v3524 = vadd.f32 0.0, %v3523
        %v3525 = vpop.f32.mrb[0].mxu0
        %3526 = vmatprep.mubr.f32.mxu0 0.0
        %3527 = vmatmul.mubr.f32.gmra.mrb[0].mxu0 %v3359
        %v3528 = vpop.f32.mrb[0].mxu0
        %v3529 = vadd.f32 0.0, %v3528
        %v3530 = vpop.f32.mrb[0].mxu0
        %3531 = vmatprep.mubr.f32.mxu0 0.0
        %3532 = vmatmul.mubr.f32.gmra.mrb[0].mxu0 %v3361
        %v3533 = vpop.f32.mrb[0].mxu0
        %v3534 = vadd.f32 0.0, %v3533
        %v3535 = vpop.f32.mrb[0].mxu0
        %3536 = vmatprep.mubr.f32.mxu0 0.0
        %3537 = vmatmul.mubr.f32.gmra.mrb[0].mxu0 %v3363
        %v3538 = vpop.f32.mrb[0].mxu0
        %v3539 = vadd.f32 0.0, %v3538
        %v3540 = vpop.f32.mrb[0].mxu0
        %3541 = vmatprep.mubr.f32.mxu0 0.0
        %3542 = vmatmul.mubr.f32.gmra.mrb[0].mxu0 %v3365
        %v3543 = vpop.f32.mrb[0].mxu0
        %v3544 = vadd.f32 0.0, %v3543
        %v3545 = vpop.f32.mrb[0].mxu0
        %3546 = vmatprep.mubr.f32.mxu0 0.0
        %3547 = vmatmul.mubr.f32.gmra.mrb[0].mxu0 %v3367
        %v3548 = vpop.f32.mrb[0].mxu0
        %v3549 = vadd.f32 0.0, %v3548
        %v3550 = vpop.f32.mrb[0].mxu0
        %3551 = vmatprep.mubr.f32.mxu0 0.0
        %3552 = vmatmul.mubr.f32.gmra.mrb[0].mxu0 %v3369
        %v3553 = vpop.f32.mrb[0].mxu0
        %v3554 = vadd.f32 0.0, %v3553
        %v3555 = vpop.f32.mrb[0].mxu0
        %3556 = vmatprep.mubr.f32.mxu0 0.0
        %3557 = vmatmul.mubr.f32.gmra.mrb[0].mxu0 %v3371
        %v3558 = vpop.f32.mrb[0].mxu0
        %v3559 = vadd.f32 0.0, %v3558
        %v3560 = vpop.f32.mrb[0].mxu0
        %3561 = vmatprep.mubr.f32.mxu0 0.0
        %3562 = vmatmul.mubr.f32.gmra.mrb[0].mxu0 %v3373
        %v3563 = vpop.f32.mrb[0].mxu0
        %v3564 = vadd.f32 0.0, %v3563
        %v3565 = vpop.f32.mrb[0].mxu0
        %3566 = vdwg.mxu0
        %3583 = vrot.lane.b32.xlu0 %v2269, 32
        %v3584 = vpop.permute.xlu0 %3583
        %3585 = vrot.lane.b32.xlu0 %v2274, 32
        %v3586 = vpop.permute.xlu0 %3585
        %3587 = vrot.lane.b32.xlu0 %v2279, 32
        %v3588 = vpop.permute.xlu0 %3587
        %3589 = vrot.lane.b32.xlu0 %v2284, 32
        %v3590 = vpop.permute.xlu0 %3589
        %3591 = vrot.lane.b32.xlu0 %v2289, 32
        %v3592 = vpop.permute.xlu0 %3591
        %3593 = vrot.lane.b32.xlu0 %v2294, 32
        %v3594 = vpop.permute.xlu0 %3593
        %3595 = vrot.lane.b32.xlu0 %v2299, 32
        %v3596 = vpop.permute.xlu0 %3595
        %3597 = vrot.lane.b32.xlu0 %v2304, 32
        %v3598 = vpop.permute.xlu0 %3597
        %3599 = vrot.lane.b32.xlu0 %v2309, 32
        %v3600 = vpop.permute.xlu0 %3599
        %3601 = vrot.lane.b32.xlu0 %v2314, 32
        %v3602 = vpop.permute.xlu0 %3601
        %3603 = vrot.lane.b32.xlu0 %v2319, 32
        %v3604 = vpop.permute.xlu0 %3603
        %3605 = vrot.lane.b32.xlu0 %v2324, 32
        %v3606 = vpop.permute.xlu0 %3605
        %3607 = vrot.lane.b32.xlu0 %v2329, 32
        %v3608 = vpop.permute.xlu0 %3607
        %3609 = vrot.lane.b32.xlu0 %v2334, 32
        %v3610 = vpop.permute.xlu0 %3609
        %3611 = vrot.lane.b32.xlu0 %v2339, 32
        %v3612 = vpop.permute.xlu0 %3611
        %3613 = vrot.lane.b32.xlu0 %v2344, 32
        %v3614 = vpop.permute.xlu0 %3613
        %3647 = vrot.lane.b32.xlu0 %v2879, 64
        %v3648 = vpop.permute.xlu0 %3647
        %3649 = vrot.lane.b32.xlu0 %v2884, 64
        %v3650 = vpop.permute.xlu0 %3649
        %3651 = vrot.lane.b32.xlu0 %v2889, 64
        %v3652 = vpop.permute.xlu0 %3651
        %3653 = vrot.lane.b32.xlu0 %v2894, 64
        %v3654 = vpop.permute.xlu0 %3653
        %3655 = vrot.lane.b32.xlu0 %v2899, 64
        %v3656 = vpop.permute.xlu0 %3655
        %3657 = vrot.lane.b32.xlu0 %v2904, 64
        %v3658 = vpop.permute.xlu0 %3657
        %3659 = vrot.lane.b32.xlu0 %v2909, 64
        %v3660 = vpop.permute.xlu0 %3659
        %3661 = vrot.lane.b32.xlu0 %v2914, 64
        %v3662 = vpop.permute.xlu0 %3661
        %3663 = vrot.lane.b32.xlu0 %v2919, 64
        %v3664 = vpop.permute.xlu0 %3663
        %3665 = vrot.lane.b32.xlu0 %v2924, 64
        %v3666 = vpop.permute.xlu0 %3665
        %3667 = vrot.lane.b32.xlu0 %v2929, 64
        %v3668 = vpop.permute.xlu0 %3667
        %3669 = vrot.lane.b32.xlu0 %v2934, 64
        %v3670 = vpop.permute.xlu0 %3669
        %3671 = vrot.lane.b32.xlu0 %v2939, 64
        %v3672 = vpop.permute.xlu0 %3671
        %3673 = vrot.lane.b32.xlu0 %v2944, 64
        %v3674 = vpop.permute.xlu0 %3673
        %3675 = vrot.lane.b32.xlu0 %v2949, 64
        %v3676 = vpop.permute.xlu0 %3675
        %3677 = vrot.lane.b32.xlu0 %v2954, 64
        %v3678 = vpop.permute.xlu0 %3677
        %3711 = vrot.lane.b32.xlu0 %v3489, 96
        %v3712 = vpop.permute.xlu0 %3711
        %3713 = vrot.lane.b32.xlu0 %v3494, 96
        %v3714 = vpop.permute.xlu0 %3713
        %3715 = vrot.lane.b32.xlu0 %v3499, 96
        %v3716 = vpop.permute.xlu0 %3715
        %3717 = vrot.lane.b32.xlu0 %v3504, 96
        %v3718 = vpop.permute.xlu0 %3717
        %3719 = vrot.lane.b32.xlu0 %v3509, 96
        %v3720 = vpop.permute.xlu0 %3719
        %3721 = vrot.lane.b32.xlu0 %v3514, 96
        %v3722 = vpop.permute.xlu0 %3721
        %3723 = vrot.lane.b32.xlu0 %v3519, 96
        %v3724 = vpop.permute.xlu0 %3723
        %3725 = vrot.lane.b32.xlu0 %v3524, 96
        %v3726 = vpop.permute.xlu0 %3725
        %3727 = vrot.lane.b32.xlu0 %v3529, 96
        %v3728 = vpop.permute.xlu0 %3727
        %3729 = vrot.lane.b32.xlu0 %v3534, 96
        %v3730 = vpop.permute.xlu0 %3729
        %3731 = vrot.lane.b32.xlu0 %v3539, 96
        %v3732 = vpop.permute.xlu0 %3731
        %3733 = vrot.lane.b32.xlu0 %v3544, 96
        %v3734 = vpop.permute.xlu0 %3733
        %3735 = vrot.lane.b32.xlu0 %v3549, 96
        %v3736 = vpop.permute.xlu0 %3735
        %3737 = vrot.lane.b32.xlu0 %v3554, 96
        %v3738 = vpop.permute.xlu0 %3737
        %3739 = vrot.lane.b32.xlu0 %v3559, 96
        %v3740 = vpop.permute.xlu0 %3739
        %3741 = vrot.lane.b32.xlu0 %v3564, 96
        %v3742 = vpop.permute.xlu0 %3741
        %v3759 = vsel %vm1190, %v1643, %v3584
        %v3760 = vsel %vm1190, %v1648, %v3586
        %v3761 = vsel %vm1190, %v1653, %v3588
        %v3762 = vsel %vm1190, %v1658, %v3590
        %v3763 = vsel %vm1190, %v1663, %v3592
        %v3764 = vsel %vm1190, %v1668, %v3594
        %v3765 = vsel %vm1190, %v1673, %v3596
        %v3766 = vsel %vm1190, %v1678, %v3598
        %v3767 = vsel %vm1190, %v1683, %v3600
        %v3768 = vsel %vm1190, %v1688, %v3602
        %v3769 = vsel %vm1190, %v1693, %v3604
        %v3770 = vsel %vm1190, %v1698, %v3606
        %v3771 = vsel %vm1190, %v1703, %v3608
        %v3772 = vsel %vm1190, %v1708, %v3610
        %v3773 = vsel %vm1190, %v1713, %v3612
        %v3774 = vsel %vm1190, %v1718, %v3614
        %vm3775 = vcmask 523264
        %v3776 = vsel %vm3775, %v3759, %v3648
        %v3777 = vsel %vm3775, %v3760, %v3650
        %v3778 = vsel %vm3775, %v3761, %v3652
        %v3779 = vsel %vm3775, %v3762, %v3654
        %v3780 = vsel %vm3775, %v3763, %v3656
        %v3781 = vsel %vm3775, %v3764, %v3658
        %v3782 = vsel %vm3775, %v3765, %v3660
        %v3783 = vsel %vm3775, %v3766, %v3662
        %v3784 = vsel %vm3775, %v3767, %v3664
        %v3785 = vsel %vm3775, %v3768, %v3666
        %v3786 = vsel %vm3775, %v3769, %v3668
        %v3787 = vsel %vm3775, %v3770, %v3670
        %v3788 = vsel %vm3775, %v3771, %v3672
        %v3789 = vsel %vm3775, %v3772, %v3674
        %v3790 = vsel %vm3775, %v3773, %v3676
        %v3791 = vsel %vm3775, %v3774, %v3678
        %vm3792 = vcmask 785408
        %v3793 = vsel %vm3792, %v3776, %v3712
        %v3794 = vsel %vm3792, %v3777, %v3714
        %v3795 = vsel %vm3792, %v3778, %v3716
        %v3796 = vsel %vm3792, %v3779, %v3718
        %v3797 = vsel %vm3792, %v3780, %v3720
        %v3798 = vsel %vm3792, %v3781, %v3722
        %v3799 = vsel %vm3792, %v3782, %v3724
        %v3800 = vsel %vm3792, %v3783, %v3726
        %v3801 = vsel %vm3792, %v3784, %v3728
        %v3802 = vsel %vm3792, %v3785, %v3730
        %v3803 = vsel %vm3792, %v3786, %v3732
        %v3804 = vsel %vm3792, %v3787, %v3734
        %v3805 = vsel %vm3792, %v3788, %v3736
        %v3806 = vsel %vm3792, %v3789, %v3738
        %v3807 = vsel %vm3792, %v3790, %v3740
        %v3808 = vsel %vm3792, %v3791, %v3742
        %v3809 = vld [vmem:[#allocation11] sm:$0xff]
        %v3810 = vld [vmem:[#allocation11 + $0x8] sm:$0xff]
        %v3811 = vld [vmem:[#allocation11 + $0x10] sm:$0xff]
        %v3812 = vld [vmem:[#allocation11 + $0x18] sm:$0xff]
        %v3813 = vld [vmem:[#allocation11 + $0x20] sm:$0xff]
        %v3814 = vld [vmem:[#allocation11 + $0x28] sm:$0xff]
        %v3815 = vld [vmem:[#allocation11 + $0x30] sm:$0xff]
        %v3816 = vld [vmem:[#allocation11 + $0x38] sm:$0xff]
        %v3817 = vld [vmem:[#allocation11 + $0x40] sm:$0xff]
        %v3818 = vld [vmem:[#allocation11 + $0x48] sm:$0xff]
        %v3819 = vld [vmem:[#allocation11 + $0x50] sm:$0xff]
        %v3820 = vld [vmem:[#allocation11 + $0x58] sm:$0xff]
        %v3821 = vld [vmem:[#allocation11 + $0x60] sm:$0xff]
        %v3822 = vld [vmem:[#allocation11 + $0x68] sm:$0xff]
        %v3823 = vld [vmem:[#allocation11 + $0x70] sm:$0xff]
        %v3824 = vld [vmem:[#allocation11 + $0x78] sm:$0xff]
        %v3825 = vld [vmem:[%s9] sm:$0x1]
        %v3827 = vlaneseq
        %v3828 = vshrl.u32 %v3827, 7
        %v3829 = vsub.s32 0, %v3828
        %v3830 = vrot.slane %v3825, %v3829
        %3832 = vmatprep.subr.mxu0 0.0
        %3833 = vmatpush1.msra.mxu0 %v3809
        %3834 = vmatprep.subr.mxu0 0.0
        %3835 = vmatpush1.msra.mxu0 %v3810
        %3836 = vmatprep.subr.mxu0 0.0
        %3837 = vmatpush1.msra.mxu0 %v3811
        %3838 = vmatprep.subr.mxu0 0.0
        %3839 = vmatpush1.msra.mxu0 %v3812
        %3840 = vmatprep.subr.mxu0 0.0
        %3841 = vmatpush1.msra.mxu0 %v3813
        %3842 = vmatprep.subr.mxu0 0.0
        %3843 = vmatpush1.msra.mxu0 %v3814
        %3844 = vmatprep.subr.mxu0 0.0
        %3845 = vmatpush1.msra.mxu0 %v3815
        %3846 = vmatprep.subr.mxu0 0.0
        %3847 = vmatpush1.msra.mxu0 %v3816
        %3848 = vmatprep.subr.mxu0 0.0
        %3849 = vmatpush1.msra.mxu0 %v3817
        %3850 = vmatprep.subr.mxu0 0.0
        %3851 = vmatpush1.msra.mxu0 %v3818
        %3852 = vmatprep.subr.mxu0 0.0
        %3853 = vmatpush1.msra.mxu0 %v3819
        %3854 = vmatprep.subr.mxu0 0.0
        %3855 = vmatpush1.msra.mxu0 %v3820
        %3856 = vmatprep.subr.mxu0 0.0
        %3857 = vmatpush1.msra.mxu0 %v3821
        %3858 = vmatprep.subr.mxu0 0.0
        %3859 = vmatpush1.msra.mxu0 %v3822
        %3860 = vmatprep.subr.mxu0 0.0
        %3861 = vmatpush1.msra.mxu0 %v3823
        %3862 = vmatprep.subr.mxu0 0.0
        %3863 = vmatpush1.msra.mxu0 %v3824
        %3864 = vmatprep.subr.mxu0 0.0
        %3865 = vmatpush1.msra.mxu0 0.0
        %3866 = vmatprep.subr.mxu0 0.0
        %3867 = vmatpush1.msra.mxu0 0.0
        %3868 = vmatprep.subr.mxu0 0.0
        %3869 = vmatpush1.msra.mxu0 0.0
        %3870 = vmatprep.subr.mxu0 0.0
        %3871 = vmatpush1.msra.mxu0 0.0
        %3872 = vmatprep.subr.mxu0 0.0
        %3873 = vmatpush1.msra.mxu0 0.0
        %3874 = vmatprep.subr.mxu0 0.0
        %3875 = vmatpush1.msra.mxu0 0.0
        %3876 = vmatprep.subr.mxu0 0.0
        %3877 = vmatpush1.msra.mxu0 0.0
        %3878 = vmatprep.subr.mxu0 0.0
        %3879 = vmatpush1.msra.mxu0 0.0
        %3880 = vmatprep.subr.mxu0 0.0
        %3881 = vmatpush1.msra.mxu0 0.0
        %3882 = vmatprep.subr.mxu0 0.0
        %3883 = vmatpush1.msra.mxu0 0.0
        %3884 = vmatprep.subr.mxu0 0.0
        %3885 = vmatpush1.msra.mxu0 0.0
        %3886 = vmatprep.subr.mxu0 0.0
        %3887 = vmatpush1.msra.mxu0 0.0
        %3888 = vmatprep.subr.mxu0 0.0
        %3889 = vmatpush1.msra.mxu0 0.0
        %3890 = vmatprep.subr.mxu0 0.0
        %3891 = vmatpush1.msra.mxu0 0.0
        %3892 = vmatprep.subr.mxu0 0.0
        %3893 = vmatpush1.msra.mxu0 0.0
        %3894 = vmatprep.subr.mxu0 0.0
        %3895 = vmatpush1.msra.mxu0 0.0
        %3896 = vmatprep.mubr.f32.mxu0 0.0
        %3897 = vmatmul.mubr.f32.gmra.mrb[0].mxu0 %v3793
        %v3898 = vpop.f32.mrb[0].mxu0
        %v3899 = vadd.f32 %v3830, %v3898
        %v3900 = vpop.f32.mrb[0].mxu0
        %3901 = vmatprep.mubr.f32.mxu0 0.0
        %3902 = vmatmul.mubr.f32.gmra.mrb[0].mxu0 %v3794
        %v3903 = vpop.f32.mrb[0].mxu0
        %v3904 = vadd.f32 %v3830, %v3903
        %v3905 = vpop.f32.mrb[0].mxu0
        %3906 = vmatprep.mubr.f32.mxu0 0.0
        %3907 = vmatmul.mubr.f32.gmra.mrb[0].mxu0 %v3795
        %v3908 = vpop.f32.mrb[0].mxu0
        %v3909 = vadd.f32 %v3830, %v3908
        %v3910 = vpop.f32.mrb[0].mxu0
        %3911 = vmatprep.mubr.f32.mxu0 0.0
        %3912 = vmatmul.mubr.f32.gmra.mrb[0].mxu0 %v3796
        %v3913 = vpop.f32.mrb[0].mxu0
        %v3914 = vadd.f32 %v3830, %v3913
        %v3915 = vpop.f32.mrb[0].mxu0
        %3916 = vmatprep.mubr.f32.mxu0 0.0
        %3917 = vmatmul.mubr.f32.gmra.mrb[0].mxu0 %v3797
        %v3918 = vpop.f32.mrb[0].mxu0
        %v3919 = vadd.f32 %v3830, %v3918
        %v3920 = vpop.f32.mrb[0].mxu0
        %3921 = vmatprep.mubr.f32.mxu0 0.0
        %3922 = vmatmul.mubr.f32.gmra.mrb[0].mxu0 %v3798
        %v3923 = vpop.f32.mrb[0].mxu0
        %v3924 = vadd.f32 %v3830, %v3923
        %v3925 = vpop.f32.mrb[0].mxu0
        %3926 = vmatprep.mubr.f32.mxu0 0.0
        %3927 = vmatmul.mubr.f32.gmra.mrb[0].mxu0 %v3799
        %v3928 = vpop.f32.mrb[0].mxu0
        %v3929 = vadd.f32 %v3830, %v3928
        %v3930 = vpop.f32.mrb[0].mxu0
        %3931 = vmatprep.mubr.f32.mxu0 0.0
        %3932 = vmatmul.mubr.f32.gmra.mrb[0].mxu0 %v3800
        %v3933 = vpop.f32.mrb[0].mxu0
        %v3934 = vadd.f32 %v3830, %v3933
        %v3935 = vpop.f32.mrb[0].mxu0
        %3936 = vmatprep.mubr.f32.mxu0 0.0
        %3937 = vmatmul.mubr.f32.gmra.mrb[0].mxu0 %v3801
        %v3938 = vpop.f32.mrb[0].mxu0
        %v3939 = vadd.f32 %v3830, %v3938
        %v3940 = vpop.f32.mrb[0].mxu0
        %3941 = vmatprep.mubr.f32.mxu0 0.0
        %3942 = vmatmul.mubr.f32.gmra.mrb[0].mxu0 %v3802
        %v3943 = vpop.f32.mrb[0].mxu0
        %v3944 = vadd.f32 %v3830, %v3943
        %v3945 = vpop.f32.mrb[0].mxu0
        %3946 = vmatprep.mubr.f32.mxu0 0.0
        %3947 = vmatmul.mubr.f32.gmra.mrb[0].mxu0 %v3803
        %v3948 = vpop.f32.mrb[0].mxu0
        %v3949 = vadd.f32 %v3830, %v3948
        %v3950 = vpop.f32.mrb[0].mxu0
        %3951 = vmatprep.mubr.f32.mxu0 0.0
        %3952 = vmatmul.mubr.f32.gmra.mrb[0].mxu0 %v3804
        %v3953 = vpop.f32.mrb[0].mxu0
        %v3954 = vadd.f32 %v3830, %v3953
        %v3955 = vpop.f32.mrb[0].mxu0
        %3956 = vmatprep.mubr.f32.mxu0 0.0
        %3957 = vmatmul.mubr.f32.gmra.mrb[0].mxu0 %v3805
        %v3958 = vpop.f32.mrb[0].mxu0
        %v3959 = vadd.f32 %v3830, %v3958
        %v3960 = vpop.f32.mrb[0].mxu0
        %3961 = vmatprep.mubr.f32.mxu0 0.0
        %3962 = vmatmul.mubr.f32.gmra.mrb[0].mxu0 %v3806
        %v3963 = vpop.f32.mrb[0].mxu0
        %v3964 = vadd.f32 %v3830, %v3963
        %v3965 = vpop.f32.mrb[0].mxu0
        %3966 = vmatprep.mubr.f32.mxu0 0.0
        %3967 = vmatmul.mubr.f32.gmra.mrb[0].mxu0 %v3807
        %v3968 = vpop.f32.mrb[0].mxu0
        %v3969 = vadd.f32 %v3830, %v3968
        %v3970 = vpop.f32.mrb[0].mxu0
        %3971 = vmatprep.mubr.f32.mxu0 0.0
        %3972 = vmatmul.mubr.f32.gmra.mrb[0].mxu0 %v3808
        %v3973 = vpop.f32.mrb[0].mxu0
        %v3974 = vadd.f32 %v3830, %v3973
        %v3975 = vpop.f32.mrb[0].mxu0
        %3976 = vdwg.mxu0
        %v3977 = vld [vmem:[#allocation13] sm:$0xff]
        %v3978 = vld [vmem:[#allocation13 + $0x8] sm:$0xff]
        %v3979 = vld [vmem:[#allocation13 + $0x10] sm:$0xff]
        %v3980 = vld [vmem:[#allocation13 + $0x18] sm:$0xff]
        %v3981 = vld [vmem:[#allocation13 + $0x20] sm:$0xff]
        %v3982 = vld [vmem:[#allocation13 + $0x28] sm:$0xff]
        %v3983 = vld [vmem:[#allocation13 + $0x30] sm:$0xff]
        %v3984 = vld [vmem:[#allocation13 + $0x38] sm:$0xff]
        %v3985 = vld [vmem:[#allocation13 + $0x40] sm:$0xff]
        %v3986 = vld [vmem:[#allocation13 + $0x48] sm:$0xff]
        %v3987 = vld [vmem:[#allocation13 + $0x50] sm:$0xff]
        %v3988 = vld [vmem:[#allocation13 + $0x58] sm:$0xff]
        %v3989 = vld [vmem:[#allocation13 + $0x60] sm:$0xff]
        %v3990 = vld [vmem:[#allocation13 + $0x68] sm:$0xff]
        %v3991 = vld [vmem:[#allocation13 + $0x70] sm:$0xff]
        %v3992 = vld [vmem:[#allocation13 + $0x78] sm:$0xff]
        %v3993 = vld [vmem:[#allocation13 + $0x80] sm:$0xff]
        %v3994 = vld [vmem:[#allocation13 + $0x88] sm:$0xff]
        %v3995 = vld [vmem:[#allocation13 + $0x90] sm:$0xff]
        %v3996 = vld [vmem:[#allocation13 + $0x98] sm:$0xff]
        %v3997 = vld [vmem:[#allocation13 + $0xa0] sm:$0xff]
        %v3998 = vld [vmem:[#allocation13 + $0xa8] sm:$0xff]
        %v3999 = vld [vmem:[#allocation13 + $0xb0] sm:$0xff]
        %v4000 = vld [vmem:[#allocation13 + $0xb8] sm:$0xff]
        %v4001 = vld [vmem:[#allocation13 + $0xc0] sm:$0xff]
        %v4002 = vld [vmem:[#allocation13 + $0xc8] sm:$0xff]
        %v4003 = vld [vmem:[#allocation13 + $0xd0] sm:$0xff]
        %v4004 = vld [vmem:[#allocation13 + $0xd8] sm:$0xff]
        %v4005 = vld [vmem:[#allocation13 + $0xe0] sm:$0xff]
        %v4006 = vld [vmem:[#allocation13 + $0xe8] sm:$0xff]
        %v4007 = vld [vmem:[#allocation13 + $0xf0] sm:$0xff]
        %v4008 = vld [vmem:[#allocation13 + $0xf8] sm:$0xff]
        %v4009 = vld [vmem:[#allocation14] sm:$0xff]
        %v4010 = vld [vmem:[#allocation14 + $0x8] sm:$0xff]
        %v4011 = vld [vmem:[#allocation14 + $0x10] sm:$0xff]
        %v4012 = vld [vmem:[#allocation14 + $0x18] sm:$0xff]
        %v4013 = vld [vmem:[#allocation14 + $0x20] sm:$0xff]
        %v4014 = vld [vmem:[#allocation14 + $0x28] sm:$0xff]
        %v4015 = vld [vmem:[#allocation14 + $0x30] sm:$0xff]
        %v4016 = vld [vmem:[#allocation14 + $0x38] sm:$0xff]
        %v4017 = vld [vmem:[#allocation14 + $0x40] sm:$0xff]
        %v4018 = vld [vmem:[#allocation14 + $0x48] sm:$0xff]
        %v4019 = vld [vmem:[#allocation14 + $0x50] sm:$0xff]
        %v4020 = vld [vmem:[#allocation14 + $0x58] sm:$0xff]
        %v4021 = vld [vmem:[#allocation14 + $0x60] sm:$0xff]
        %v4022 = vld [vmem:[#allocation14 + $0x68] sm:$0xff]
        %v4023 = vld [vmem:[#allocation14 + $0x70] sm:$0xff]
        %v4024 = vld [vmem:[#allocation14 + $0x78] sm:$0xff]
        %v4025 = vld [vmem:[#allocation14 + $0x80] sm:$0xff]
        %v4026 = vld [vmem:[#allocation14 + $0x88] sm:$0xff]
        %v4027 = vld [vmem:[#allocation14 + $0x90] sm:$0xff]
        %v4028 = vld [vmem:[#allocation14 + $0x98] sm:$0xff]
        %v4029 = vld [vmem:[#allocation14 + $0xa0] sm:$0xff]
        %v4030 = vld [vmem:[#allocation14 + $0xa8] sm:$0xff]
        %v4031 = vld [vmem:[#allocation14 + $0xb0] sm:$0xff]
        %v4032 = vld [vmem:[#allocation14 + $0xb8] sm:$0xff]
        %v4033 = vld [vmem:[#allocation14 + $0xc0] sm:$0xff]
        %v4034 = vld [vmem:[#allocation14 + $0xc8] sm:$0xff]
        %v4035 = vld [vmem:[#allocation14 + $0xd0] sm:$0xff]
        %v4036 = vld [vmem:[#allocation14 + $0xd8] sm:$0xff]
        %v4037 = vld [vmem:[#allocation14 + $0xe0] sm:$0xff]
        %v4038 = vld [vmem:[#allocation14 + $0xe8] sm:$0xff]
        %v4039 = vld [vmem:[#allocation14 + $0xf0] sm:$0xff]
        %v4040 = vld [vmem:[#allocation14 + $0xf8] sm:$0xff]
        %4041 = vmatprep.subr.mxu0 %v4010
        %4042 = vmatpush1.msra.mxu0 %v4009
        %4043 = vmatprep.subr.mxu0 %v4012
        %4044 = vmatpush1.msra.mxu0 %v4011
        %4045 = vmatprep.subr.mxu0 %v4014
        %4046 = vmatpush1.msra.mxu0 %v4013
        %4047 = vmatprep.subr.mxu0 %v4016
        %4048 = vmatpush1.msra.mxu0 %v4015
        %4049 = vmatprep.subr.mxu0 %v4018
        %4050 = vmatpush1.msra.mxu0 %v4017
        %4051 = vmatprep.subr.mxu0 %v4020
        %4052 = vmatpush1.msra.mxu0 %v4019
        %4053 = vmatprep.subr.mxu0 %v4022
        %4054 = vmatpush1.msra.mxu0 %v4021
        %4055 = vmatprep.subr.mxu0 %v4024
        %4056 = vmatpush1.msra.mxu0 %v4023
        %4057 = vmatprep.subr.mxu0 %v4026
        %4058 = vmatpush1.msra.mxu0 %v4025
        %4059 = vmatprep.subr.mxu0 %v4028
        %4060 = vmatpush1.msra.mxu0 %v4027
        %4061 = vmatprep.subr.mxu0 %v4030
        %4062 = vmatpush1.msra.mxu0 %v4029
        %4063 = vmatprep.subr.mxu0 %v4032
        %4064 = vmatpush1.msra.mxu0 %v4031
        %4065 = vmatprep.subr.mxu0 %v4034
        %4066 = vmatpush1.msra.mxu0 %v4033
        %4067 = vmatprep.subr.mxu0 %v4036
        %4068 = vmatpush1.msra.mxu0 %v4035
        %4069 = vmatprep.subr.mxu0 %v4038
        %4070 = vmatpush1.msra.mxu0 %v4037
        %4071 = vmatprep.subr.mxu0 %v4040
        %4072 = vmatpush1.msra.mxu0 %v4039
        %4073 = vmatprep.subr.mxu0 0.0
        %4074 = vmatpush1.msra.mxu0 0.0
        %4075 = vmatprep.subr.mxu0 0.0
        %4076 = vmatpush1.msra.mxu0 0.0
        %4077 = vmatprep.subr.mxu0 0.0
        %4078 = vmatpush1.msra.mxu0 0.0
        %4079 = vmatprep.subr.mxu0 0.0
        %4080 = vmatpush1.msra.mxu0 0.0
        %4081 = vmatprep.subr.mxu0 0.0
        %4082 = vmatpush1.msra.mxu0 0.0
        %4083 = vmatprep.subr.mxu0 0.0
        %4084 = vmatpush1.msra.mxu0 0.0
        %4085 = vmatprep.subr.mxu0 0.0
        %4086 = vmatpush1.msra.mxu0 0.0
        %4087 = vmatprep.subr.mxu0 0.0
        %4088 = vmatpush1.msra.mxu0 0.0
        %4089 = vmatprep.subr.mxu0 0.0
        %4090 = vmatpush1.msra.mxu0 0.0
        %4091 = vmatprep.subr.mxu0 0.0
        %4092 = vmatpush1.msra.mxu0 0.0
        %4093 = vmatprep.subr.mxu0 0.0
        %4094 = vmatpush1.msra.mxu0 0.0
        %4095 = vmatprep.subr.mxu0 0.0
        %4096 = vmatpush1.msra.mxu0 0.0
        %4097 = vmatprep.subr.mxu0 0.0
        %4098 = vmatpush1.msra.mxu0 0.0
        %4099 = vmatprep.subr.mxu0 0.0
        %4100 = vmatpush1.msra.mxu0 0.0
        %4101 = vmatprep.subr.mxu0 0.0
        %4102 = vmatpush1.msra.mxu0 0.0
        %4103 = vmatprep.subr.mxu0 0.0
        %4104 = vmatpush1.msra.mxu0 0.0
        %4105 = vmatprep.mubr.f32.mxu0 0.0
        %4106 = vmatmul.mubr.f32.gmra.mrb[0].mxu0 %v3899
        %v4107 = vpop.f32.mrb[0].mxu0
        %v4108 = vadd.f32 0.0, %v4107
        %v4109 = vpop.f32.mrb[0].mxu0
        %v4110 = vadd.f32 0.0, %v4109
        %4111 = vmatprep.mubr.f32.mxu0 0.0
        %4112 = vmatmul.mubr.f32.gmra.mrb[0].mxu0 %v3904
        %v4113 = vpop.f32.mrb[0].mxu0
        %v4114 = vadd.f32 0.0, %v4113
        %v4115 = vpop.f32.mrb[0].mxu0
        %v4116 = vadd.f32 0.0, %v4115
        %4117 = vmatprep.mubr.f32.mxu0 0.0
        %4118 = vmatmul.mubr.f32.gmra.mrb[0].mxu0 %v3909
        %v4119 = vpop.f32.mrb[0].mxu0
        %v4120 = vadd.f32 0.0, %v4119
        %v4121 = vpop.f32.mrb[0].mxu0
        %v4122 = vadd.f32 0.0, %v4121
        %4123 = vmatprep.mubr.f32.mxu0 0.0
        %4124 = vmatmul.mubr.f32.gmra.mrb[0].mxu0 %v3914
        %v4125 = vpop.f32.mrb[0].mxu0
        %v4126 = vadd.f32 0.0, %v4125
        %v4127 = vpop.f32.mrb[0].mxu0
        %v4128 = vadd.f32 0.0, %v4127
        %4129 = vmatprep.mubr.f32.mxu0 0.0
        %4130 = vmatmul.mubr.f32.gmra.mrb[0].mxu0 %v3919
        %v4131 = vpop.f32.mrb[0].mxu0
        %v4132 = vadd.f32 0.0, %v4131
        %v4133 = vpop.f32.mrb[0].mxu0
        %v4134 = vadd.f32 0.0, %v4133
        %4135 = vmatprep.mubr.f32.mxu0 0.0
        %4136 = vmatmul.mubr.f32.gmra.mrb[0].mxu0 %v3924
        %v4137 = vpop.f32.mrb[0].mxu0
        %v4138 = vadd.f32 0.0, %v4137
        %v4139 = vpop.f32.mrb[0].mxu0
        %v4140 = vadd.f32 0.0, %v4139
        %4141 = vmatprep.mubr.f32.mxu0 0.0
        %4142 = vmatmul.mubr.f32.gmra.mrb[0].mxu0 %v3929
        %v4143 = vpop.f32.mrb[0].mxu0
        %v4144 = vadd.f32 0.0, %v4143
        %v4145 = vpop.f32.mrb[0].mxu0
        %v4146 = vadd.f32 0.0, %v4145
        %4147 = vmatprep.mubr.f32.mxu0 0.0
        %4148 = vmatmul.mubr.f32.gmra.mrb[0].mxu0 %v3934
        %v4149 = vpop.f32.mrb[0].mxu0
        %v4150 = vadd.f32 0.0, %v4149
        %v4151 = vpop.f32.mrb[0].mxu0
        %v4152 = vadd.f32 0.0, %v4151
        %4153 = vmatprep.mubr.f32.mxu0 0.0
        %4154 = vmatmul.mubr.f32.gmra.mrb[0].mxu0 %v3939
        %v4155 = vpop.f32.mrb[0].mxu0
        %v4156 = vadd.f32 0.0, %v4155
        %v4157 = vpop.f32.mrb[0].mxu0
        %v4158 = vadd.f32 0.0, %v4157
        %4159 = vmatprep.mubr.f32.mxu0 0.0
        %4160 = vmatmul.mubr.f32.gmra.mrb[0].mxu0 %v3944
        %v4161 = vpop.f32.mrb[0].mxu0
        %v4162 = vadd.f32 0.0, %v4161
        %v4163 = vpop.f32.mrb[0].mxu0
        %v4164 = vadd.f32 0.0, %v4163
        %4165 = vmatprep.mubr.f32.mxu0 0.0
        %4166 = vmatmul.mubr.f32.gmra.mrb[0].mxu0 %v3949
        %v4167 = vpop.f32.mrb[0].mxu0
        %v4168 = vadd.f32 0.0, %v4167
        %v4169 = vpop.f32.mrb[0].mxu0
        %v4170 = vadd.f32 0.0, %v4169
        %4171 = vmatprep.mubr.f32.mxu0 0.0
        %4172 = vmatmul.mubr.f32.gmra.mrb[0].mxu0 %v3954
        %v4173 = vpop.f32.mrb[0].mxu0
        %v4174 = vadd.f32 0.0, %v4173
        %v4175 = vpop.f32.mrb[0].mxu0
        %v4176 = vadd.f32 0.0, %v4175
        %4177 = vmatprep.mubr.f32.mxu0 0.0
        %4178 = vmatmul.mubr.f32.gmra.mrb[0].mxu0 %v3959
        %v4179 = vpop.f32.mrb[0].mxu0
        %v4180 = vadd.f32 0.0, %v4179
        %v4181 = vpop.f32.mrb[0].mxu0
        %v4182 = vadd.f32 0.0, %v4181
        %4183 = vmatprep.mubr.f32.mxu0 0.0
        %4184 = vmatmul.mubr.f32.gmra.mrb[0].mxu0 %v3964
        %v4185 = vpop.f32.mrb[0].mxu0
        %v4186 = vadd.f32 0.0, %v4185
        %v4187 = vpop.f32.mrb[0].mxu0
        %v4188 = vadd.f32 0.0, %v4187
        %4189 = vmatprep.mubr.f32.mxu0 0.0
        %4190 = vmatmul.mubr.f32.gmra.mrb[0].mxu0 %v3969
        %v4191 = vpop.f32.mrb[0].mxu0
        %v4192 = vadd.f32 0.0, %v4191
        %v4193 = vpop.f32.mrb[0].mxu0
        %v4194 = vadd.f32 0.0, %v4193
        %4195 = vmatprep.mubr.f32.mxu0 0.0
        %4196 = vmatmul.mubr.f32.gmra.mrb[0].mxu0 %v3974
        %v4197 = vpop.f32.mrb[0].mxu0
        %v4198 = vadd.f32 0.0, %v4197
        %v4199 = vpop.f32.mrb[0].mxu0
        %v4200 = vadd.f32 0.0, %v4199
        %4201 = vdwg.mxu0
        %4202 = vmatprep.subr.mxu0 %v3978
        %4203 = vmatpush1.msra.mxu0 %v3977
        %4204 = vmatprep.subr.mxu0 %v3980
        %4205 = vmatpush1.msra.mxu0 %v3979
        %4206 = vmatprep.subr.mxu0 %v3982
        %4207 = vmatpush1.msra.mxu0 %v3981
        %4208 = vmatprep.subr.mxu0 %v3984
        %4209 = vmatpush1.msra.mxu0 %v3983
        %4210 = vmatprep.subr.mxu0 %v3986
        %4211 = vmatpush1.msra.mxu0 %v3985
        %4212 = vmatprep.subr.mxu0 %v3988
        %4213 = vmatpush1.msra.mxu0 %v3987
        %4214 = vmatprep.subr.mxu0 %v3990
        %4215 = vmatpush1.msra.mxu0 %v3989
        %4216 = vmatprep.subr.mxu0 %v3992
        %4217 = vmatpush1.msra.mxu0 %v3991
        %4218 = vmatprep.subr.mxu0 %v3994
        %4219 = vmatpush1.msra.mxu0 %v3993
        %4220 = vmatprep.subr.mxu0 %v3996
        %4221 = vmatpush1.msra.mxu0 %v3995
        %4222 = vmatprep.subr.mxu0 %v3998
        %4223 = vmatpush1.msra.mxu0 %v3997
        %4224 = vmatprep.subr.mxu0 %v4000
        %4225 = vmatpush1.msra.mxu0 %v3999
        %4226 = vmatprep.subr.mxu0 %v4002
        %4227 = vmatpush1.msra.mxu0 %v4001
        %4228 = vmatprep.subr.mxu0 %v4004
        %4229 = vmatpush1.msra.mxu0 %v4003
        %4230 = vmatprep.subr.mxu0 %v4006
        %4231 = vmatpush1.msra.mxu0 %v4005
        %4232 = vmatprep.subr.mxu0 %v4008
        %4233 = vmatpush1.msra.mxu0 %v4007
        %4234 = vmatprep.subr.mxu0 0.0
        %4235 = vmatpush1.msra.mxu0 0.0
        %4236 = vmatprep.subr.mxu0 0.0
        %4237 = vmatpush1.msra.mxu0 0.0
        %4238 = vmatprep.subr.mxu0 0.0
        %4239 = vmatpush1.msra.mxu0 0.0
        %4240 = vmatprep.subr.mxu0 0.0
        %4241 = vmatpush1.msra.mxu0 0.0
        %4242 = vmatprep.subr.mxu0 0.0
        %4243 = vmatpush1.msra.mxu0 0.0
        %4244 = vmatprep.subr.mxu0 0.0
        %4245 = vmatpush1.msra.mxu0 0.0
        %4246 = vmatprep.subr.mxu0 0.0
        %4247 = vmatpush1.msra.mxu0 0.0
        %4248 = vmatprep.subr.mxu0 0.0
        %4249 = vmatpush1.msra.mxu0 0.0
        %4250 = vmatprep.subr.mxu0 0.0
        %4251 = vmatpush1.msra.mxu0 0.0
        %4252 = vmatprep.subr.mxu0 0.0
        %4253 = vmatpush1.msra.mxu0 0.0
        %4254 = vmatprep.subr.mxu0 0.0
        %4255 = vmatpush1.msra.mxu0 0.0
        %4256 = vmatprep.subr.mxu0 0.0
        %4257 = vmatpush1.msra.mxu0 0.0
        %4258 = vmatprep.subr.mxu0 0.0
        %4259 = vmatpush1.msra.mxu0 0.0
        %4260 = vmatprep.subr.mxu0 0.0
        %4261 = vmatpush1.msra.mxu0 0.0
        %4262 = vmatprep.subr.mxu0 0.0
        %4263 = vmatpush1.msra.mxu0 0.0
        %4264 = vmatprep.subr.mxu0 0.0
        %4265 = vmatpush1.msra.mxu0 0.0
        %4266 = vmatprep.mubr.f32.mxu0 0.0
        %4267 = vmatmul.mubr.f32.gmra.mrb[0].mxu0 %v654
        %v4268 = vpop.f32.mrb[0].mxu0
        %v4269 = vadd.f32 %v4108, %v4268
        %v4270 = vpop.f32.mrb[0].mxu0
        %v4271 = vadd.f32 %v4110, %v4270
        %4272 = vmatprep.mubr.f32.mxu0 0.0
        %4273 = vmatmul.mubr.f32.gmra.mrb[0].mxu0 %v655
        %v4274 = vpop.f32.mrb[0].mxu0
        %v4275 = vadd.f32 %v4114, %v4274
        %v4276 = vpop.f32.mrb[0].mxu0
        %v4277 = vadd.f32 %v4116, %v4276
        %4278 = vmatprep.mubr.f32.mxu0 0.0
        %4279 = vmatmul.mubr.f32.gmra.mrb[0].mxu0 %v656
        %v4280 = vpop.f32.mrb[0].mxu0
        %v4281 = vadd.f32 %v4120, %v4280
        %v4282 = vpop.f32.mrb[0].mxu0
        %v4283 = vadd.f32 %v4122, %v4282
        %4284 = vmatprep.mubr.f32.mxu0 0.0
        %4285 = vmatmul.mubr.f32.gmra.mrb[0].mxu0 %v657
        %v4286 = vpop.f32.mrb[0].mxu0
        %v4287 = vadd.f32 %v4126, %v4286
        %v4288 = vpop.f32.mrb[0].mxu0
        %v4289 = vadd.f32 %v4128, %v4288
        %4290 = vmatprep.mubr.f32.mxu0 0.0
        %4291 = vmatmul.mubr.f32.gmra.mrb[0].mxu0 %v658
        %v4292 = vpop.f32.mrb[0].mxu0
        %v4293 = vadd.f32 %v4132, %v4292
        %v4294 = vpop.f32.mrb[0].mxu0
        %v4295 = vadd.f32 %v4134, %v4294
        %4296 = vmatprep.mubr.f32.mxu0 0.0
        %4297 = vmatmul.mubr.f32.gmra.mrb[0].mxu0 %v659
        %v4298 = vpop.f32.mrb[0].mxu0
        %v4299 = vadd.f32 %v4138, %v4298
        %v4300 = vpop.f32.mrb[0].mxu0
        %v4301 = vadd.f32 %v4140, %v4300
        %4302 = vmatprep.mubr.f32.mxu0 0.0
        %4303 = vmatmul.mubr.f32.gmra.mrb[0].mxu0 %v660
        %v4304 = vpop.f32.mrb[0].mxu0
        %v4305 = vadd.f32 %v4144, %v4304
        %v4306 = vpop.f32.mrb[0].mxu0
        %v4307 = vadd.f32 %v4146, %v4306
        %4308 = vmatprep.mubr.f32.mxu0 0.0
        %4309 = vmatmul.mubr.f32.gmra.mrb[0].mxu0 %v661
        %v4310 = vpop.f32.mrb[0].mxu0
        %v4311 = vadd.f32 %v4150, %v4310
        %v4312 = vpop.f32.mrb[0].mxu0
        %v4313 = vadd.f32 %v4152, %v4312
        %4314 = vmatprep.mubr.f32.mxu0 0.0
        %4315 = vmatmul.mubr.f32.gmra.mrb[0].mxu0 %v662
        %v4316 = vpop.f32.mrb[0].mxu0
        %v4317 = vadd.f32 %v4156, %v4316
        %v4318 = vpop.f32.mrb[0].mxu0
        %v4319 = vadd.f32 %v4158, %v4318
        %4320 = vmatprep.mubr.f32.mxu0 0.0
        %4321 = vmatmul.mubr.f32.gmra.mrb[0].mxu0 %v663
        %v4322 = vpop.f32.mrb[0].mxu0
        %v4323 = vadd.f32 %v4162, %v4322
        %v4324 = vpop.f32.mrb[0].mxu0
        %v4325 = vadd.f32 %v4164, %v4324
        %4326 = vmatprep.mubr.f32.mxu0 0.0
        %4327 = vmatmul.mubr.f32.gmra.mrb[0].mxu0 %v664
        %v4328 = vpop.f32.mrb[0].mxu0
        %v4329 = vadd.f32 %v4168, %v4328
        %v4330 = vpop.f32.mrb[0].mxu0
        %v4331 = vadd.f32 %v4170, %v4330
        %4332 = vmatprep.mubr.f32.mxu0 0.0
        %4333 = vmatmul.mubr.f32.gmra.mrb[0].mxu0 %v665
        %v4334 = vpop.f32.mrb[0].mxu0
        %v4335 = vadd.f32 %v4174, %v4334
        %v4336 = vpop.f32.mrb[0].mxu0
        %v4337 = vadd.f32 %v4176, %v4336
        %4338 = vmatprep.mubr.f32.mxu0 0.0
        %4339 = vmatmul.mubr.f32.gmra.mrb[0].mxu0 %v666
        %v4340 = vpop.f32.mrb[0].mxu0
        %v4341 = vadd.f32 %v4180, %v4340
        %v4342 = vpop.f32.mrb[0].mxu0
        %v4343 = vadd.f32 %v4182, %v4342
        %4344 = vmatprep.mubr.f32.mxu0 0.0
        %4345 = vmatmul.mubr.f32.gmra.mrb[0].mxu0 %v667
        %v4346 = vpop.f32.mrb[0].mxu0
        %v4347 = vadd.f32 %v4186, %v4346
        %v4348 = vpop.f32.mrb[0].mxu0
        %v4349 = vadd.f32 %v4188, %v4348
        %4350 = vmatprep.mubr.f32.mxu0 0.0
        %4351 = vmatmul.mubr.f32.gmra.mrb[0].mxu0 %v668
        %v4352 = vpop.f32.mrb[0].mxu0
        %v4353 = vadd.f32 %v4192, %v4352
        %v4354 = vpop.f32.mrb[0].mxu0
        %v4355 = vadd.f32 %v4194, %v4354
        %4356 = vmatprep.mubr.f32.mxu0 0.0
        %4357 = vmatmul.mubr.f32.gmra.mrb[0].mxu0 %v669
        %v4358 = vpop.f32.mrb[0].mxu0
        %v4359 = vadd.f32 %v4198, %v4358
        %v4360 = vpop.f32.mrb[0].mxu0
        %v4361 = vadd.f32 %v4200, %v4360
        %4362 = vdwg.mxu0
        %v4363 = vld [vmem:[%s12] sm:$0x3]
        %v4365 = vlaneseq
        %v4366 = vshrl.u32 %v4365, 7
        %v4367 = vsub.s32 0, %v4366
        %v4368 = vrot.slane %v4363, %v4367
        %v4369 = vlaneseq
        %v4370 = vshrl.u32 %v4369, 7
        %v4371 = vsub.s32 1, %v4370
        %v4372 = vrot.slane %v4363, %v4371
        %v4375 = vadd.f32 %v4269, %v4368
        %v4376 = vadd.f32 %v4271, %v4372
        %v4377 = vadd.f32 %v4275, %v4368
        %v4378 = vadd.f32 %v4277, %v4372
        %v4379 = vadd.f32 %v4281, %v4368
        %v4380 = vadd.f32 %v4283, %v4372
        %v4381 = vadd.f32 %v4287, %v4368
        %v4382 = vadd.f32 %v4289, %v4372
        %v4383 = vadd.f32 %v4293, %v4368
        %v4384 = vadd.f32 %v4295, %v4372
        %v4385 = vadd.f32 %v4299, %v4368
        %v4386 = vadd.f32 %v4301, %v4372
        %v4387 = vadd.f32 %v4305, %v4368
        %v4388 = vadd.f32 %v4307, %v4372
        %v4389 = vadd.f32 %v4311, %v4368
        %v4390 = vadd.f32 %v4313, %v4372
        %v4391 = vadd.f32 %v4317, %v4368
        %v4392 = vadd.f32 %v4319, %v4372
        %v4393 = vadd.f32 %v4323, %v4368
        %v4394 = vadd.f32 %v4325, %v4372
        %v4395 = vadd.f32 %v4329, %v4368
        %v4396 = vadd.f32 %v4331, %v4372
        %v4397 = vadd.f32 %v4335, %v4368
        %v4398 = vadd.f32 %v4337, %v4372
        %v4399 = vadd.f32 %v4341, %v4368
        %v4400 = vadd.f32 %v4343, %v4372
        %v4401 = vadd.f32 %v4347, %v4368
        %v4402 = vadd.f32 %v4349, %v4372
        %v4403 = vadd.f32 %v4353, %v4368
        %v4404 = vadd.f32 %v4355, %v4372
        %v4405 = vadd.f32 %v4359, %v4368
        %v4406 = vadd.f32 %v4361, %v4372
        %v4407 = vadd.f32 %v4375, %v4377
        %v4408 = vadd.f32 %v4407, %v4379
        %v4409 = vadd.f32 %v4408, %v4381
        %v4410 = vadd.f32 %v4409, %v4383
        %v4411 = vadd.f32 %v4410, %v4385
        %v4412 = vadd.f32 %v4411, %v4387
        %v4413 = vadd.f32 %v4412, %v4389
        %v4414 = vadd.f32 %v4413, %v4391
        %v4415 = vadd.f32 %v4414, %v4393
        %v4416 = vadd.f32 %v4415, %v4395
        %v4417 = vadd.f32 %v4416, %v4397
        %v4418 = vadd.f32 %v4417, %v4399
        %v4419 = vadd.f32 %v4418, %v4401
        %v4420 = vadd.f32 %v4419, %v4403
        %v4421 = vadd.f32 %v4420, %v4405
        %v4422 = vrot.slane %v4421, 4
        %v4423 = vadd.f32 %v4421, %v4422
        %v4424 = vrot.slane %v4423, 2
        %v4425 = vadd.f32 %v4423, %v4424
        %v4426 = vrot.slane %v4425, 1
        %v4427 = vadd.f32 %v4425, %v4426
        %v4428 = vadd.f32 %v4376, %v4378
        %v4429 = vadd.f32 %v4428, %v4380
        %v4430 = vadd.f32 %v4429, %v4382
        %v4431 = vadd.f32 %v4430, %v4384
        %v4432 = vadd.f32 %v4431, %v4386
        %v4433 = vadd.f32 %v4432, %v4388
        %v4434 = vadd.f32 %v4433, %v4390
        %v4435 = vadd.f32 %v4434, %v4392
        %v4436 = vadd.f32 %v4435, %v4394
        %v4437 = vadd.f32 %v4436, %v4396
        %v4438 = vadd.f32 %v4437, %v4398
        %v4439 = vadd.f32 %v4438, %v4400
        %v4440 = vadd.f32 %v4439, %v4402
        %v4441 = vadd.f32 %v4440, %v4404
        %v4442 = vadd.f32 %v4441, %v4406
        %v4443 = vrot.slane %v4442, 4
        %v4444 = vadd.f32 %v4442, %v4443
        %v4445 = vrot.slane %v4444, 2
        %v4446 = vadd.f32 %v4444, %v4445
        %v4447 = vrot.slane %v4446, 1
        %v4448 = vadd.f32 %v4446, %v4447
        %v4449 = vrcp.pop 128.0
        %v4450 = vmul.f32 %v4427, %v4449
        %v4451 = vmul.f32 %v4448, %v4449
        %v4452 = vsub.f32 %v4375, %v4450
        %v4453 = vsub.f32 %v4376, %v4451
        %v4454 = vsub.f32 %v4377, %v4450
        %v4455 = vsub.f32 %v4378, %v4451
        %v4456 = vsub.f32 %v4379, %v4450
        %v4457 = vsub.f32 %v4380, %v4451
        %v4458 = vsub.f32 %v4381, %v4450
        %v4459 = vsub.f32 %v4382, %v4451
        %v4460 = vsub.f32 %v4383, %v4450
        %v4461 = vsub.f32 %v4384, %v4451
        %v4462 = vsub.f32 %v4385, %v4450
        %v4463 = vsub.f32 %v4386, %v4451
        %v4464 = vsub.f32 %v4387, %v4450
        %v4465 = vsub.f32 %v4388, %v4451
        %v4466 = vsub.f32 %v4389, %v4450
        %v4467 = vsub.f32 %v4390, %v4451
        %v4468 = vsub.f32 %v4391, %v4450
        %v4469 = vsub.f32 %v4392, %v4451
        %v4470 = vsub.f32 %v4393, %v4450
        %v4471 = vsub.f32 %v4394, %v4451
        %v4472 = vsub.f32 %v4395, %v4450
        %v4473 = vsub.f32 %v4396, %v4451
        %v4474 = vsub.f32 %v4397, %v4450
        %v4475 = vsub.f32 %v4398, %v4451
        %v4476 = vsub.f32 %v4399, %v4450
        %v4477 = vsub.f32 %v4400, %v4451
        %v4478 = vsub.f32 %v4401, %v4450
        %v4479 = vsub.f32 %v4402, %v4451
        %v4480 = vsub.f32 %v4403, %v4450
        %v4481 = vsub.f32 %v4404, %v4451
        %v4482 = vsub.f32 %v4405, %v4450
        %v4483 = vsub.f32 %v4406, %v4451
        %v4484 = vmul.f32 %v4452, %v4452
        %v4485 = vmul.f32 %v4453, %v4453
        %v4486 = vmul.f32 %v4454, %v4454
        %v4487 = vmul.f32 %v4455, %v4455
        %v4488 = vmul.f32 %v4456, %v4456
        %v4489 = vmul.f32 %v4457, %v4457
        %v4490 = vmul.f32 %v4458, %v4458
        %v4491 = vmul.f32 %v4459, %v4459
        %v4492 = vmul.f32 %v4460, %v4460
        %v4493 = vmul.f32 %v4461, %v4461
        %v4494 = vmul.f32 %v4462, %v4462
        %v4495 = vmul.f32 %v4463, %v4463
        %v4496 = vmul.f32 %v4464, %v4464
        %v4497 = vmul.f32 %v4465, %v4465
        %v4498 = vmul.f32 %v4466, %v4466
        %v4499 = vmul.f32 %v4467, %v4467
        %v4500 = vmul.f32 %v4468, %v4468
        %v4501 = vmul.f32 %v4469, %v4469
        %v4502 = vmul.f32 %v4470, %v4470
        %v4503 = vmul.f32 %v4471, %v4471
        %v4504 = vmul.f32 %v4472, %v4472
        %v4505 = vmul.f32 %v4473, %v4473
        %v4506 = vmul.f32 %v4474, %v4474
        %v4507 = vmul.f32 %v4475, %v4475
        %v4508 = vmul.f32 %v4476, %v4476
        %v4509 = vmul.f32 %v4477, %v4477
        %v4510 = vmul.f32 %v4478, %v4478
        %v4511 = vmul.f32 %v4479, %v4479
        %v4512 = vmul.f32 %v4480, %v4480
        %v4513 = vmul.f32 %v4481, %v4481
        %v4514 = vmul.f32 %v4482, %v4482
        %v4515 = vmul.f32 %v4483, %v4483
        %v4516 = vadd.f32 %v4484, %v4486
        %v4517 = vadd.f32 %v4516, %v4488
        %v4518 = vadd.f32 %v4517, %v4490
        %v4519 = vadd.f32 %v4518, %v4492
        %v4520 = vadd.f32 %v4519, %v4494
        %v4521 = vadd.f32 %v4520, %v4496
        %v4522 = vadd.f32 %v4521, %v4498
        %v4523 = vadd.f32 %v4522, %v4500
        %v4524 = vadd.f32 %v4523, %v4502
        %v4525 = vadd.f32 %v4524, %v4504
        %v4526 = vadd.f32 %v4525, %v4506
        %v4527 = vadd.f32 %v4526, %v4508
        %v4528 = vadd.f32 %v4527, %v4510
        %v4529 = vadd.f32 %v4528, %v4512
        %v4530 = vadd.f32 %v4529, %v4514
        %v4531 = vrot.slane %v4530, 4
        %v4532 = vadd.f32 %v4530, %v4531
        %v4533 = vrot.slane %v4532, 2
        %v4534 = vadd.f32 %v4532, %v4533
        %v4535 = vrot.slane %v4534, 1
        %v4536 = vadd.f32 %v4534, %v4535
        %v4537 = vadd.f32 %v4485, %v4487
        %v4538 = vadd.f32 %v4537, %v4489
        %v4539 = vadd.f32 %v4538, %v4491
        %v4540 = vadd.f32 %v4539, %v4493
        %v4541 = vadd.f32 %v4540, %v4495
        %v4542 = vadd.f32 %v4541, %v4497
        %v4543 = vadd.f32 %v4542, %v4499
        %v4544 = vadd.f32 %v4543, %v4501
        %v4545 = vadd.f32 %v4544, %v4503
        %v4546 = vadd.f32 %v4545, %v4505
        %v4547 = vadd.f32 %v4546, %v4507
        %v4548 = vadd.f32 %v4547, %v4509
        %v4549 = vadd.f32 %v4548, %v4511
        %v4550 = vadd.f32 %v4549, %v4513
        %v4551 = vadd.f32 %v4550, %v4515
        %v4552 = vrot.slane %v4551, 4
        %v4553 = vadd.f32 %v4551, %v4552
        %v4554 = vrot.slane %v4553, 2
        %v4555 = vadd.f32 %v4553, %v4554
        %v4556 = vrot.slane %v4555, 1
        %v4557 = vadd.f32 %v4555, %v4556
        %v4558 = vmul.f32 %v4536, %v4449
        %v4559 = vmul.f32 %v4557, %v4449
        %v4560 = vadd.f32 %v4558, 1e-05
        %v4561 = vadd.f32 %v4559, 1e-05
        %v4562 = vrsqrt.pop %v4560
        %v4563 = vrsqrt.pop %v4561
        %v4564 = vmul.f32 %v4452, %v4562
        %v4565 = vmul.f32 %v4453, %v4563
        %v4566 = vmul.f32 %v4454, %v4562
        %v4567 = vmul.f32 %v4455, %v4563
        %v4568 = vmul.f32 %v4456, %v4562
        %v4569 = vmul.f32 %v4457, %v4563
        %v4570 = vmul.f32 %v4458, %v4562
        %v4571 = vmul.f32 %v4459, %v4563
        %v4572 = vmul.f32 %v4460, %v4562
        %v4573 = vmul.f32 %v4461, %v4563
        %v4574 = vmul.f32 %v4462, %v4562
        %v4575 = vmul.f32 %v4463, %v4563
        %v4576 = vmul.f32 %v4464, %v4562
        %v4577 = vmul.f32 %v4465, %v4563
        %v4578 = vmul.f32 %v4466, %v4562
        %v4579 = vmul.f32 %v4467, %v4563
        %v4580 = vmul.f32 %v4468, %v4562
        %v4581 = vmul.f32 %v4469, %v4563
        %v4582 = vmul.f32 %v4470, %v4562
        %v4583 = vmul.f32 %v4471, %v4563
        %v4584 = vmul.f32 %v4472, %v4562
        %v4585 = vmul.f32 %v4473, %v4563
        %v4586 = vmul.f32 %v4474, %v4562
        %v4587 = vmul.f32 %v4475, %v4563
        %v4588 = vmul.f32 %v4476, %v4562
        %v4589 = vmul.f32 %v4477, %v4563
        %v4590 = vmul.f32 %v4478, %v4562
        %v4591 = vmul.f32 %v4479, %v4563
        %v4592 = vmul.f32 %v4480, %v4562
        %v4593 = vmul.f32 %v4481, %v4563
        %v4594 = vmul.f32 %v4482, %v4562
        %v4595 = vmul.f32 %v4483, %v4563
        %v4596 = vmax.f32 %v4564, 0.0
        %v4597 = vmax.f32 %v4565, 0.0
        %v4598 = vmax.f32 %v4566, 0.0
        %v4599 = vmax.f32 %v4567, 0.0
        %v4600 = vmax.f32 %v4568, 0.0
        %v4601 = vmax.f32 %v4569, 0.0
        %v4602 = vmax.f32 %v4570, 0.0
        %v4603 = vmax.f32 %v4571, 0.0
        %v4604 = vmax.f32 %v4572, 0.0
        %v4605 = vmax.f32 %v4573, 0.0
        %v4606 = vmax.f32 %v4574, 0.0
        %v4607 = vmax.f32 %v4575, 0.0
        %v4608 = vmax.f32 %v4576, 0.0
        %v4609 = vmax.f32 %v4577, 0.0
        %v4610 = vmax.f32 %v4578, 0.0
        %v4611 = vmax.f32 %v4579, 0.0
        %v4612 = vmax.f32 %v4580, 0.0
        %v4613 = vmax.f32 %v4581, 0.0
        %v4614 = vmax.f32 %v4582, 0.0
        %v4615 = vmax.f32 %v4583, 0.0
        %v4616 = vmax.f32 %v4584, 0.0
        %v4617 = vmax.f32 %v4585, 0.0
        %v4618 = vmax.f32 %v4586, 0.0
        %v4619 = vmax.f32 %v4587, 0.0
        %v4620 = vmax.f32 %v4588, 0.0
        %v4621 = vmax.f32 %v4589, 0.0
        %v4622 = vmax.f32 %v4590, 0.0
        %v4623 = vmax.f32 %v4591, 0.0
        %v4624 = vmax.f32 %v4592, 0.0
        %v4625 = vmax.f32 %v4593, 0.0
        %v4626 = vmax.f32 %v4594, 0.0
        %v4627 = vmax.f32 %v4595, 0.0
        %v4628 = vld [vmem:[#allocation16] sm:$0xff]
        %v4629 = vld [vmem:[#allocation16 + $0x8] sm:$0xff]
        %v4630 = vld [vmem:[#allocation16 + $0x10] sm:$0xff]
        %v4631 = vld [vmem:[#allocation16 + $0x18] sm:$0xff]
        %v4632 = vld [vmem:[#allocation16 + $0x20] sm:$0xff]
        %v4633 = vld [vmem:[#allocation16 + $0x28] sm:$0xff]
        %v4634 = vld [vmem:[#allocation16 + $0x30] sm:$0xff]
        %v4635 = vld [vmem:[#allocation16 + $0x38] sm:$0xff]
        %v4636 = vld [vmem:[#allocation16 + $0x40] sm:$0xff]
        %v4637 = vld [vmem:[#allocation16 + $0x48] sm:$0xff]
        %v4638 = vld [vmem:[#allocation16 + $0x50] sm:$0xff]
        %v4639 = vld [vmem:[#allocation16 + $0x58] sm:$0xff]
        %v4640 = vld [vmem:[#allocation16 + $0x60] sm:$0xff]
        %v4641 = vld [vmem:[#allocation16 + $0x68] sm:$0xff]
        %v4642 = vld [vmem:[#allocation16 + $0x70] sm:$0xff]
        %v4643 = vld [vmem:[#allocation16 + $0x78] sm:$0xff]
        %v4644 = vld [vmem:[#allocation16 + $0x80] sm:$0xff]
        %v4645 = vld [vmem:[#allocation16 + $0x88] sm:$0xff]
        %v4646 = vld [vmem:[#allocation16 + $0x90] sm:$0xff]
        %v4647 = vld [vmem:[#allocation16 + $0x98] sm:$0xff]
        %v4648 = vld [vmem:[#allocation16 + $0xa0] sm:$0xff]
        %v4649 = vld [vmem:[#allocation16 + $0xa8] sm:$0xff]
        %v4650 = vld [vmem:[#allocation16 + $0xb0] sm:$0xff]
        %v4651 = vld [vmem:[#allocation16 + $0xb8] sm:$0xff]
        %v4652 = vld [vmem:[#allocation16 + $0xc0] sm:$0xff]
        %v4653 = vld [vmem:[#allocation16 + $0xc8] sm:$0xff]
        %v4654 = vld [vmem:[#allocation16 + $0xd0] sm:$0xff]
        %v4655 = vld [vmem:[#allocation16 + $0xd8] sm:$0xff]
        %v4656 = vld [vmem:[#allocation16 + $0xe0] sm:$0xff]
        %v4657 = vld [vmem:[#allocation16 + $0xe8] sm:$0xff]
        %v4658 = vld [vmem:[#allocation16 + $0xf0] sm:$0xff]
        %v4659 = vld [vmem:[#allocation16 + $0xf8] sm:$0xff]
        %v4660 = vld [vmem:[%s14] sm:$0x1]
        %v4662 = vlaneseq
        %v4663 = vshrl.u32 %v4662, 7
        %v4664 = vsub.s32 0, %v4663
        %v4665 = vrot.slane %v4660, %v4664
        %4667 = vmatprep.subr.mxu0 0.0
        %4668 = vmatpush1.msra.mxu0 %v4628
        %4669 = vmatprep.subr.mxu0 0.0
        %4670 = vmatpush1.msra.mxu0 %v4629
        %4671 = vmatprep.subr.mxu0 0.0
        %4672 = vmatpush1.msra.mxu0 %v4630
        %4673 = vmatprep.subr.mxu0 0.0
        %4674 = vmatpush1.msra.mxu0 %v4631
        %4675 = vmatprep.subr.mxu0 0.0
        %4676 = vmatpush1.msra.mxu0 %v4632
        %4677 = vmatprep.subr.mxu0 0.0
        %4678 = vmatpush1.msra.mxu0 %v4633
        %4679 = vmatprep.subr.mxu0 0.0
        %4680 = vmatpush1.msra.mxu0 %v4634
        %4681 = vmatprep.subr.mxu0 0.0
        %4682 = vmatpush1.msra.mxu0 %v4635
        %4683 = vmatprep.subr.mxu0 0.0
        %4684 = vmatpush1.msra.mxu0 %v4636
        %4685 = vmatprep.subr.mxu0 0.0
        %4686 = vmatpush1.msra.mxu0 %v4637
        %4687 = vmatprep.subr.mxu0 0.0
        %4688 = vmatpush1.msra.mxu0 %v4638
        %4689 = vmatprep.subr.mxu0 0.0
        %4690 = vmatpush1.msra.mxu0 %v4639
        %4691 = vmatprep.subr.mxu0 0.0
        %4692 = vmatpush1.msra.mxu0 %v4640
        %4693 = vmatprep.subr.mxu0 0.0
        %4694 = vmatpush1.msra.mxu0 %v4641
        %4695 = vmatprep.subr.mxu0 0.0
        %4696 = vmatpush1.msra.mxu0 %v4642
        %4697 = vmatprep.subr.mxu0 0.0
        %4698 = vmatpush1.msra.mxu0 %v4643
        %4699 = vmatprep.subr.mxu0 0.0
        %4700 = vmatpush1.msra.mxu0 %v4644
        %4701 = vmatprep.subr.mxu0 0.0
        %4702 = vmatpush1.msra.mxu0 %v4645
        %4703 = vmatprep.subr.mxu0 0.0
        %4704 = vmatpush1.msra.mxu0 %v4646
        %4705 = vmatprep.subr.mxu0 0.0
        %4706 = vmatpush1.msra.mxu0 %v4647
        %4707 = vmatprep.subr.mxu0 0.0
        %4708 = vmatpush1.msra.mxu0 %v4648
        %4709 = vmatprep.subr.mxu0 0.0
        %4710 = vmatpush1.msra.mxu0 %v4649
        %4711 = vmatprep.subr.mxu0 0.0
        %4712 = vmatpush1.msra.mxu0 %v4650
        %4713 = vmatprep.subr.mxu0 0.0
        %4714 = vmatpush1.msra.mxu0 %v4651
        %4715 = vmatprep.subr.mxu0 0.0
        %4716 = vmatpush1.msra.mxu0 %v4652
        %4717 = vmatprep.subr.mxu0 0.0
        %4718 = vmatpush1.msra.mxu0 %v4653
        %4719 = vmatprep.subr.mxu0 0.0
        %4720 = vmatpush1.msra.mxu0 %v4654
        %4721 = vmatprep.subr.mxu0 0.0
        %4722 = vmatpush1.msra.mxu0 %v4655
        %4723 = vmatprep.subr.mxu0 0.0
        %4724 = vmatpush1.msra.mxu0 %v4656
        %4725 = vmatprep.subr.mxu0 0.0
        %4726 = vmatpush1.msra.mxu0 %v4657
        %4727 = vmatprep.subr.mxu0 0.0
        %4728 = vmatpush1.msra.mxu0 %v4658
        %4729 = vmatprep.subr.mxu0 0.0
        %4730 = vmatpush1.msra.mxu0 %v4659
        %4731 = vmatprep.mubr.f32.mxu0 %v4597
        %4732 = vmatmul.mubr.f32.gmra.mrb[0].mxu0 %v4596
        %v4733 = vpop.f32.mrb[0].mxu0
        %v4734 = vadd.f32 %v4665, %v4733
        %v4735 = vpop.f32.mrb[0].mxu0
        %4736 = vmatprep.mubr.f32.mxu0 %v4599
        %4737 = vmatmul.mubr.f32.gmra.mrb[0].mxu0 %v4598
        %v4738 = vpop.f32.mrb[0].mxu0
        %v4739 = vadd.f32 %v4665, %v4738
        %v4740 = vpop.f32.mrb[0].mxu0
        %4741 = vmatprep.mubr.f32.mxu0 %v4601
        %4742 = vmatmul.mubr.f32.gmra.mrb[0].mxu0 %v4600
        %v4743 = vpop.f32.mrb[0].mxu0
        %v4744 = vadd.f32 %v4665, %v4743
        %v4745 = vpop.f32.mrb[0].mxu0
        %4746 = vmatprep.mubr.f32.mxu0 %v4603
        %4747 = vmatmul.mubr.f32.gmra.mrb[0].mxu0 %v4602
        %v4748 = vpop.f32.mrb[0].mxu0
        %v4749 = vadd.f32 %v4665, %v4748
        %v4750 = vpop.f32.mrb[0].mxu0
        %4751 = vmatprep.mubr.f32.mxu0 %v4605
        %4752 = vmatmul.mubr.f32.gmra.mrb[0].mxu0 %v4604
        %v4753 = vpop.f32.mrb[0].mxu0
        %v4754 = vadd.f32 %v4665, %v4753
        %v4755 = vpop.f32.mrb[0].mxu0
        %4756 = vmatprep.mubr.f32.mxu0 %v4607
        %4757 = vmatmul.mubr.f32.gmra.mrb[0].mxu0 %v4606
        %v4758 = vpop.f32.mrb[0].mxu0
        %v4759 = vadd.f32 %v4665, %v4758
        %v4760 = vpop.f32.mrb[0].mxu0
        %4761 = vmatprep.mubr.f32.mxu0 %v4609
        %4762 = vmatmul.mubr.f32.gmra.mrb[0].mxu0 %v4608
        %v4763 = vpop.f32.mrb[0].mxu0
        %v4764 = vadd.f32 %v4665, %v4763
        %v4765 = vpop.f32.mrb[0].mxu0
        %4766 = vmatprep.mubr.f32.mxu0 %v4611
        %4767 = vmatmul.mubr.f32.gmra.mrb[0].mxu0 %v4610
        %v4768 = vpop.f32.mrb[0].mxu0
        %v4769 = vadd.f32 %v4665, %v4768
        %v4770 = vpop.f32.mrb[0].mxu0
        %4771 = vmatprep.mubr.f32.mxu0 %v4613
        %4772 = vmatmul.mubr.f32.gmra.mrb[0].mxu0 %v4612
        %v4773 = vpop.f32.mrb[0].mxu0
        %v4774 = vadd.f32 %v4665, %v4773
        %v4775 = vpop.f32.mrb[0].mxu0
        %4776 = vmatprep.mubr.f32.mxu0 %v4615
        %4777 = vmatmul.mubr.f32.gmra.mrb[0].mxu0 %v4614
        %v4778 = vpop.f32.mrb[0].mxu0
        %v4779 = vadd.f32 %v4665, %v4778
        %v4780 = vpop.f32.mrb[0].mxu0
        %4781 = vmatprep.mubr.f32.mxu0 %v4617
        %4782 = vmatmul.mubr.f32.gmra.mrb[0].mxu0 %v4616
        %v4783 = vpop.f32.mrb[0].mxu0
        %v4784 = vadd.f32 %v4665, %v4783
        %v4785 = vpop.f32.mrb[0].mxu0
        %4786 = vmatprep.mubr.f32.mxu0 %v4619
        %4787 = vmatmul.mubr.f32.gmra.mrb[0].mxu0 %v4618
        %v4788 = vpop.f32.mrb[0].mxu0
        %v4789 = vadd.f32 %v4665, %v4788
        %v4790 = vpop.f32.mrb[0].mxu0
        %4791 = vmatprep.mubr.f32.mxu0 %v4621
        %4792 = vmatmul.mubr.f32.gmra.mrb[0].mxu0 %v4620
        %v4793 = vpop.f32.mrb[0].mxu0
        %v4794 = vadd.f32 %v4665, %v4793
        %v4795 = vpop.f32.mrb[0].mxu0
        %4796 = vmatprep.mubr.f32.mxu0 %v4623
        %4797 = vmatmul.mubr.f32.gmra.mrb[0].mxu0 %v4622
        %v4798 = vpop.f32.mrb[0].mxu0
        %v4799 = vadd.f32 %v4665, %v4798
        %v4800 = vpop.f32.mrb[0].mxu0
        %4801 = vmatprep.mubr.f32.mxu0 %v4625
        %4802 = vmatmul.mubr.f32.gmra.mrb[0].mxu0 %v4624
        %v4803 = vpop.f32.mrb[0].mxu0
        %v4804 = vadd.f32 %v4665, %v4803
        %v4805 = vpop.f32.mrb[0].mxu0
        %4806 = vmatprep.mubr.f32.mxu0 %v4627
        %4807 = vmatmul.mubr.f32.gmra.mrb[0].mxu0 %v4626
        %v4808 = vpop.f32.mrb[0].mxu0
        %v4809 = vadd.f32 %v4665, %v4808
        %v4810 = vpop.f32.mrb[0].mxu0
        %4811 = vdwg.mxu0
        %4812 = vst [vmem:[%s653] sm:$0xff] %v4734
        %4813 = vst [vmem:[%s653 + $0x8] sm:$0xff] %v4739
        %4814 = vst [vmem:[%s653 + $0x10] sm:$0xff] %v4744
        %4815 = vst [vmem:[%s653 + $0x18] sm:$0xff] %v4749
        %4816 = vst [vmem:[%s653 + $0x20] sm:$0xff] %v4754
        %4817 = vst [vmem:[%s653 + $0x28] sm:$0xff] %v4759
        %4818 = vst [vmem:[%s653 + $0x30] sm:$0xff] %v4764
        %4819 = vst [vmem:[%s653 + $0x38] sm:$0xff] %v4769
        %4820 = vst [vmem:[%s653 + $0x40] sm:$0xff] %v4774
        %4821 = vst [vmem:[%s653 + $0x48] sm:$0xff] %v4779
        %4822 = vst [vmem:[%s653 + $0x50] sm:$0xff] %v4784
        %4823 = vst [vmem:[%s653 + $0x58] sm:$0xff] %v4789
        %4824 = vst [vmem:[%s653 + $0x60] sm:$0xff] %v4794
        %4825 = vst [vmem:[%s653 + $0x68] sm:$0xff] %v4799
        %4826 = vst [vmem:[%s653 + $0x70] sm:$0xff] %v4804
        %4827 = vst [vmem:[%s653 + $0x78] sm:$0xff] %v4809
        %s4828 = sand.u32 %s371, 1
        %s4829 = scalar_lea.sflag [#allocation4], %s4828
        %s4830 = sand.u32 %s371, 1
        %s4831 = smul.addr %s4830, 128
        %s4832 = scalar_lea.vmem [#allocation17], %s4831
        // Predicated region
        $region117: #{tpu_custom_call.1} parent=79 // pred_check
          %p4833 = pneg %p381
        $region118: #{tpu_custom_call.1} parent=79 // pred_check_branch
          %4835 = sbr.rel (%p4833) target = $region120
        $region119: #{tpu_custom_call.1} parent=79 // pred_region
          %s4837 = ssub.s32 2048, 2048
          %4838 = vsyncadd %s4829, %s4837
          %s4839 = smul.addr %s38, 16
          %s4840 = smul.addr %s4839, 128
          %s4841 = scalar_lea.hbm %s15, %s4840
          %s4842 = sshll.u32 %s4832, 4
          %s4843 = int_to_ptr.vmem [resolvable:$true] %s4842
          %4848 = dma.vmem_to_hbm [thread:$0]  %s4843, 2048, %s4841, %s4829, 128, 128, 8
        $region120: #{tpu_custom_call.1} parent=79 // pred_fallthru
          _
      $region80: #{tpu_custom_call.1} parent=5 // pred_fallthru
        _
      %p4849 = scmp.le.s32.totalorder 2, %s33
      // Predicated region
      $region121: #{tpu_custom_call.1} parent=5 // pred_check
        %p4850 = pneg %p4849
      $region122: #{tpu_custom_call.1} parent=5 // pred_check_branch
        %4852 = sbr.rel (%p4850) target = $region124
      $region123: #{tpu_custom_call.1} parent=5 // pred_region
        %s4853 = ssub.s32 %s33, 2
        // Predicated region
        $region125: #{tpu_custom_call.1} parent=123 // pred_check
          %p4854 = pneg %p387
        $region126: #{tpu_custom_call.1} parent=123 // pred_check_branch
          %4856 = sbr.rel (%p4854) target = $region128
        $region127: #{tpu_custom_call.1} parent=123 // pred_region
          %s4857 = sand.u32 %s372, 1
          %s4858 = scalar_lea.sflag [#allocation4], %s4857
          %s4859 = sand.u32 %s372, 1
          %s4860 = smul.addr %s4859, 128
          %s4861 = scalar_lea.vmem [#allocation17], %s4860
          %4862 = dma.done %s4858, 2048
        $region128: #{tpu_custom_call.1} parent=123 // pred_fallthru
          _
      $region124: #{tpu_custom_call.1} parent=5 // pred_fallthru
        _
    $region6: #{tpu_custom_call.1} parent=1 // loop_footer
      %s37 = sadd.s32 1, %s33
    $region7: #{tpu_custom_call.1} parent=1 // loop_footer_branch
      %32 = sbr.rel target = $region3
    $region8: #{tpu_custom_call.1} parent=1 // loop_exit
      _
    %4863 = vsyncpa [#allocation3], 1
    %s4864 = scalar_lea.sflag [#allocation3], 1
    %4865 = vsyncpa %s4864, 1
    %4866 = vsyncpa [#allocation6], 1
    %s4867 = scalar_lea.sflag [#allocation6], 1
    %4868 = vsyncpa %s4867, 1
    %4869 = vsyncpa [#allocation9], 1
    %4870 = vsyncpa [#allocation12], 1
    %4871 = vsyncpa [#allocation15], 1
    %4872 = vsyncpa [#allocation4], 1
    %s4873 = scalar_lea.sflag [#allocation4], 1
    %4874 = vsyncpa %s4873, 1

</llo_original>
